<compile_context>
chip_gen: v6e
topology: v6e:2x2x1
jax: 0.10.0
libtpu: 0.0.40
codegen_flags: <defaults>
</compile_context>

<pallas_src>
import functools

import jax
import jax.numpy as jnp
from jax.experimental import pallas as pl
from jax.experimental.pallas import tpu as pltpu


def _round_up(x, m):
    return ((x + m - 1) // m) * m


def _autoencoder_kernel(
    L, Bp, Hp, Vp, inv_n,
    idp_ref, idc_ref, idn_ref, mrow_ref,
    w1_ref, bc1_ref, g1_ref, be1_ref,
    w2_ref, bc2_ref, g2_ref, be2_ref,
    ws2v_ref, bs2v_ref,
    wv2s_ref, bv2s_ref,
    wd1_ref, bd1_ref, g3_ref, be3_ref,
    wd2_ref, bd2_ref, g4_ref, be4_ref,
    wout_ref, bout_ref,
    out_ref, enc_ref, vec_ref,
):
    f32 = jnp.float32
    bf16 = jnp.bfloat16
    BLp = Bp * L

    mrow = mrow_ref[...]                      # (BLp, 1): 1.0 on real batch rows

    def onehot(ids_col):
        iota = jax.lax.broadcasted_iota(jnp.int32, (BLp, Vp), 1)
        return (iota == ids_col).astype(f32)  # ids == -1 (padding) -> all-zero row

    def bn_relu(h, g_ref, be_ref):
        # Training-mode BatchNorm1d: single-pass masked batch stats (biased var),
        # all statistics / normalization math kept in f32.
        hm = h * mrow
        s1 = jnp.sum(hm, axis=0, keepdims=True)
        s2 = jnp.sum(hm * h, axis=0, keepdims=True)
        mu = s1 * inv_n
        var = jnp.maximum(s2 * inv_n - mu * mu, 0.0)
        hn = (h - mu) * jax.lax.rsqrt(var + 1e-5) * g_ref[...] + be_ref[...]
        return jnp.maximum(hn, 0.0)

    def shift_prev(x):
        # value at position l-1 (zero at l == 0).  Bp is a multiple of 8, so this
        # is a whole-vreg sublane shift: the roll+mask pattern with no wraparound.
        z = jnp.zeros((Bp, x.shape[1]), f32)
        return jnp.concatenate([z, x[:BLp - Bp, :]], axis=0)

    def shift_next(x):
        z = jnp.zeros((Bp, x.shape[1]), f32)
        return jnp.concatenate([x[Bp:, :], z], axis=0)

    def conv_fused(x, w_ref, b_ref):
        # Conv1d(k=3, pad=1): single fused (BLp, 3C) @ (3C, Hp) bf16 MXU matmul.
        cat = jnp.concatenate([shift_prev(x), x, shift_next(x)], axis=1)
        return (jnp.dot(cat.astype(bf16), w_ref[...],
                        preferred_element_type=f32) + b_ref[...])

    # ---- encoder (embedding folded into conv1 taps; fed shifted one-hots) ----
    cat1 = jnp.concatenate(
        [onehot(idp_ref[...]), onehot(idc_ref[...]), onehot(idn_ref[...])],
        axis=1).astype(bf16)                                       # (BLp, 3*Vp)
    h1 = jnp.dot(cat1, w1_ref[...], preferred_element_type=f32) + bc1_ref[...]
    h1 = bn_relu(h1, g1_ref, be1_ref)
    h2 = bn_relu(conv_fused(h1, w2_ref, bc2_ref), g2_ref, be2_ref)
    enc_ref[...] = h2                                              # lane-dense store

    # ---- seq2vec : Flatten + Linear(L*H -> H) + ReLU (per-position dot chain) ----
    vec_acc = jnp.zeros((Bp, Hp), f32) + bs2v_ref[...]
    for l in range(L):                         # static unroll, aligned row blocks
        rows_l = h2[l * Bp:(l + 1) * Bp, :].astype(bf16)           # (Bp, Hp)
        vec_acc = vec_acc + jnp.dot(rows_l, ws2v_ref[l],
                                    preferred_element_type=f32)
    vec = jnp.maximum(vec_acc, 0.0)
    vec_ref[...] = vec

    # ---- vec2seq : Linear(H -> L*H) + ReLU + View(H, L) ----
    vecb = vec.astype(bf16)
    parts = []
    for l in range(L):
        p = jnp.dot(vecb, wv2s_ref[l], preferred_element_type=f32) + bv2s_ref[l]
        parts.append(jnp.maximum(p, 0.0))
    r2 = jnp.concatenate(parts, axis=0)                            # (BLp, Hp)

    # ---- decoder (ConvTranspose1d == conv with flipped taps, prearranged) ----
    d1 = bn_relu(conv_fused(r2, wd1_ref, bd1_ref), g3_ref, be3_ref)
    d2 = bn_relu(conv_fused(d1, wd2_ref, bd2_ref), g4_ref, be4_ref)

    # ---- out_layer : Linear(H -> vocab), lane-dense (Vp=128) output ----
    out_ref[...] = (jnp.dot(d2.astype(bf16), wout_ref[...],
                            preferred_element_type=f32) + bout_ref[...])


def autoencoder_forward(ids, params, *, dim_hid, len_seq):
    """Runs the fused AutoEncoder forward kernel. ids: (B, len_seq) int32."""
    B, L = ids.shape
    assert L == len_seq
    H = dim_hid
    f32, bf16 = jnp.float32, jnp.bfloat16
    emb = params["embedding"].astype(f32)
    V = emb.shape[0]

    Hp = _round_up(H, 128)       # lane-dense hidden width
    Vp = _round_up(V, 128)       # lane-dense vocab width
    Bp = _round_up(B, 8)         # sublane-aligned batch blocks
    BLp = Bp * L

    # ---- kernel-ready weight transforms (plain-JAX glue) ----
    def pad2(x, r, c):
        return jnp.pad(x, ((0, r - x.shape[0]), (0, c - x.shape[1])))

    def row(v, n, fill=0.0):
        v = v.astype(f32).reshape(1, -1)
        return jnp.pad(v, ((0, 0), (0, n - v.shape[1])), constant_values=fill)

    # Conv1d weight (O, I, 3): tap k=0/1/2 multiplies x[l-1]/x[l]/x[l+1].
    def fwd_taps(w):
        return [w[:, :, k].T for k in range(3)]          # each (I, O), [prev,cur,next]

    # ConvTranspose1d weight (I, O, 3): equivalent conv uses flipped taps.
    def tr_taps(w):
        return [w[:, :, 2], w[:, :, 1], w[:, :, 0]]      # each (I, O), [prev,cur,next]

    def stack_taps(taps):
        return jnp.concatenate([pad2(t.astype(f32), Hp, Hp) for t in taps],
                               axis=0).astype(bf16)      # (3*Hp, Hp)

    # conv1 with the embedding matrix folded into each tap: onehot @ (emb @ tap).
    w1 = jnp.concatenate(
        [pad2(emb @ t, Vp, Hp) for t in fwd_taps(params["w_enc1"].astype(f32))],
        axis=0).astype(bf16)                                        # (3*Vp, Hp)
    w2 = stack_taps(fwd_taps(params["w_enc2"].astype(f32)))
    wd1 = stack_taps(tr_taps(params["w_dec1"].astype(f32)))
    wd2 = stack_taps(tr_taps(params["w_dec2"].astype(f32)))

    # seq2vec Linear(L*H -> H), flatten index c*L+l -> (L, H_in=c, H_out=o), padded.
    w1s = jnp.transpose(params["w_s2v"].astype(f32).reshape(H, H, L), (2, 1, 0))
    w1s = jnp.pad(w1s, ((0, 0), (0, Hp - H), (0, Hp - H))).astype(bf16)
    # vec2seq Linear(H -> L*H), output index c*L+l -> (L, H_in=i, H_out=c), padded.
    w2s = jnp.transpose(params["w_v2s"].astype(f32).reshape(H, L, H), (1, 2, 0))
    w2s = jnp.pad(w2s, ((0, 0), (0, Hp - H), (0, Hp - H))).astype(bf16)
    b2s = jnp.pad(params["b_v2s"].astype(f32).reshape(H, L).T,
                  ((0, 0), (0, Hp - H))).reshape(L, 1, Hp)
    wout = pad2(params["w_out"].astype(f32).T, Hp, Vp).astype(bf16)  # (Hp, Vp)

    # ---- ids in l-major order (row = l*Bp + b); -1 padding -> all-zero one-hot ----
    idp = jnp.pad(ids.astype(jnp.int32), ((0, Bp - B), (0, 0)), constant_values=-1)
    neg = jnp.full((Bp, 1), -1, jnp.int32)
    ids_cur = idp.T.reshape(BLp, 1)
    ids_prev = jnp.concatenate([neg, idp[:, :-1]], axis=1).T.reshape(BLp, 1)
    ids_next = jnp.concatenate([idp[:, 1:], neg], axis=1).T.reshape(BLp, 1)
    # Rows belonging to real (unpadded) batch entries: used for BatchNorm stats.
    mrow = ((jnp.arange(BLp) % Bp) < B).astype(f32).reshape(BLp, 1)

    args = (
        ids_prev, ids_cur, ids_next, mrow,
        w1, row(params["b_enc1"], Hp), row(params["g1"], Hp, 1.0), row(params["be1"], Hp),
        w2, row(params["b_enc2"], Hp), row(params["g2"], Hp, 1.0), row(params["be2"], Hp),
        w1s, row(params["b_s2v"], Hp),
        w2s, b2s,
        wd1, row(params["b_dec1"], Hp), row(params["g3"], Hp, 1.0), row(params["be3"], Hp),
        wd2, row(params["b_dec2"], Hp), row(params["g4"], Hp, 1.0), row(params["be4"], Hp),
        wout, row(params["b_out"], Vp),
    )

    # VMEM budget sized from actual operands + intermediates (v7x has 64 MiB total).
    est = sum(int(a.size) * a.dtype.itemsize for a in args)
    est += (BLp * Vp + BLp * Hp + Bp * Hp) * 4          # outputs
    est += 8 * BLp * Hp * 4                             # in-kernel temporaries
    vmem_limit = int(min(56 << 20, max(4 * est, 16 << 20)))

    kernel = functools.partial(_autoencoder_kernel, L, Bp, Hp, Vp, 1.0 / (B * L))
    vmem_spec = pl.BlockSpec(memory_space=pltpu.MemorySpace.VMEM)
    out2, enc2, vec2 = pl.pallas_call(
        kernel,
        out_shape=(
            jax.ShapeDtypeStruct((BLp, Vp), jnp.float32),
            jax.ShapeDtypeStruct((BLp, Hp), jnp.float32),
            jax.ShapeDtypeStruct((Bp, Hp), jnp.float32),
        ),
        in_specs=[vmem_spec] * len(args),
        out_specs=(vmem_spec, vmem_spec, vmem_spec),
        compiler_params=pltpu.CompilerParams(vmem_limit_bytes=vmem_limit),
    )(*args)

    out = out2.reshape(L, Bp, Vp)[:, :B, :V].transpose(1, 0, 2)      # (B, L, vocab)
    seq_enc = enc2.reshape(L, Bp, Hp)[:, :B, :H].transpose(1, 2, 0)  # (B, H, L) NCL
    vec = vec2[:B, :H]
    return out, seq_enc, vec


def init_params(key, dim_hid, len_seq, vocab=21):
    """Deterministic synthetic parameters matching the PyTorch module shapes."""
    H, L, V = dim_hid, len_seq, vocab
    ks = jax.random.split(key, 16)

    def w(k, shape, scale=0.1):
        return (scale * jax.random.normal(k, shape)).astype(jnp.float32)

    # TODO(synk): real BLOSUM62 comes from Biopython; use a deterministic
    # synthetic symmetric integer block of the same shape instead.
    blk = jax.random.randint(ks[0], (V - 1, V - 1), -4, 12).astype(jnp.float32)
    blk = jnp.triu(blk) + jnp.triu(blk, 1).T
    emb = jnp.eye(V, dtype=jnp.float32).at[1:, 1:].set(blk)

    ones = jnp.ones((H,), jnp.float32)
    zeros = jnp.zeros((H,), jnp.float32)
    return dict(
        embedding=emb,
        # encoder: Conv1d(E->H,3,p=1), BN, ReLU, Conv1d(H->H,3,p=1), BN, ReLU
        w_enc1=w(ks[1], (H, V, 3)), b_enc1=w(ks[2], (H,)), g1=ones, be1=zeros,
        w_enc2=w(ks[3], (H, H, 3)), b_enc2=w(ks[4], (H,)), g2=ones, be2=zeros,
        # seq2vec: Linear(L*H -> H)
        w_s2v=w(ks[5], (H, L * H)), b_s2v=w(ks[6], (H,)),
        # vec2seq: Linear(H -> L*H)
        w_v2s=w(ks[7], (L * H, H)), b_v2s=w(ks[8], (L * H,)),
        # decoder: ConvTranspose1d(H->H,3,p=1) x2 (+ BN/ReLU)
        w_dec1=w(ks[9], (H, H, 3)), b_dec1=w(ks[10], (H,)), g3=ones, be3=zeros,
        w_dec2=w(ks[11], (H, H, 3)), b_dec2=w(ks[12], (H,)), g4=ones, be4=zeros,
        # out_layer: Linear(H -> V)
        w_out=w(ks[13], (V, H)), b_out=w(ks[14], (V,)),
    )


if __name__ == "__main__":
    key = jax.random.PRNGKey(0)
    k_ids, k_par = jax.random.split(key)
    B, L, H, V = 2, 8, 32, 21

    params = init_params(k_par, dim_hid=H, len_seq=L, vocab=V)
    ids = jax.random.randint(k_ids, (B, L), 0, V, dtype=jnp.int32)

    out, seq_enc, vec = autoencoder_forward(ids, params, dim_hid=H, len_seq=L)
    jax.block_until_ready((out, seq_enc, vec))

    assert out.shape == (B, L, V) and out.dtype == jnp.float32
    assert seq_enc.shape == (B, H, L) and seq_enc.dtype == jnp.float32
    assert vec.shape == (B, H) and vec.dtype == jnp.float32
    print("KERNEL_OK")
</pallas_src>

<mosaic_0001>
module attributes {stable_mosaic.version = 11 : i64} {
  func.func @_autoencoder_kernel(%arg0: memref<64x1xi32, #tpu.memory_space<vmem>>, %arg1: memref<64x1xi32, #tpu.memory_space<vmem>>, %arg2: memref<64x1xi32, #tpu.memory_space<vmem>>, %arg3: memref<64x1xf32, #tpu.memory_space<vmem>>, %arg4: memref<384x128xbf16, #tpu.memory_space<vmem>>, %arg5: memref<1x128xf32, #tpu.memory_space<vmem>>, %arg6: memref<1x128xf32, #tpu.memory_space<vmem>>, %arg7: memref<1x128xf32, #tpu.memory_space<vmem>>, %arg8: memref<384x128xbf16, #tpu.memory_space<vmem>>, %arg9: memref<1x128xf32, #tpu.memory_space<vmem>>, %arg10: memref<1x128xf32, #tpu.memory_space<vmem>>, %arg11: memref<1x128xf32, #tpu.memory_space<vmem>>, %arg12: memref<8x128x128xbf16, #tpu.memory_space<vmem>>, %arg13: memref<1x128xf32, #tpu.memory_space<vmem>>, %arg14: memref<8x128x128xbf16, #tpu.memory_space<vmem>>, %arg15: memref<8x1x128xf32, #tpu.memory_space<vmem>>, %arg16: memref<384x128xbf16, #tpu.memory_space<vmem>>, %arg17: memref<1x128xf32, #tpu.memory_space<vmem>>, %arg18: memref<1x128xf32, #tpu.memory_space<vmem>>, %arg19: memref<1x128xf32, #tpu.memory_space<vmem>>, %arg20: memref<384x128xbf16, #tpu.memory_space<vmem>>, %arg21: memref<1x128xf32, #tpu.memory_space<vmem>>, %arg22: memref<1x128xf32, #tpu.memory_space<vmem>>, %arg23: memref<1x128xf32, #tpu.memory_space<vmem>>, %arg24: memref<128x128xbf16, #tpu.memory_space<vmem>>, %arg25: memref<1x128xf32, #tpu.memory_space<vmem>>, %arg26: memref<64x128xf32, #tpu.memory_space<vmem>>, %arg27: memref<64x128xf32, #tpu.memory_space<vmem>>, %arg28: memref<8x128xf32, #tpu.memory_space<vmem>>) attributes {dimension_semantics = [], scalar_prefetch = 0 : i64, scratch_operands = 0 : i64, tpu.core_type = #tpu.core_type<tc>} {
    %c0 = arith.constant 0 : index
    %c0_0 = arith.constant 0 : index
    %0 = vector.load %arg3[%c0, %c0_0] : memref<64x1xf32, #tpu.memory_space<vmem>>, vector<64x1xf32>
    %c0_1 = arith.constant 0 : index
    %c0_2 = arith.constant 0 : index
    %1 = vector.load %arg0[%c0_1, %c0_2] : memref<64x1xi32, #tpu.memory_space<vmem>>, vector<64x1xi32>
    %2 = tpu.iota {dimensions = array<i32: 1>} : vector<64x128xi32>
    %3 = vector.broadcast %1 : vector<64x1xi32> to vector<64x128xi32>
    %4 = arith.cmpi eq, %2, %3 : vector<64x128xi32>
    %5 = arith.extui %4 : vector<64x128xi1> to vector<64x128xi32>
    %6 = arith.sitofp %5 : vector<64x128xi32> to vector<64x128xf32>
    %c0_3 = arith.constant 0 : index
    %c0_4 = arith.constant 0 : index
    %7 = vector.load %arg1[%c0_3, %c0_4] : memref<64x1xi32, #tpu.memory_space<vmem>>, vector<64x1xi32>
    %8 = tpu.iota {dimensions = array<i32: 1>} : vector<64x128xi32>
    %9 = vector.broadcast %7 : vector<64x1xi32> to vector<64x128xi32>
    %10 = arith.cmpi eq, %8, %9 : vector<64x128xi32>
    %11 = arith.extui %10 : vector<64x128xi1> to vector<64x128xi32>
    %12 = arith.sitofp %11 : vector<64x128xi32> to vector<64x128xf32>
    %c0_5 = arith.constant 0 : index
    %c0_6 = arith.constant 0 : index
    %13 = vector.load %arg2[%c0_5, %c0_6] : memref<64x1xi32, #tpu.memory_space<vmem>>, vector<64x1xi32>
    %14 = tpu.iota {dimensions = array<i32: 1>} : vector<64x128xi32>
    %15 = vector.broadcast %13 : vector<64x1xi32> to vector<64x128xi32>
    %16 = arith.cmpi eq, %14, %15 : vector<64x128xi32>
    %17 = arith.extui %16 : vector<64x128xi1> to vector<64x128xi32>
    %18 = arith.sitofp %17 : vector<64x128xi32> to vector<64x128xf32>
    %19 = tpu.concatenate %6, %12, %18 in 1 : vector<64x128xf32>, vector<64x128xf32>, vector<64x128xf32> -> vector<64x384xf32>
    %20 = arith.truncf %19 : vector<64x384xf32> to vector<64x384xbf16>
    %c0_7 = arith.constant 0 : index
    %c0_8 = arith.constant 0 : index
    %21 = vector.load %arg4[%c0_7, %c0_8] : memref<384x128xbf16, #tpu.memory_space<vmem>>, vector<384x128xbf16>
    %cst = arith.constant dense<0.000000e+00> : vector<64x128xf32>
    %22 = tpu.matmul %20, %21, %cst {dimension_numbers = #tpu.dot_dimension_numbers<[1], [0], [0], [1], [0, 0, 1, 1], [], []>} : vector<64x384xbf16>, vector<384x128xbf16>, vector<64x128xf32> -> vector<64x128xf32>
    %c0_9 = arith.constant 0 : index
    %c0_10 = arith.constant 0 : index
    %23 = vector.load %arg5[%c0_9, %c0_10] : memref<1x128xf32, #tpu.memory_space<vmem>>, vector<1x128xf32>
    %24 = vector.broadcast %23 : vector<1x128xf32> to vector<64x128xf32>
    %25 = arith.addf %22, %24 : vector<64x128xf32>
    %26 = vector.broadcast %0 : vector<64x1xf32> to vector<64x128xf32>
    %27 = arith.mulf %25, %26 : vector<64x128xf32>
    %cst_11 = arith.constant dense<0.000000e+00> : vector<128xf32>
    %28 = vector.multi_reduction <add>, %27, %cst_11 [0] : vector<64x128xf32> to vector<128xf32>
    %29 = vector.shape_cast %28 : vector<128xf32> to vector<1x128xf32>
    %30 = arith.mulf %27, %25 : vector<64x128xf32>
    %cst_12 = arith.constant dense<0.000000e+00> : vector<128xf32>
    %31 = vector.multi_reduction <add>, %30, %cst_12 [0] : vector<64x128xf32> to vector<128xf32>
    %32 = vector.shape_cast %31 : vector<128xf32> to vector<1x128xf32>
    %cst_13 = arith.constant 6.250000e-02 : f32
    %33 = vector.broadcast %cst_13 : f32 to vector<1x128xf32>
    %34 = arith.mulf %29, %33 : vector<1x128xf32>
    %cst_14 = arith.constant 6.250000e-02 : f32
    %35 = vector.broadcast %cst_14 : f32 to vector<1x128xf32>
    %36 = arith.mulf %32, %35 : vector<1x128xf32>
    %37 = arith.mulf %34, %34 : vector<1x128xf32>
    %38 = arith.subf %36, %37 : vector<1x128xf32>
    %cst_15 = arith.constant 0.000000e+00 : f32
    %39 = vector.broadcast %cst_15 : f32 to vector<1x128xf32>
    %40 = arith.maximumf %38, %39 : vector<1x128xf32>
    %41 = vector.broadcast %34 : vector<1x128xf32> to vector<64x128xf32>
    %42 = arith.subf %25, %41 : vector<64x128xf32>
    %cst_16 = arith.constant 9.99999974E-6 : f32
    %43 = vector.broadcast %cst_16 : f32 to vector<1x128xf32>
    %44 = arith.addf %40, %43 : vector<1x128xf32>
    %45 = math.rsqrt %44 : vector<1x128xf32>
    %46 = vector.broadcast %45 : vector<1x128xf32> to vector<64x128xf32>
    %47 = arith.mulf %42, %46 : vector<64x128xf32>
    %c0_17 = arith.constant 0 : index
    %c0_18 = arith.constant 0 : index
    %48 = vector.load %arg6[%c0_17, %c0_18] : memref<1x128xf32, #tpu.memory_space<vmem>>, vector<1x128xf32>
    %49 = vector.broadcast %48 : vector<1x128xf32> to vector<64x128xf32>
    %50 = arith.mulf %47, %49 : vector<64x128xf32>
    %c0_19 = arith.constant 0 : index
    %c0_20 = arith.constant 0 : index
    %51 = vector.load %arg7[%c0_19, %c0_20] : memref<1x128xf32, #tpu.memory_space<vmem>>, vector<1x128xf32>
    %52 = vector.broadcast %51 : vector<1x128xf32> to vector<64x128xf32>
    %53 = arith.addf %50, %52 : vector<64x128xf32>
    %cst_21 = arith.constant 0.000000e+00 : f32
    %54 = vector.broadcast %cst_21 : f32 to vector<64x128xf32>
    %55 = arith.maximumf %53, %54 : vector<64x128xf32>
    %cst_22 = arith.constant 0.000000e+00 : f32
    %56 = vector.broadcast %cst_22 : f32 to vector<8x128xf32>
    %57 = vector.extract_strided_slice %55 {offsets = [0, 0], sizes = [56, 128], strides = [1, 1]} : vector<64x128xf32> to vector<56x128xf32>
    %58 = tpu.concatenate %56, %57 in 0 : vector<8x128xf32>, vector<56x128xf32> -> vector<64x128xf32>
    %cst_23 = arith.constant 0.000000e+00 : f32
    %59 = vector.broadcast %cst_23 : f32 to vector<8x128xf32>
    %60 = vector.extract_strided_slice %55 {offsets = [8, 0], sizes = [56, 128], strides = [1, 1]} : vector<64x128xf32> to vector<56x128xf32>
    %61 = tpu.concatenate %60, %59 in 0 : vector<56x128xf32>, vector<8x128xf32> -> vector<64x128xf32>
    %62 = tpu.concatenate %58, %55, %61 in 1 : vector<64x128xf32>, vector<64x128xf32>, vector<64x128xf32> -> vector<64x384xf32>
    %63 = arith.truncf %62 : vector<64x384xf32> to vector<64x384xbf16>
    %c0_24 = arith.constant 0 : index
    %c0_25 = arith.constant 0 : index
    %64 = vector.load %arg8[%c0_24, %c0_25] : memref<384x128xbf16, #tpu.memory_space<vmem>>, vector<384x128xbf16>
    %cst_26 = arith.constant dense<0.000000e+00> : vector<64x128xf32>
    %65 = tpu.matmul %63, %64, %cst_26 {dimension_numbers = #tpu.dot_dimension_numbers<[1], [0], [0], [1], [0, 0, 1, 1], [], []>} : vector<64x384xbf16>, vector<384x128xbf16>, vector<64x128xf32> -> vector<64x128xf32>
    %c0_27 = arith.constant 0 : index
    %c0_28 = arith.constant 0 : index
    %66 = vector.load %arg9[%c0_27, %c0_28] : memref<1x128xf32, #tpu.memory_space<vmem>>, vector<1x128xf32>
    %67 = vector.broadcast %66 : vector<1x128xf32> to vector<64x128xf32>
    %68 = arith.addf %65, %67 : vector<64x128xf32>
    %69 = vector.broadcast %0 : vector<64x1xf32> to vector<64x128xf32>
    %70 = arith.mulf %68, %69 : vector<64x128xf32>
    %cst_29 = arith.constant dense<0.000000e+00> : vector<128xf32>
    %71 = vector.multi_reduction <add>, %70, %cst_29 [0] : vector<64x128xf32> to vector<128xf32>
    %72 = vector.shape_cast %71 : vector<128xf32> to vector<1x128xf32>
    %73 = arith.mulf %70, %68 : vector<64x128xf32>
    %cst_30 = arith.constant dense<0.000000e+00> : vector<128xf32>
    %74 = vector.multi_reduction <add>, %73, %cst_30 [0] : vector<64x128xf32> to vector<128xf32>
    %75 = vector.shape_cast %74 : vector<128xf32> to vector<1x128xf32>
    %cst_31 = arith.constant 6.250000e-02 : f32
    %76 = vector.broadcast %cst_31 : f32 to vector<1x128xf32>
    %77 = arith.mulf %72, %76 : vector<1x128xf32>
    %cst_32 = arith.constant 6.250000e-02 : f32
    %78 = vector.broadcast %cst_32 : f32 to vector<1x128xf32>
    %79 = arith.mulf %75, %78 : vector<1x128xf32>
    %80 = arith.mulf %77, %77 : vector<1x128xf32>
    %81 = arith.subf %79, %80 : vector<1x128xf32>
    %cst_33 = arith.constant 0.000000e+00 : f32
    %82 = vector.broadcast %cst_33 : f32 to vector<1x128xf32>
    %83 = arith.maximumf %81, %82 : vector<1x128xf32>
    %84 = vector.broadcast %77 : vector<1x128xf32> to vector<64x128xf32>
    %85 = arith.subf %68, %84 : vector<64x128xf32>
    %cst_34 = arith.constant 9.99999974E-6 : f32
    %86 = vector.broadcast %cst_34 : f32 to vector<1x128xf32>
    %87 = arith.addf %83, %86 : vector<1x128xf32>
    %88 = math.rsqrt %87 : vector<1x128xf32>
    %89 = vector.broadcast %88 : vector<1x128xf32> to vector<64x128xf32>
    %90 = arith.mulf %85, %89 : vector<64x128xf32>
    %c0_35 = arith.constant 0 : index
    %c0_36 = arith.constant 0 : index
    %91 = vector.load %arg10[%c0_35, %c0_36] : memref<1x128xf32, #tpu.memory_space<vmem>>, vector<1x128xf32>
    %92 = vector.broadcast %91 : vector<1x128xf32> to vector<64x128xf32>
    %93 = arith.mulf %90, %92 : vector<64x128xf32>
    %c0_37 = arith.constant 0 : index
    %c0_38 = arith.constant 0 : index
    %94 = vector.load %arg11[%c0_37, %c0_38] : memref<1x128xf32, #tpu.memory_space<vmem>>, vector<1x128xf32>
    %95 = vector.broadcast %94 : vector<1x128xf32> to vector<64x128xf32>
    %96 = arith.addf %93, %95 : vector<64x128xf32>
    %cst_39 = arith.constant 0.000000e+00 : f32
    %97 = vector.broadcast %cst_39 : f32 to vector<64x128xf32>
    %98 = arith.maximumf %96, %97 : vector<64x128xf32>
    %c0_40 = arith.constant 0 : index
    %c0_41 = arith.constant 0 : index
    %99 = vector.load %arg27[%c0_40, %c0_41] : memref<64x128xf32, #tpu.memory_space<vmem>>, vector<64x128xf32>
    tpu.vector_store %arg27[%c0_40, %c0_41], %98 {strides = array<i32>} : memref<64x128xf32, #tpu.memory_space<vmem>>, vector<64x128xf32>,
    %cst_42 = arith.constant 0.000000e+00 : f32
    %100 = vector.broadcast %cst_42 : f32 to vector<8x128xf32>
    %c0_43 = arith.constant 0 : index
    %c0_44 = arith.constant 0 : index
    %101 = vector.load %arg13[%c0_43, %c0_44] : memref<1x128xf32, #tpu.memory_space<vmem>>, vector<1x128xf32>
    %102 = vector.broadcast %101 : vector<1x128xf32> to vector<8x128xf32>
    %103 = arith.addf %100, %102 : vector<8x128xf32>
    %104 = vector.extract_strided_slice %98 {offsets = [0, 0], sizes = [8, 128], strides = [1, 1]} : vector<64x128xf32> to vector<8x128xf32>
    %105 = arith.truncf %104 : vector<8x128xf32> to vector<8x128xbf16>
    %c0_45 = arith.constant 0 : index
    %c0_46 = arith.constant 0 : index
    %c0_47 = arith.constant 0 : index
    %106 = vector.load %arg12[%c0_45, %c0_46, %c0_47] : memref<8x128x128xbf16, #tpu.memory_space<vmem>>, vector<1x128x128xbf16>
    %107 = vector.shape_cast %106 : vector<1x128x128xbf16> to vector<128x128xbf16>
    %cst_48 = arith.constant dense<0.000000e+00> : vector<8x128xf32>
    %108 = tpu.matmul %105, %107, %cst_48 {dimension_numbers = #tpu.dot_dimension_numbers<[1], [0], [0], [1], [0, 0, 1, 1], [], []>} : vector<8x128xbf16>, vector<128x128xbf16>, vector<8x128xf32> -> vector<8x128xf32>
    %109 = arith.addf %103, %108 : vector<8x128xf32>
    %110 = vector.extract_strided_slice %98 {offsets = [8, 0], sizes = [8, 128], strides = [1, 1]} : vector<64x128xf32> to vector<8x128xf32>
    %111 = arith.truncf %110 : vector<8x128xf32> to vector<8x128xbf16>
    %c1 = arith.constant 1 : index
    %c0_49 = arith.constant 0 : index
    %c0_50 = arith.constant 0 : index
    %112 = vector.load %arg12[%c1, %c0_49, %c0_50] : memref<8x128x128xbf16, #tpu.memory_space<vmem>>, vector<1x128x128xbf16>
    %113 = vector.shape_cast %112 : vector<1x128x128xbf16> to vector<128x128xbf16>
    %cst_51 = arith.constant dense<0.000000e+00> : vector<8x128xf32>
    %114 = tpu.matmul %111, %113, %cst_51 {dimension_numbers = #tpu.dot_dimension_numbers<[1], [0], [0], [1], [0, 0, 1, 1], [], []>} : vector<8x128xbf16>, vector<128x128xbf16>, vector<8x128xf32> -> vector<8x128xf32>
    %115 = arith.addf %109, %114 : vector<8x128xf32>
    %116 = vector.extract_strided_slice %98 {offsets = [16, 0], sizes = [8, 128], strides = [1, 1]} : vector<64x128xf32> to vector<8x128xf32>
    %117 = arith.truncf %116 : vector<8x128xf32> to vector<8x128xbf16>
    %c2 = arith.constant 2 : index
    %c0_52 = arith.constant 0 : index
    %c0_53 = arith.constant 0 : index
    %118 = vector.load %arg12[%c2, %c0_52, %c0_53] : memref<8x128x128xbf16, #tpu.memory_space<vmem>>, vector<1x128x128xbf16>
    %119 = vector.shape_cast %118 : vector<1x128x128xbf16> to vector<128x128xbf16>
    %cst_54 = arith.constant dense<0.000000e+00> : vector<8x128xf32>
    %120 = tpu.matmul %117, %119, %cst_54 {dimension_numbers = #tpu.dot_dimension_numbers<[1], [0], [0], [1], [0, 0, 1, 1], [], []>} : vector<8x128xbf16>, vector<128x128xbf16>, vector<8x128xf32> -> vector<8x128xf32>
    %121 = arith.addf %115, %120 : vector<8x128xf32>
    %122 = vector.extract_strided_slice %98 {offsets = [24, 0], sizes = [8, 128], strides = [1, 1]} : vector<64x128xf32> to vector<8x128xf32>
    %123 = arith.truncf %122 : vector<8x128xf32> to vector<8x128xbf16>
    %c3 = arith.constant 3 : index
    %c0_55 = arith.constant 0 : index
    %c0_56 = arith.constant 0 : index
    %124 = vector.load %arg12[%c3, %c0_55, %c0_56] : memref<8x128x128xbf16, #tpu.memory_space<vmem>>, vector<1x128x128xbf16>
    %125 = vector.shape_cast %124 : vector<1x128x128xbf16> to vector<128x128xbf16>
    %cst_57 = arith.constant dense<0.000000e+00> : vector<8x128xf32>
    %126 = tpu.matmul %123, %125, %cst_57 {dimension_numbers = #tpu.dot_dimension_numbers<[1], [0], [0], [1], [0, 0, 1, 1], [], []>} : vector<8x128xbf16>, vector<128x128xbf16>, vector<8x128xf32> -> vector<8x128xf32>
    %127 = arith.addf %121, %126 : vector<8x128xf32>
    %128 = vector.extract_strided_slice %98 {offsets = [32, 0], sizes = [8, 128], strides = [1, 1]} : vector<64x128xf32> to vector<8x128xf32>
    %129 = arith.truncf %128 : vector<8x128xf32> to vector<8x128xbf16>
    %c4 = arith.constant 4 : index
    %c0_58 = arith.constant 0 : index
    %c0_59 = arith.constant 0 : index
    %130 = vector.load %arg12[%c4, %c0_58, %c0_59] : memref<8x128x128xbf16, #tpu.memory_space<vmem>>, vector<1x128x128xbf16>
    %131 = vector.shape_cast %130 : vector<1x128x128xbf16> to vector<128x128xbf16>
    %cst_60 = arith.constant dense<0.000000e+00> : vector<8x128xf32>
    %132 = tpu.matmul %129, %131, %cst_60 {dimension_numbers = #tpu.dot_dimension_numbers<[1], [0], [0], [1], [0, 0, 1, 1], [], []>} : vector<8x128xbf16>, vector<128x128xbf16>, vector<8x128xf32> -> vector<8x128xf32>
    %133 = arith.addf %127, %132 : vector<8x128xf32>
    %134 = vector.extract_strided_slice %98 {offsets = [40, 0], sizes = [8, 128], strides = [1, 1]} : vector<64x128xf32> to vector<8x128xf32>
    %135 = arith.truncf %134 : vector<8x128xf32> to vector<8x128xbf16>
    %c5 = arith.constant 5 : index
    %c0_61 = arith.constant 0 : index
    %c0_62 = arith.constant 0 : index
    %136 = vector.load %arg12[%c5, %c0_61, %c0_62] : memref<8x128x128xbf16, #tpu.memory_space<vmem>>, vector<1x128x128xbf16>
    %137 = vector.shape_cast %136 : vector<1x128x128xbf16> to vector<128x128xbf16>
    %cst_63 = arith.constant dense<0.000000e+00> : vector<8x128xf32>
    %138 = tpu.matmul %135, %137, %cst_63 {dimension_numbers = #tpu.dot_dimension_numbers<[1], [0], [0], [1], [0, 0, 1, 1], [], []>} : vector<8x128xbf16>, vector<128x128xbf16>, vector<8x128xf32> -> vector<8x128xf32>
    %139 = arith.addf %133, %138 : vector<8x128xf32>
    %140 = vector.extract_strided_slice %98 {offsets = [48, 0], sizes = [8, 128], strides = [1, 1]} : vector<64x128xf32> to vector<8x128xf32>
    %141 = arith.truncf %140 : vector<8x128xf32> to vector<8x128xbf16>
    %c6 = arith.constant 6 : index
    %c0_64 = arith.constant 0 : index
    %c0_65 = arith.constant 0 : index
    %142 = vector.load %arg12[%c6, %c0_64, %c0_65] : memref<8x128x128xbf16, #tpu.memory_space<vmem>>, vector<1x128x128xbf16>
    %143 = vector.shape_cast %142 : vector<1x128x128xbf16> to vector<128x128xbf16>
    %cst_66 = arith.constant dense<0.000000e+00> : vector<8x128xf32>
    %144 = tpu.matmul %141, %143, %cst_66 {dimension_numbers = #tpu.dot_dimension_numbers<[1], [0], [0], [1], [0, 0, 1, 1], [], []>} : vector<8x128xbf16>, vector<128x128xbf16>, vector<8x128xf32> -> vector<8x128xf32>
    %145 = arith.addf %139, %144 : vector<8x128xf32>
    %146 = vector.extract_strided_slice %98 {offsets = [56, 0], sizes = [8, 128], strides = [1, 1]} : vector<64x128xf32> to vector<8x128xf32>
    %147 = arith.truncf %146 : vector<8x128xf32> to vector<8x128xbf16>
    %c7 = arith.constant 7 : index
    %c0_67 = arith.constant 0 : index
    %c0_68 = arith.constant 0 : index
    %148 = vector.load %arg12[%c7, %c0_67, %c0_68] : memref<8x128x128xbf16, #tpu.memory_space<vmem>>, vector<1x128x128xbf16>
    %149 = vector.shape_cast %148 : vector<1x128x128xbf16> to vector<128x128xbf16>
    %cst_69 = arith.constant dense<0.000000e+00> : vector<8x128xf32>
    %150 = tpu.matmul %147, %149, %cst_69 {dimension_numbers = #tpu.dot_dimension_numbers<[1], [0], [0], [1], [0, 0, 1, 1], [], []>} : vector<8x128xbf16>, vector<128x128xbf16>, vector<8x128xf32> -> vector<8x128xf32>
    %151 = arith.addf %145, %150 : vector<8x128xf32>
    %cst_70 = arith.constant 0.000000e+00 : f32
    %152 = vector.broadcast %cst_70 : f32 to vector<8x128xf32>
    %153 = arith.maximumf %151, %152 : vector<8x128xf32>
    %c0_71 = arith.constant 0 : index
    %c0_72 = arith.constant 0 : index
    %154 = vector.load %arg28[%c0_71, %c0_72] : memref<8x128xf32, #tpu.memory_space<vmem>>, vector<8x128xf32>
    tpu.vector_store %arg28[%c0_71, %c0_72], %153 {strides = array<i32>} : memref<8x128xf32, #tpu.memory_space<vmem>>, vector<8x128xf32>,
    %155 = arith.truncf %153 : vector<8x128xf32> to vector<8x128xbf16>
    %c0_73 = arith.constant 0 : index
    %c0_74 = arith.constant 0 : index
    %c0_75 = arith.constant 0 : index
    %156 = vector.load %arg14[%c0_73, %c0_74, %c0_75] : memref<8x128x128xbf16, #tpu.memory_space<vmem>>, vector<1x128x128xbf16>
    %157 = vector.shape_cast %156 : vector<1x128x128xbf16> to vector<128x128xbf16>
    %cst_76 = arith.constant dense<0.000000e+00> : vector<8x128xf32>
    %158 = tpu.matmul %155, %157, %cst_76 {dimension_numbers = #tpu.dot_dimension_numbers<[1], [0], [0], [1], [0, 0, 1, 1], [], []>} : vector<8x128xbf16>, vector<128x128xbf16>, vector<8x128xf32> -> vector<8x128xf32>
    %c0_77 = arith.constant 0 : index
    %c0_78 = arith.constant 0 : index
    %c0_79 = arith.constant 0 : index
    %159 = vector.load %arg15[%c0_77, %c0_78, %c0_79] : memref<8x1x128xf32, #tpu.memory_space<vmem>>, vector<1x1x128xf32>
    %160 = vector.shape_cast %159 : vector<1x1x128xf32> to vector<1x128xf32>
    %161 = vector.broadcast %160 : vector<1x128xf32> to vector<8x128xf32>
    %162 = arith.addf %158, %161 : vector<8x128xf32>
    %cst_80 = arith.constant 0.000000e+00 : f32
    %163 = vector.broadcast %cst_80 : f32 to vector<8x128xf32>
    %164 = arith.maximumf %162, %163 : vector<8x128xf32>
    %c1_81 = arith.constant 1 : index
    %c0_82 = arith.constant 0 : index
    %c0_83 = arith.constant 0 : index
    %165 = vector.load %arg14[%c1_81, %c0_82, %c0_83] : memref<8x128x128xbf16, #tpu.memory_space<vmem>>, vector<1x128x128xbf16>
    %166 = vector.shape_cast %165 : vector<1x128x128xbf16> to vector<128x128xbf16>
    %cst_84 = arith.constant dense<0.000000e+00> : vector<8x128xf32>
    %167 = tpu.matmul %155, %166, %cst_84 {dimension_numbers = #tpu.dot_dimension_numbers<[1], [0], [0], [1], [0, 0, 1, 1], [], []>} : vector<8x128xbf16>, vector<128x128xbf16>, vector<8x128xf32> -> vector<8x128xf32>
    %c1_85 = arith.constant 1 : index
    %c0_86 = arith.constant 0 : index
    %c0_87 = arith.constant 0 : index
    %168 = vector.load %arg15[%c1_85, %c0_86, %c0_87] : memref<8x1x128xf32, #tpu.memory_space<vmem>>, vector<1x1x128xf32>
    %169 = vector.shape_cast %168 : vector<1x1x128xf32> to vector<1x128xf32>
    %170 = vector.broadcast %169 : vector<1x128xf32> to vector<8x128xf32>
    %171 = arith.addf %167, %170 : vector<8x128xf32>
    %cst_88 = arith.constant 0.000000e+00 : f32
    %172 = vector.broadcast %cst_88 : f32 to vector<8x128xf32>
    %173 = arith.maximumf %171, %172 : vector<8x128xf32>
    %c2_89 = arith.constant 2 : index
    %c0_90 = arith.constant 0 : index
    %c0_91 = arith.constant 0 : index
    %174 = vector.load %arg14[%c2_89, %c0_90, %c0_91] : memref<8x128x128xbf16, #tpu.memory_space<vmem>>, vector<1x128x128xbf16>
    %175 = vector.shape_cast %174 : vector<1x128x128xbf16> to vector<128x128xbf16>
    %cst_92 = arith.constant dense<0.000000e+00> : vector<8x128xf32>
    %176 = tpu.matmul %155, %175, %cst_92 {dimension_numbers = #tpu.dot_dimension_numbers<[1], [0], [0], [1], [0, 0, 1, 1], [], []>} : vector<8x128xbf16>, vector<128x128xbf16>, vector<8x128xf32> -> vector<8x128xf32>
    %c2_93 = arith.constant 2 : index
    %c0_94 = arith.constant 0 : index
    %c0_95 = arith.constant 0 : index
    %177 = vector.load %arg15[%c2_93, %c0_94, %c0_95] : memref<8x1x128xf32, #tpu.memory_space<vmem>>, vector<1x1x128xf32>
    %178 = vector.shape_cast %177 : vector<1x1x128xf32> to vector<1x128xf32>
    %179 = vector.broadcast %178 : vector<1x128xf32> to vector<8x128xf32>
    %180 = arith.addf %176, %179 : vector<8x128xf32>
    %cst_96 = arith.constant 0.000000e+00 : f32
    %181 = vector.broadcast %cst_96 : f32 to vector<8x128xf32>
    %182 = arith.maximumf %180, %181 : vector<8x128xf32>
    %c3_97 = arith.constant 3 : index
    %c0_98 = arith.constant 0 : index
    %c0_99 = arith.constant 0 : index
    %183 = vector.load %arg14[%c3_97, %c0_98, %c0_99] : memref<8x128x128xbf16, #tpu.memory_space<vmem>>, vector<1x128x128xbf16>
    %184 = vector.shape_cast %183 : vector<1x128x128xbf16> to vector<128x128xbf16>
    %cst_100 = arith.constant dense<0.000000e+00> : vector<8x128xf32>
    %185 = tpu.matmul %155, %184, %cst_100 {dimension_numbers = #tpu.dot_dimension_numbers<[1], [0], [0], [1], [0, 0, 1, 1], [], []>} : vector<8x128xbf16>, vector<128x128xbf16>, vector<8x128xf32> -> vector<8x128xf32>
    %c3_101 = arith.constant 3 : index
    %c0_102 = arith.constant 0 : index
    %c0_103 = arith.constant 0 : index
    %186 = vector.load %arg15[%c3_101, %c0_102, %c0_103] : memref<8x1x128xf32, #tpu.memory_space<vmem>>, vector<1x1x128xf32>
    %187 = vector.shape_cast %186 : vector<1x1x128xf32> to vector<1x128xf32>
    %188 = vector.broadcast %187 : vector<1x128xf32> to vector<8x128xf32>
    %189 = arith.addf %185, %188 : vector<8x128xf32>
    %cst_104 = arith.constant 0.000000e+00 : f32
    %190 = vector.broadcast %cst_104 : f32 to vector<8x128xf32>
    %191 = arith.maximumf %189, %190 : vector<8x128xf32>
    %c4_105 = arith.constant 4 : index
    %c0_106 = arith.constant 0 : index
    %c0_107 = arith.constant 0 : index
    %192 = vector.load %arg14[%c4_105, %c0_106, %c0_107] : memref<8x128x128xbf16, #tpu.memory_space<vmem>>, vector<1x128x128xbf16>
    %193 = vector.shape_cast %192 : vector<1x128x128xbf16> to vector<128x128xbf16>
    %cst_108 = arith.constant dense<0.000000e+00> : vector<8x128xf32>
    %194 = tpu.matmul %155, %193, %cst_108 {dimension_numbers = #tpu.dot_dimension_numbers<[1], [0], [0], [1], [0, 0, 1, 1], [], []>} : vector<8x128xbf16>, vector<128x128xbf16>, vector<8x128xf32> -> vector<8x128xf32>
    %c4_109 = arith.constant 4 : index
    %c0_110 = arith.constant 0 : index
    %c0_111 = arith.constant 0 : index
    %195 = vector.load %arg15[%c4_109, %c0_110, %c0_111] : memref<8x1x128xf32, #tpu.memory_space<vmem>>, vector<1x1x128xf32>
    %196 = vector.shape_cast %195 : vector<1x1x128xf32> to vector<1x128xf32>
    %197 = vector.broadcast %196 : vector<1x128xf32> to vector<8x128xf32>
    %198 = arith.addf %194, %197 : vector<8x128xf32>
    %cst_112 = arith.constant 0.000000e+00 : f32
    %199 = vector.broadcast %cst_112 : f32 to vector<8x128xf32>
    %200 = arith.maximumf %198, %199 : vector<8x128xf32>
    %c5_113 = arith.constant 5 : index
    %c0_114 = arith.constant 0 : index
    %c0_115 = arith.constant 0 : index
    %201 = vector.load %arg14[%c5_113, %c0_114, %c0_115] : memref<8x128x128xbf16, #tpu.memory_space<vmem>>, vector<1x128x128xbf16>
    %202 = vector.shape_cast %201 : vector<1x128x128xbf16> to vector<128x128xbf16>
    %cst_116 = arith.constant dense<0.000000e+00> : vector<8x128xf32>
    %203 = tpu.matmul %155, %202, %cst_116 {dimension_numbers = #tpu.dot_dimension_numbers<[1], [0], [0], [1], [0, 0, 1, 1], [], []>} : vector<8x128xbf16>, vector<128x128xbf16>, vector<8x128xf32> -> vector<8x128xf32>
    %c5_117 = arith.constant 5 : index
    %c0_118 = arith.constant 0 : index
    %c0_119 = arith.constant 0 : index
    %204 = vector.load %arg15[%c5_117, %c0_118, %c0_119] : memref<8x1x128xf32, #tpu.memory_space<vmem>>, vector<1x1x128xf32>
    %205 = vector.shape_cast %204 : vector<1x1x128xf32> to vector<1x128xf32>
    %206 = vector.broadcast %205 : vector<1x128xf32> to vector<8x128xf32>
    %207 = arith.addf %203, %206 : vector<8x128xf32>
    %cst_120 = arith.constant 0.000000e+00 : f32
    %208 = vector.broadcast %cst_120 : f32 to vector<8x128xf32>
    %209 = arith.maximumf %207, %208 : vector<8x128xf32>
    %c6_121 = arith.constant 6 : index
    %c0_122 = arith.constant 0 : index
    %c0_123 = arith.constant 0 : index
    %210 = vector.load %arg14[%c6_121, %c0_122, %c0_123] : memref<8x128x128xbf16, #tpu.memory_space<vmem>>, vector<1x128x128xbf16>
    %211 = vector.shape_cast %210 : vector<1x128x128xbf16> to vector<128x128xbf16>
    %cst_124 = arith.constant dense<0.000000e+00> : vector<8x128xf32>
    %212 = tpu.matmul %155, %211, %cst_124 {dimension_numbers = #tpu.dot_dimension_numbers<[1], [0], [0], [1], [0, 0, 1, 1], [], []>} : vector<8x128xbf16>, vector<128x128xbf16>, vector<8x128xf32> -> vector<8x128xf32>
    %c6_125 = arith.constant 6 : index
    %c0_126 = arith.constant 0 : index
    %c0_127 = arith.constant 0 : index
    %213 = vector.load %arg15[%c6_125, %c0_126, %c0_127] : memref<8x1x128xf32, #tpu.memory_space<vmem>>, vector<1x1x128xf32>
    %214 = vector.shape_cast %213 : vector<1x1x128xf32> to vector<1x128xf32>
    %215 = vector.broadcast %214 : vector<1x128xf32> to vector<8x128xf32>
    %216 = arith.addf %212, %215 : vector<8x128xf32>
    %cst_128 = arith.constant 0.000000e+00 : f32
    %217 = vector.broadcast %cst_128 : f32 to vector<8x128xf32>
    %218 = arith.maximumf %216, %217 : vector<8x128xf32>
    %c7_129 = arith.constant 7 : index
    %c0_130 = arith.constant 0 : index
    %c0_131 = arith.constant 0 : index
    %219 = vector.load %arg14[%c7_129, %c0_130, %c0_131] : memref<8x128x128xbf16, #tpu.memory_space<vmem>>, vector<1x128x128xbf16>
    %220 = vector.shape_cast %219 : vector<1x128x128xbf16> to vector<128x128xbf16>
    %cst_132 = arith.constant dense<0.000000e+00> : vector<8x128xf32>
    %221 = tpu.matmul %155, %220, %cst_132 {dimension_numbers = #tpu.dot_dimension_numbers<[1], [0], [0], [1], [0, 0, 1, 1], [], []>} : vector<8x128xbf16>, vector<128x128xbf16>, vector<8x128xf32> -> vector<8x128xf32>
    %c7_133 = arith.constant 7 : index
    %c0_134 = arith.constant 0 : index
    %c0_135 = arith.constant 0 : index
    %222 = vector.load %arg15[%c7_133, %c0_134, %c0_135] : memref<8x1x128xf32, #tpu.memory_space<vmem>>, vector<1x1x128xf32>
    %223 = vector.shape_cast %222 : vector<1x1x128xf32> to vector<1x128xf32>
    %224 = vector.broadcast %223 : vector<1x128xf32> to vector<8x128xf32>
    %225 = arith.addf %221, %224 : vector<8x128xf32>
    %cst_136 = arith.constant 0.000000e+00 : f32
    %226 = vector.broadcast %cst_136 : f32 to vector<8x128xf32>
    %227 = arith.maximumf %225, %226 : vector<8x128xf32>
    %228 = tpu.concatenate %164, %173, %182, %191, %200, %209, %218, %227 in 0 : vector<8x128xf32>, vector<8x128xf32>, vector<8x128xf32>, vector<8x128xf32>, vector<8x128xf32>, vector<8x128xf32>, vector<8x128xf32>, vector<8x128xf32> -> vector<64x128xf32>
    %cst_137 = arith.constant 0.000000e+00 : f32
    %229 = vector.broadcast %cst_137 : f32 to vector<8x128xf32>
    %230 = vector.extract_strided_slice %228 {offsets = [0, 0], sizes = [56, 128], strides = [1, 1]} : vector<64x128xf32> to vector<56x128xf32>
    %231 = tpu.concatenate %229, %230 in 0 : vector<8x128xf32>, vector<56x128xf32> -> vector<64x128xf32>
    %cst_138 = arith.constant 0.000000e+00 : f32
    %232 = vector.broadcast %cst_138 : f32 to vector<8x128xf32>
    %233 = vector.extract_strided_slice %228 {offsets = [8, 0], sizes = [56, 128], strides = [1, 1]} : vector<64x128xf32> to vector<56x128xf32>
    %234 = tpu.concatenate %233, %232 in 0 : vector<56x128xf32>, vector<8x128xf32> -> vector<64x128xf32>
    %235 = tpu.concatenate %231, %228, %234 in 1 : vector<64x128xf32>, vector<64x128xf32>, vector<64x128xf32> -> vector<64x384xf32>
    %236 = arith.truncf %235 : vector<64x384xf32> to vector<64x384xbf16>
    %c0_139 = arith.constant 0 : index
    %c0_140 = arith.constant 0 : index
    %237 = vector.load %arg16[%c0_139, %c0_140] : memref<384x128xbf16, #tpu.memory_space<vmem>>, vector<384x128xbf16>
    %cst_141 = arith.constant dense<0.000000e+00> : vector<64x128xf32>
    %238 = tpu.matmul %236, %237, %cst_141 {dimension_numbers = #tpu.dot_dimension_numbers<[1], [0], [0], [1], [0, 0, 1, 1], [], []>} : vector<64x384xbf16>, vector<384x128xbf16>, vector<64x128xf32> -> vector<64x128xf32>
    %c0_142 = arith.constant 0 : index
    %c0_143 = arith.constant 0 : index
    %239 = vector.load %arg17[%c0_142, %c0_143] : memref<1x128xf32, #tpu.memory_space<vmem>>, vector<1x128xf32>
    %240 = vector.broadcast %239 : vector<1x128xf32> to vector<64x128xf32>
    %241 = arith.addf %238, %240 : vector<64x128xf32>
    %242 = vector.broadcast %0 : vector<64x1xf32> to vector<64x128xf32>
    %243 = arith.mulf %241, %242 : vector<64x128xf32>
    %cst_144 = arith.constant dense<0.000000e+00> : vector<128xf32>
    %244 = vector.multi_reduction <add>, %243, %cst_144 [0] : vector<64x128xf32> to vector<128xf32>
    %245 = vector.shape_cast %244 : vector<128xf32> to vector<1x128xf32>
    %246 = arith.mulf %243, %241 : vector<64x128xf32>
    %cst_145 = arith.constant dense<0.000000e+00> : vector<128xf32>
    %247 = vector.multi_reduction <add>, %246, %cst_145 [0] : vector<64x128xf32> to vector<128xf32>
    %248 = vector.shape_cast %247 : vector<128xf32> to vector<1x128xf32>
    %cst_146 = arith.constant 6.250000e-02 : f32
    %249 = vector.broadcast %cst_146 : f32 to vector<1x128xf32>
    %250 = arith.mulf %245, %249 : vector<1x128xf32>
    %cst_147 = arith.constant 6.250000e-02 : f32
    %251 = vector.broadcast %cst_147 : f32 to vector<1x128xf32>
    %252 = arith.mulf %248, %251 : vector<1x128xf32>
    %253 = arith.mulf %250, %250 : vector<1x128xf32>
    %254 = arith.subf %252, %253 : vector<1x128xf32>
    %cst_148 = arith.constant 0.000000e+00 : f32
    %255 = vector.broadcast %cst_148 : f32 to vector<1x128xf32>
    %256 = arith.maximumf %254, %255 : vector<1x128xf32>
    %257 = vector.broadcast %250 : vector<1x128xf32> to vector<64x128xf32>
    %258 = arith.subf %241, %257 : vector<64x128xf32>
    %cst_149 = arith.constant 9.99999974E-6 : f32
    %259 = vector.broadcast %cst_149 : f32 to vector<1x128xf32>
    %260 = arith.addf %256, %259 : vector<1x128xf32>
    %261 = math.rsqrt %260 : vector<1x128xf32>
    %262 = vector.broadcast %261 : vector<1x128xf32> to vector<64x128xf32>
    %263 = arith.mulf %258, %262 : vector<64x128xf32>
    %c0_150 = arith.constant 0 : index
    %c0_151 = arith.constant 0 : index
    %264 = vector.load %arg18[%c0_150, %c0_151] : memref<1x128xf32, #tpu.memory_space<vmem>>, vector<1x128xf32>
    %265 = vector.broadcast %264 : vector<1x128xf32> to vector<64x128xf32>
    %266 = arith.mulf %263, %265 : vector<64x128xf32>
    %c0_152 = arith.constant 0 : index
    %c0_153 = arith.constant 0 : index
    %267 = vector.load %arg19[%c0_152, %c0_153] : memref<1x128xf32, #tpu.memory_space<vmem>>, vector<1x128xf32>
    %268 = vector.broadcast %267 : vector<1x128xf32> to vector<64x128xf32>
    %269 = arith.addf %266, %268 : vector<64x128xf32>
    %cst_154 = arith.constant 0.000000e+00 : f32
    %270 = vector.broadcast %cst_154 : f32 to vector<64x128xf32>
    %271 = arith.maximumf %269, %270 : vector<64x128xf32>
    %cst_155 = arith.constant 0.000000e+00 : f32
    %272 = vector.broadcast %cst_155 : f32 to vector<8x128xf32>
    %273 = vector.extract_strided_slice %271 {offsets = [0, 0], sizes = [56, 128], strides = [1, 1]} : vector<64x128xf32> to vector<56x128xf32>
    %274 = tpu.concatenate %272, %273 in 0 : vector<8x128xf32>, vector<56x128xf32> -> vector<64x128xf32>
    %cst_156 = arith.constant 0.000000e+00 : f32
    %275 = vector.broadcast %cst_156 : f32 to vector<8x128xf32>
    %276 = vector.extract_strided_slice %271 {offsets = [8, 0], sizes = [56, 128], strides = [1, 1]} : vector<64x128xf32> to vector<56x128xf32>
    %277 = tpu.concatenate %276, %275 in 0 : vector<56x128xf32>, vector<8x128xf32> -> vector<64x128xf32>
    %278 = tpu.concatenate %274, %271, %277 in 1 : vector<64x128xf32>, vector<64x128xf32>, vector<64x128xf32> -> vector<64x384xf32>
    %279 = arith.truncf %278 : vector<64x384xf32> to vector<64x384xbf16>
    %c0_157 = arith.constant 0 : index
    %c0_158 = arith.constant 0 : index
    %280 = vector.load %arg20[%c0_157, %c0_158] : memref<384x128xbf16, #tpu.memory_space<vmem>>, vector<384x128xbf16>
    %cst_159 = arith.constant dense<0.000000e+00> : vector<64x128xf32>
    %281 = tpu.matmul %279, %280, %cst_159 {dimension_numbers = #tpu.dot_dimension_numbers<[1], [0], [0], [1], [0, 0, 1, 1], [], []>} : vector<64x384xbf16>, vector<384x128xbf16>, vector<64x128xf32> -> vector<64x128xf32>
    %c0_160 = arith.constant 0 : index
    %c0_161 = arith.constant 0 : index
    %282 = vector.load %arg21[%c0_160, %c0_161] : memref<1x128xf32, #tpu.memory_space<vmem>>, vector<1x128xf32>
    %283 = vector.broadcast %282 : vector<1x128xf32> to vector<64x128xf32>
    %284 = arith.addf %281, %283 : vector<64x128xf32>
    %285 = vector.broadcast %0 : vector<64x1xf32> to vector<64x128xf32>
    %286 = arith.mulf %284, %285 : vector<64x128xf32>
    %cst_162 = arith.constant dense<0.000000e+00> : vector<128xf32>
    %287 = vector.multi_reduction <add>, %286, %cst_162 [0] : vector<64x128xf32> to vector<128xf32>
    %288 = vector.shape_cast %287 : vector<128xf32> to vector<1x128xf32>
    %289 = arith.mulf %286, %284 : vector<64x128xf32>
    %cst_163 = arith.constant dense<0.000000e+00> : vector<128xf32>
    %290 = vector.multi_reduction <add>, %289, %cst_163 [0] : vector<64x128xf32> to vector<128xf32>
    %291 = vector.shape_cast %290 : vector<128xf32> to vector<1x128xf32>
    %cst_164 = arith.constant 6.250000e-02 : f32
    %292 = vector.broadcast %cst_164 : f32 to vector<1x128xf32>
    %293 = arith.mulf %288, %292 : vector<1x128xf32>
    %cst_165 = arith.constant 6.250000e-02 : f32
    %294 = vector.broadcast %cst_165 : f32 to vector<1x128xf32>
    %295 = arith.mulf %291, %294 : vector<1x128xf32>
    %296 = arith.mulf %293, %293 : vector<1x128xf32>
    %297 = arith.subf %295, %296 : vector<1x128xf32>
    %cst_166 = arith.constant 0.000000e+00 : f32
    %298 = vector.broadcast %cst_166 : f32 to vector<1x128xf32>
    %299 = arith.maximumf %297, %298 : vector<1x128xf32>
    %300 = vector.broadcast %293 : vector<1x128xf32> to vector<64x128xf32>
    %301 = arith.subf %284, %300 : vector<64x128xf32>
    %cst_167 = arith.constant 9.99999974E-6 : f32
    %302 = vector.broadcast %cst_167 : f32 to vector<1x128xf32>
    %303 = arith.addf %299, %302 : vector<1x128xf32>
    %304 = math.rsqrt %303 : vector<1x128xf32>
    %305 = vector.broadcast %304 : vector<1x128xf32> to vector<64x128xf32>
    %306 = arith.mulf %301, %305 : vector<64x128xf32>
    %c0_168 = arith.constant 0 : index
    %c0_169 = arith.constant 0 : index
    %307 = vector.load %arg22[%c0_168, %c0_169] : memref<1x128xf32, #tpu.memory_space<vmem>>, vector<1x128xf32>
    %308 = vector.broadcast %307 : vector<1x128xf32> to vector<64x128xf32>
    %309 = arith.mulf %306, %308 : vector<64x128xf32>
    %c0_170 = arith.constant 0 : index
    %c0_171 = arith.constant 0 : index
    %310 = vector.load %arg23[%c0_170, %c0_171] : memref<1x128xf32, #tpu.memory_space<vmem>>, vector<1x128xf32>
    %311 = vector.broadcast %310 : vector<1x128xf32> to vector<64x128xf32>
    %312 = arith.addf %309, %311 : vector<64x128xf32>
    %cst_172 = arith.constant 0.000000e+00 : f32
    %313 = vector.broadcast %cst_172 : f32 to vector<64x128xf32>
    %314 = arith.maximumf %312, %313 : vector<64x128xf32>
    %315 = arith.truncf %314 : vector<64x128xf32> to vector<64x128xbf16>
    %c0_173 = arith.constant 0 : index
    %c0_174 = arith.constant 0 : index
    %316 = vector.load %arg24[%c0_173, %c0_174] : memref<128x128xbf16, #tpu.memory_space<vmem>>, vector<128x128xbf16>
    %cst_175 = arith.constant dense<0.000000e+00> : vector<64x128xf32>
    %317 = tpu.matmul %315, %316, %cst_175 {dimension_numbers = #tpu.dot_dimension_numbers<[1], [0], [0], [1], [0, 0, 1, 1], [], []>} : vector<64x128xbf16>, vector<128x128xbf16>, vector<64x128xf32> -> vector<64x128xf32>
    %c0_176 = arith.constant 0 : index
    %c0_177 = arith.constant 0 : index
    %318 = vector.load %arg25[%c0_176, %c0_177] : memref<1x128xf32, #tpu.memory_space<vmem>>, vector<1x128xf32>
    %319 = vector.broadcast %318 : vector<1x128xf32> to vector<64x128xf32>
    %320 = arith.addf %317, %319 : vector<64x128xf32>
    %c0_178 = arith.constant 0 : index
    %c0_179 = arith.constant 0 : index
    %321 = vector.load %arg26[%c0_178, %c0_179] : memref<64x128xf32, #tpu.memory_space<vmem>>, vector<64x128xf32>
    tpu.vector_store %arg26[%c0_178, %c0_179], %320 {strides = array<i32>} : memref<64x128xf32, #tpu.memory_space<vmem>>, vector<64x128xf32>,
    return
  }
}

</mosaic_0001>

<llo_original>
// kernel: tpu_custom_call.1
$region0: #{tpu_custom_call.1}
  #allocation0 [shape = 'u32[]', space=smem, size = 0x4, offset = 0x4, fixed_abs, tag = 'smem constant byte address 0x4 - core index']
  #allocation1 [shape = 'u32[144,128]{1,0:T(1,128)}', space=vmem, size = 0x12000, scoped, tag = 'internal scratch']
  %s0 = inlined_call_operand.vmem [shape: s32[64,1], index: 0, kind: input, shape index: {}]
  %s1 = inlined_call_operand.vmem [shape: s32[64,1], index: 1, kind: input, shape index: {}]
  %s2 = inlined_call_operand.vmem [shape: s32[64,1], index: 2, kind: input, shape index: {}]
  %s3 = inlined_call_operand.vmem [shape: f32[64,1], index: 3, kind: input, shape index: {}]
  %s4 = inlined_call_operand.vmem [shape: bf16[384,128], index: 4, kind: input, shape index: {}]
  %s5 = inlined_call_operand.vmem [shape: f32[1,128], index: 5, kind: input, shape index: {}]
  %s6 = inlined_call_operand.vmem [shape: f32[1,128], index: 6, kind: input, shape index: {}]
  %s7 = inlined_call_operand.vmem [shape: f32[1,128], index: 7, kind: input, shape index: {}]
  %s8 = inlined_call_operand.hbm [shape: bf16[384,128], index: 8, kind: input, shape index: {}]
  %s9 = inlined_call_operand.vmem [shape: f32[1,128], index: 9, kind: input, shape index: {}]
  %s10 = inlined_call_operand.vmem [shape: f32[1,128], index: 10, kind: input, shape index: {}]
  %s11 = inlined_call_operand.vmem [shape: f32[1,128], index: 11, kind: input, shape index: {}]
  %s12 = inlined_call_operand.hbm [shape: bf16[8,128,128], index: 12, kind: input, shape index: {}]
  %s13 = inlined_call_operand.vmem [shape: f32[1,128], index: 13, kind: input, shape index: {}]
  %s14 = inlined_call_operand.hbm [shape: bf16[8,128,128], index: 14, kind: input, shape index: {}]
  %s15 = inlined_call_operand.vmem [shape: f32[8,1,128], index: 15, kind: input, shape index: {}]
  %s16 = inlined_call_operand.hbm [shape: bf16[384,128], index: 16, kind: input, shape index: {}]
  %s17 = inlined_call_operand.vmem [shape: f32[1,128], index: 17, kind: input, shape index: {}]
  %s18 = inlined_call_operand.vmem [shape: f32[1,128], index: 18, kind: input, shape index: {}]
  %s19 = inlined_call_operand.vmem [shape: f32[1,128], index: 19, kind: input, shape index: {}]
  %s20 = inlined_call_operand.hbm [shape: bf16[384,128], index: 20, kind: input, shape index: {}]
  %s21 = inlined_call_operand.vmem [shape: f32[1,128], index: 21, kind: input, shape index: {}]
  %s22 = inlined_call_operand.vmem [shape: f32[1,128], index: 22, kind: input, shape index: {}]
  %s23 = inlined_call_operand.vmem [shape: f32[1,128], index: 23, kind: input, shape index: {}]
  %s24 = inlined_call_operand.vmem [shape: bf16[128,128], index: 24, kind: input, shape index: {}]
  %s25 = inlined_call_operand.vmem [shape: f32[1,128], index: 25, kind: input, shape index: {}]
  %s26 = inlined_call_operand.hbm [shape: f32[64,128], index: 26, kind: output, shape index: {0}]
  %s27 = inlined_call_operand.hbm [shape: f32[64,128], index: 27, kind: output, shape index: {1}]
  %s28 = inlined_call_operand.hbm [shape: f32[8,128], index: 28, kind: output, shape index: {2}]
  %29 = xla_tuple %s26, %s27, %s28
  %s30 = sld [smem:[#allocation0]]
  $region150: #{tpu_custom_call.1} parent=0
    _
  %s32 = ssub.s32 1, %s30
  %s33 = scalar_select 0, %s32, %s30
  $region1: #{tpu_custom_call.1} parent=0
    #allocation2 [shape = 'u8[98304]{0}', space=vmem, size = 0x18000, scoped, tag = 'input window, operand 8, single buffered']
    #allocation3 [shape = 's32[1]{0}', space=sflag, size = 0x4, scoped, tag = 'scoped memory for tpu_custom_call.1']
    #allocation4 [shape = 's32[1]{0}', space=sflag, size = 0x4, scoped, tag = 'scoped memory for tpu_custom_call.1']
    #allocation5 [shape = 'u8[262144]{0}', space=vmem, size = 0x40000, scoped, tag = 'input window, operand 12, single buffered']
    #allocation6 [shape = 's32[1]{0}', space=sflag, size = 0x4, scoped, tag = 'scoped memory for tpu_custom_call.1']
    #allocation7 [shape = 'u8[262144]{0}', space=vmem, size = 0x40000, scoped, tag = 'input window, operand 14, single buffered']
    #allocation8 [shape = 'u8[98304]{0}', space=vmem, size = 0x18000, scoped, tag = 'input window, operand 16, single buffered']
    #allocation9 [shape = 's32[1]{0}', space=sflag, size = 0x4, scoped, tag = 'scoped memory for tpu_custom_call.1']
    #allocation10 [shape = 'u8[98304]{0}', space=vmem, size = 0x18000, scoped, tag = 'input window, operand 20, single buffered']
    #allocation11 [shape = 'u8[32768]{0}', space=vmem, size = 0x8000, scoped, tag = 'output window, operand 0, single buffered']
    #allocation12 [shape = 'u8[32768]{0}', space=vmem, size = 0x8000, scoped, tag = 'output window, operand 1, single buffered']
    #allocation13 [shape = 's32[1]{0}', space=sflag, size = 0x4, scoped, tag = 'scoped memory for tpu_custom_call.1']
    #allocation14 [shape = 'u8[4096]{0}', space=vmem, size = 0x1000, scoped, tag = 'output window, operand 2, single buffered']
    %34 = vsyncpa [#allocation3], 0
    %35 = vsyncpa [#allocation6], 0
    %36 = vsyncpa [#allocation9], 0
    %37 = vsyncpa [#allocation4], 0
    %38 = vsyncpa [#allocation13], 0
    // Predicated region
    $region2: #{tpu_custom_call.1} parent=1 // pred_check
      _
    $region3: #{tpu_custom_call.1} parent=1 // pred_check_branch
      %40 = sbr.rel (0) target = $region5
    $region4: #{tpu_custom_call.1} parent=1 // pred_region
      _
    $region5: #{tpu_custom_call.1} parent=1 // pred_fallthru
      _
    // Predicated region
    $region6: #{tpu_custom_call.1} parent=1 // pred_check
      _
    $region7: #{tpu_custom_call.1} parent=1 // pred_check_branch
      %42 = sbr.rel (0) target = $region9
    $region8: #{tpu_custom_call.1} parent=1 // pred_region
      _
    $region9: #{tpu_custom_call.1} parent=1 // pred_fallthru
      _
    // Predicated region
    $region10: #{tpu_custom_call.1} parent=1 // pred_check
      _
    $region11: #{tpu_custom_call.1} parent=1 // pred_check_branch
      %44 = sbr.rel (0) target = $region13
    $region12: #{tpu_custom_call.1} parent=1 // pred_region
      _
    $region13: #{tpu_custom_call.1} parent=1 // pred_fallthru
      _
    // Predicated region
    $region14: #{tpu_custom_call.1} parent=1 // pred_check
      _
    $region15: #{tpu_custom_call.1} parent=1 // pred_check_branch
      %46 = sbr.rel (0) target = $region17
    $region16: #{tpu_custom_call.1} parent=1 // pred_region
      _
    $region17: #{tpu_custom_call.1} parent=1 // pred_fallthru
      _
    // Predicated region
    $region18: #{tpu_custom_call.1} parent=1 // pred_check
      _
    $region19: #{tpu_custom_call.1} parent=1 // pred_check_branch
      %48 = sbr.rel (0) target = $region21
    $region20: #{tpu_custom_call.1} parent=1 // pred_region
      _
    $region21: #{tpu_custom_call.1} parent=1 // pred_fallthru
      _
    // Predicated region
    $region22: #{tpu_custom_call.1} parent=1 // pred_check
      _
    $region23: #{tpu_custom_call.1} parent=1 // pred_check_branch
      %50 = sbr.rel (0) target = $region25
    $region24: #{tpu_custom_call.1} parent=1 // pred_region
      _
    $region25: #{tpu_custom_call.1} parent=1 // pred_fallthru
      _
    // Predicated region
    $region26: #{tpu_custom_call.1} parent=1 // pred_check
      _
    $region27: #{tpu_custom_call.1} parent=1 // pred_check_branch
      %52 = sbr.rel (0) target = $region29
    $region28: #{tpu_custom_call.1} parent=1 // pred_region
      _
    $region29: #{tpu_custom_call.1} parent=1 // pred_fallthru
      _
    // Predicated region
    $region30: #{tpu_custom_call.1} parent=1 // pred_check
      _
    $region31: #{tpu_custom_call.1} parent=1 // pred_check_branch
      %54 = sbr.rel (0) target = $region33
    $region32: #{tpu_custom_call.1} parent=1 // pred_region
      _
    $region33: #{tpu_custom_call.1} parent=1 // pred_fallthru
      _
    // Predicated region
    $region34: #{tpu_custom_call.1} parent=1 // pred_check
      _
    $region35: #{tpu_custom_call.1} parent=1 // pred_check_branch
      %56 = sbr.rel (0) target = $region37
    $region36: #{tpu_custom_call.1} parent=1 // pred_region
      %s58 = ssub.s32 3072, 3072
      %59 = vsyncadd [#allocation3], %s58
      %s60 = sshll.u32 [#allocation2], 4
      %s61 = int_to_ptr.vmem [resolvable:$true] %s60
      %66 = dma.hbm_to_vmem [thread:$0]  %s8, 3072, %s61, [#allocation3], 64, 64, 4
    $region37: #{tpu_custom_call.1} parent=1 // pred_fallthru
      _
    // Predicated region
    $region38: #{tpu_custom_call.1} parent=1 // pred_check
      _
    $region39: #{tpu_custom_call.1} parent=1 // pred_check_branch
      %68 = sbr.rel (0) target = $region41
    $region40: #{tpu_custom_call.1} parent=1 // pred_region
      _
    $region41: #{tpu_custom_call.1} parent=1 // pred_fallthru
      _
    // Predicated region
    $region42: #{tpu_custom_call.1} parent=1 // pred_check
      _
    $region43: #{tpu_custom_call.1} parent=1 // pred_check_branch
      %70 = sbr.rel (0) target = $region45
    $region44: #{tpu_custom_call.1} parent=1 // pred_region
      _
    $region45: #{tpu_custom_call.1} parent=1 // pred_fallthru
      _
    // Predicated region
    $region46: #{tpu_custom_call.1} parent=1 // pred_check
      _
    $region47: #{tpu_custom_call.1} parent=1 // pred_check_branch
      %72 = sbr.rel (0) target = $region49
    $region48: #{tpu_custom_call.1} parent=1 // pred_region
      _
    $region49: #{tpu_custom_call.1} parent=1 // pred_fallthru
      _
    // Predicated region
    $region50: #{tpu_custom_call.1} parent=1 // pred_check
      _
    $region51: #{tpu_custom_call.1} parent=1 // pred_check_branch
      %74 = sbr.rel (0) target = $region53
    $region52: #{tpu_custom_call.1} parent=1 // pred_region
      %s76 = ssub.s32 8192, 8192
      %77 = vsyncadd [#allocation6], %s76
      %s78 = sshll.u32 [#allocation5], 4
      %s79 = int_to_ptr.vmem [resolvable:$true] %s78
      %84 = dma.hbm_to_vmem [thread:$0]  %s12, 8192, %s79, [#allocation6], 64, 64, 4
    $region53: #{tpu_custom_call.1} parent=1 // pred_fallthru
      _
    // Predicated region
    $region54: #{tpu_custom_call.1} parent=1 // pred_check
      _
    $region55: #{tpu_custom_call.1} parent=1 // pred_check_branch
      %86 = sbr.rel (0) target = $region57
    $region56: #{tpu_custom_call.1} parent=1 // pred_region
      _
    $region57: #{tpu_custom_call.1} parent=1 // pred_fallthru
      _
    // Predicated region
    $region58: #{tpu_custom_call.1} parent=1 // pred_check
      _
    $region59: #{tpu_custom_call.1} parent=1 // pred_check_branch
      %88 = sbr.rel (0) target = $region61
    $region60: #{tpu_custom_call.1} parent=1 // pred_region
      %s90 = ssub.s32 8192, 8192
      %91 = vsyncadd [#allocation6], %s90
      %s92 = sshll.u32 [#allocation7], 4
      %s93 = int_to_ptr.vmem [resolvable:$true] %s92
      %98 = dma.hbm_to_vmem [thread:$0]  %s14, 8192, %s93, [#allocation6], 64, 64, 4
    $region61: #{tpu_custom_call.1} parent=1 // pred_fallthru
      _
    // Predicated region
    $region62: #{tpu_custom_call.1} parent=1 // pred_check
      _
    $region63: #{tpu_custom_call.1} parent=1 // pred_check_branch
      %100 = sbr.rel (0) target = $region65
    $region64: #{tpu_custom_call.1} parent=1 // pred_region
      _
    $region65: #{tpu_custom_call.1} parent=1 // pred_fallthru
      _
    // Predicated region
    $region66: #{tpu_custom_call.1} parent=1 // pred_check
      _
    $region67: #{tpu_custom_call.1} parent=1 // pred_check_branch
      %102 = sbr.rel (0) target = $region69
    $region68: #{tpu_custom_call.1} parent=1 // pred_region
      %s104 = ssub.s32 3072, 3072
      %105 = vsyncadd [#allocation9], %s104
      %s106 = sshll.u32 [#allocation8], 4
      %s107 = int_to_ptr.vmem [resolvable:$true] %s106
      %112 = dma.hbm_to_vmem [thread:$0]  %s16, 3072, %s107, [#allocation9], 64, 64, 4
    $region69: #{tpu_custom_call.1} parent=1 // pred_fallthru
      _
    // Predicated region
    $region70: #{tpu_custom_call.1} parent=1 // pred_check
      _
    $region71: #{tpu_custom_call.1} parent=1 // pred_check_branch
      %114 = sbr.rel (0) target = $region73
    $region72: #{tpu_custom_call.1} parent=1 // pred_region
      _
    $region73: #{tpu_custom_call.1} parent=1 // pred_fallthru
      _
    // Predicated region
    $region74: #{tpu_custom_call.1} parent=1 // pred_check
      _
    $region75: #{tpu_custom_call.1} parent=1 // pred_check_branch
      %116 = sbr.rel (0) target = $region77
    $region76: #{tpu_custom_call.1} parent=1 // pred_region
      _
    $region77: #{tpu_custom_call.1} parent=1 // pred_fallthru
      _
    // Predicated region
    $region78: #{tpu_custom_call.1} parent=1 // pred_check
      _
    $region79: #{tpu_custom_call.1} parent=1 // pred_check_branch
      %118 = sbr.rel (0) target = $region81
    $region80: #{tpu_custom_call.1} parent=1 // pred_region
      _
    $region81: #{tpu_custom_call.1} parent=1 // pred_fallthru
      _
    // Predicated region
    $region82: #{tpu_custom_call.1} parent=1 // pred_check
      _
    $region83: #{tpu_custom_call.1} parent=1 // pred_check_branch
      %120 = sbr.rel (0) target = $region85
    $region84: #{tpu_custom_call.1} parent=1 // pred_region
      %s122 = ssub.s32 3072, 3072
      %123 = vsyncadd [#allocation9], %s122
      %s124 = sshll.u32 [#allocation10], 4
      %s125 = int_to_ptr.vmem [resolvable:$true] %s124
      %130 = dma.hbm_to_vmem [thread:$0]  %s20, 3072, %s125, [#allocation9], 64, 64, 4
    $region85: #{tpu_custom_call.1} parent=1 // pred_fallthru
      _
    // Predicated region
    $region86: #{tpu_custom_call.1} parent=1 // pred_check
      _
    $region87: #{tpu_custom_call.1} parent=1 // pred_check_branch
      %132 = sbr.rel (0) target = $region89
    $region88: #{tpu_custom_call.1} parent=1 // pred_region
      _
    $region89: #{tpu_custom_call.1} parent=1 // pred_fallthru
      _
    // Predicated region
    $region90: #{tpu_custom_call.1} parent=1 // pred_check
      _
    $region91: #{tpu_custom_call.1} parent=1 // pred_check_branch
      %134 = sbr.rel (0) target = $region93
    $region92: #{tpu_custom_call.1} parent=1 // pred_region
      _
    $region93: #{tpu_custom_call.1} parent=1 // pred_fallthru
      _
    // Predicated region
    $region94: #{tpu_custom_call.1} parent=1 // pred_check
      _
    $region95: #{tpu_custom_call.1} parent=1 // pred_check_branch
      %136 = sbr.rel (0) target = $region97
    $region96: #{tpu_custom_call.1} parent=1 // pred_region
      _
    $region97: #{tpu_custom_call.1} parent=1 // pred_fallthru
      _
    // Predicated region
    $region98: #{tpu_custom_call.1} parent=1 // pred_check
      _
    $region99: #{tpu_custom_call.1} parent=1 // pred_check_branch
      %138 = sbr.rel (0) target = $region101
    $region100: #{tpu_custom_call.1} parent=1 // pred_region
      _
    $region101: #{tpu_custom_call.1} parent=1 // pred_fallthru
      _
    // Predicated region
    $region102: #{tpu_custom_call.1} parent=1 // pred_check
      _
    $region103: #{tpu_custom_call.1} parent=1 // pred_check_branch
      %140 = sbr.rel (0) target = $region105
    $region104: #{tpu_custom_call.1} parent=1 // pred_region
      _
    $region105: #{tpu_custom_call.1} parent=1 // pred_fallthru
      _
    // Predicated region
    $region106: #{tpu_custom_call.1} parent=1 // pred_check
      _
    $region107: #{tpu_custom_call.1} parent=1 // pred_check_branch
      %142 = sbr.rel (0) target = $region109
    $region108: #{tpu_custom_call.1} parent=1 // pred_region
      %143 = dma.done [#allocation3], 3072
    $region109: #{tpu_custom_call.1} parent=1 // pred_fallthru
      _
    // Predicated region
    $region110: #{tpu_custom_call.1} parent=1 // pred_check
      _
    $region111: #{tpu_custom_call.1} parent=1 // pred_check_branch
      %145 = sbr.rel (0) target = $region113
    $region112: #{tpu_custom_call.1} parent=1 // pred_region
      %146 = dma.done [#allocation6], 8192
    $region113: #{tpu_custom_call.1} parent=1 // pred_fallthru
      _
    // Predicated region
    $region114: #{tpu_custom_call.1} parent=1 // pred_check
      _
    $region115: #{tpu_custom_call.1} parent=1 // pred_check_branch
      %148 = sbr.rel (0) target = $region117
    $region116: #{tpu_custom_call.1} parent=1 // pred_region
      %149 = dma.done [#allocation6], 8192
    $region117: #{tpu_custom_call.1} parent=1 // pred_fallthru
      _
    // Predicated region
    $region118: #{tpu_custom_call.1} parent=1 // pred_check
      _
    $region119: #{tpu_custom_call.1} parent=1 // pred_check_branch
      %151 = sbr.rel (0) target = $region121
    $region120: #{tpu_custom_call.1} parent=1 // pred_region
      %152 = dma.done [#allocation9], 3072
    $region121: #{tpu_custom_call.1} parent=1 // pred_fallthru
      _
    // Predicated region
    $region122: #{tpu_custom_call.1} parent=1 // pred_check
      _
    $region123: #{tpu_custom_call.1} parent=1 // pred_check_branch
      %154 = sbr.rel (0) target = $region125
    $region124: #{tpu_custom_call.1} parent=1 // pred_region
      %155 = dma.done [#allocation9], 3072
    $region125: #{tpu_custom_call.1} parent=1 // pred_fallthru
      _
    %v157 = vld [vmem:[%s3] sm:$0xff]
    %v158 = vld [vmem:[%s3 + $0x8] sm:$0xff]
    %v159 = vld [vmem:[%s3 + $0x10] sm:$0xff]
    %v160 = vld [vmem:[%s3 + $0x18] sm:$0xff]
    %v161 = vld [vmem:[%s3 + $0x20] sm:$0xff]
    %v162 = vld [vmem:[%s3 + $0x28] sm:$0xff]
    %v163 = vld [vmem:[%s3 + $0x30] sm:$0xff]
    %v164 = vld [vmem:[%s3 + $0x38] sm:$0xff]
    %v165 = vld [vmem:[%s0] sm:$0xff]
    %v166 = vld [vmem:[%s0 + $0x8] sm:$0xff]
    %v167 = vld [vmem:[%s0 + $0x10] sm:$0xff]
    %v168 = vld [vmem:[%s0 + $0x18] sm:$0xff]
    %v169 = vld [vmem:[%s0 + $0x20] sm:$0xff]
    %v170 = vld [vmem:[%s0 + $0x28] sm:$0xff]
    %v171 = vld [vmem:[%s0 + $0x30] sm:$0xff]
    %v172 = vld [vmem:[%s0 + $0x38] sm:$0xff]
    %v173 = vlaneseq
    %v174 = vand.u32 %v173, 127
    %175 = vset.pattern.permute.xlu0 0
    %176 = vperm.xlu0 %175, %v165
    %v177 = vpop.permute.xlu0 %176
    %178 = vset.pattern.permute.xlu0 0
    %179 = vperm.xlu0 %178, %v166
    %v180 = vpop.permute.xlu0 %179
    %181 = vset.pattern.permute.xlu0 0
    %182 = vperm.xlu0 %181, %v167
    %v183 = vpop.permute.xlu0 %182
    %184 = vset.pattern.permute.xlu0 0
    %185 = vperm.xlu0 %184, %v168
    %v186 = vpop.permute.xlu0 %185
    %187 = vset.pattern.permute.xlu0 0
    %188 = vperm.xlu0 %187, %v169
    %v189 = vpop.permute.xlu0 %188
    %190 = vset.pattern.permute.xlu0 0
    %191 = vperm.xlu0 %190, %v170
    %v192 = vpop.permute.xlu0 %191
    %193 = vset.pattern.permute.xlu0 0
    %194 = vperm.xlu0 %193, %v171
    %v195 = vpop.permute.xlu0 %194
    %196 = vset.pattern.permute.xlu0 0
    %197 = vperm.xlu0 %196, %v172
    %v198 = vpop.permute.xlu0 %197
    %vm199 = vcmp.eq.s32.totalorder %v174, %v177
    %vm200 = vcmp.eq.s32.totalorder %v174, %v180
    %vm201 = vcmp.eq.s32.totalorder %v174, %v183
    %vm202 = vcmp.eq.s32.totalorder %v174, %v186
    %vm203 = vcmp.eq.s32.totalorder %v174, %v189
    %vm204 = vcmp.eq.s32.totalorder %v174, %v192
    %vm205 = vcmp.eq.s32.totalorder %v174, %v195
    %vm206 = vcmp.eq.s32.totalorder %v174, %v198
    %v207 = vsel %vm199, 1, 0
    %v208 = vsel %vm200, 1, 0
    %v209 = vsel %vm201, 1, 0
    %v210 = vsel %vm202, 1, 0
    %v211 = vsel %vm203, 1, 0
    %v212 = vsel %vm204, 1, 0
    %v213 = vsel %vm205, 1, 0
    %v214 = vsel %vm206, 1, 0
    %v215 = vcvt.s32.f32 %v207
    %v216 = vcvt.s32.f32 %v208
    %v217 = vcvt.s32.f32 %v209
    %v218 = vcvt.s32.f32 %v210
    %v219 = vcvt.s32.f32 %v211
    %v220 = vcvt.s32.f32 %v212
    %v221 = vcvt.s32.f32 %v213
    %v222 = vcvt.s32.f32 %v214
    %v223 = vld [vmem:[%s1] sm:$0xff]
    %v224 = vld [vmem:[%s1 + $0x8] sm:$0xff]
    %v225 = vld [vmem:[%s1 + $0x10] sm:$0xff]
    %v226 = vld [vmem:[%s1 + $0x18] sm:$0xff]
    %v227 = vld [vmem:[%s1 + $0x20] sm:$0xff]
    %v228 = vld [vmem:[%s1 + $0x28] sm:$0xff]
    %v229 = vld [vmem:[%s1 + $0x30] sm:$0xff]
    %v230 = vld [vmem:[%s1 + $0x38] sm:$0xff]
    %231 = vset.pattern.permute.xlu0 0
    %232 = vperm.xlu0 %231, %v223
    %v233 = vpop.permute.xlu0 %232
    %234 = vset.pattern.permute.xlu0 0
    %235 = vperm.xlu0 %234, %v224
    %v236 = vpop.permute.xlu0 %235
    %237 = vset.pattern.permute.xlu0 0
    %238 = vperm.xlu0 %237, %v225
    %v239 = vpop.permute.xlu0 %238
    %240 = vset.pattern.permute.xlu0 0
    %241 = vperm.xlu0 %240, %v226
    %v242 = vpop.permute.xlu0 %241
    %243 = vset.pattern.permute.xlu0 0
    %244 = vperm.xlu0 %243, %v227
    %v245 = vpop.permute.xlu0 %244
    %246 = vset.pattern.permute.xlu0 0
    %247 = vperm.xlu0 %246, %v228
    %v248 = vpop.permute.xlu0 %247
    %249 = vset.pattern.permute.xlu0 0
    %250 = vperm.xlu0 %249, %v229
    %v251 = vpop.permute.xlu0 %250
    %252 = vset.pattern.permute.xlu0 0
    %253 = vperm.xlu0 %252, %v230
    %v254 = vpop.permute.xlu0 %253
    %vm255 = vcmp.eq.s32.totalorder %v174, %v233
    %vm256 = vcmp.eq.s32.totalorder %v174, %v236
    %vm257 = vcmp.eq.s32.totalorder %v174, %v239
    %vm258 = vcmp.eq.s32.totalorder %v174, %v242
    %vm259 = vcmp.eq.s32.totalorder %v174, %v245
    %vm260 = vcmp.eq.s32.totalorder %v174, %v248
    %vm261 = vcmp.eq.s32.totalorder %v174, %v251
    %vm262 = vcmp.eq.s32.totalorder %v174, %v254
    %v263 = vsel %vm255, 1, 0
    %v264 = vsel %vm256, 1, 0
    %v265 = vsel %vm257, 1, 0
    %v266 = vsel %vm258, 1, 0
    %v267 = vsel %vm259, 1, 0
    %v268 = vsel %vm260, 1, 0
    %v269 = vsel %vm261, 1, 0
    %v270 = vsel %vm262, 1, 0
    %v271 = vcvt.s32.f32 %v263
    %v272 = vcvt.s32.f32 %v264
    %v273 = vcvt.s32.f32 %v265
    %v274 = vcvt.s32.f32 %v266
    %v275 = vcvt.s32.f32 %v267
    %v276 = vcvt.s32.f32 %v268
    %v277 = vcvt.s32.f32 %v269
    %v278 = vcvt.s32.f32 %v270
    %v279 = vld [vmem:[%s2] sm:$0xff]
    %v280 = vld [vmem:[%s2 + $0x8] sm:$0xff]
    %v281 = vld [vmem:[%s2 + $0x10] sm:$0xff]
    %v282 = vld [vmem:[%s2 + $0x18] sm:$0xff]
    %v283 = vld [vmem:[%s2 + $0x20] sm:$0xff]
    %v284 = vld [vmem:[%s2 + $0x28] sm:$0xff]
    %v285 = vld [vmem:[%s2 + $0x30] sm:$0xff]
    %v286 = vld [vmem:[%s2 + $0x38] sm:$0xff]
    %287 = vset.pattern.permute.xlu0 0
    %288 = vperm.xlu0 %287, %v279
    %v289 = vpop.permute.xlu0 %288
    %290 = vset.pattern.permute.xlu0 0
    %291 = vperm.xlu0 %290, %v280
    %v292 = vpop.permute.xlu0 %291
    %293 = vset.pattern.permute.xlu0 0
    %294 = vperm.xlu0 %293, %v281
    %v295 = vpop.permute.xlu0 %294
    %296 = vset.pattern.permute.xlu0 0
    %297 = vperm.xlu0 %296, %v282
    %v298 = vpop.permute.xlu0 %297
    %299 = vset.pattern.permute.xlu0 0
    %300 = vperm.xlu0 %299, %v283
    %v301 = vpop.permute.xlu0 %300
    %302 = vset.pattern.permute.xlu0 0
    %303 = vperm.xlu0 %302, %v284
    %v304 = vpop.permute.xlu0 %303
    %305 = vset.pattern.permute.xlu0 0
    %306 = vperm.xlu0 %305, %v285
    %v307 = vpop.permute.xlu0 %306
    %308 = vset.pattern.permute.xlu0 0
    %309 = vperm.xlu0 %308, %v286
    %v310 = vpop.permute.xlu0 %309
    %vm311 = vcmp.eq.s32.totalorder %v174, %v289
    %vm312 = vcmp.eq.s32.totalorder %v174, %v292
    %vm313 = vcmp.eq.s32.totalorder %v174, %v295
    %vm314 = vcmp.eq.s32.totalorder %v174, %v298
    %vm315 = vcmp.eq.s32.totalorder %v174, %v301
    %vm316 = vcmp.eq.s32.totalorder %v174, %v304
    %vm317 = vcmp.eq.s32.totalorder %v174, %v307
    %vm318 = vcmp.eq.s32.totalorder %v174, %v310
    %v319 = vsel %vm311, 1, 0
    %v320 = vsel %vm312, 1, 0
    %v321 = vsel %vm313, 1, 0
    %v322 = vsel %vm314, 1, 0
    %v323 = vsel %vm315, 1, 0
    %v324 = vsel %vm316, 1, 0
    %v325 = vsel %vm317, 1, 0
    %v326 = vsel %vm318, 1, 0
    %v327 = vcvt.s32.f32 %v319
    %v328 = vcvt.s32.f32 %v320
    %v329 = vcvt.s32.f32 %v321
    %v330 = vcvt.s32.f32 %v322
    %v331 = vcvt.s32.f32 %v323
    %v332 = vcvt.s32.f32 %v324
    %v333 = vcvt.s32.f32 %v325
    %v334 = vcvt.s32.f32 %v326
    %v335 = vpack.c.bf16 %v216, %v215
    %v336 = vpack.c.bf16 %v272, %v271
    %v337 = vpack.c.bf16 %v328, %v327
    %v338 = vpack.c.bf16 %v218, %v217
    %v339 = vpack.c.bf16 %v274, %v273
    %v340 = vpack.c.bf16 %v330, %v329
    %v341 = vpack.c.bf16 %v220, %v219
    %v342 = vpack.c.bf16 %v276, %v275
    %v343 = vpack.c.bf16 %v332, %v331
    %v344 = vpack.c.bf16 %v222, %v221
    %v345 = vpack.c.bf16 %v278, %v277
    %v346 = vpack.c.bf16 %v334, %v333
    %v347 = vld [vmem:[%s4] sm:$0xf]
    %v348 = vld [vmem:[%s4 + $0x4] sm:$0xf]
    %v349 = vld [vmem:[%s4 + $0x8] sm:$0xf]
    %v350 = vld [vmem:[%s4 + $0xc] sm:$0xf]
    %v351 = vld [vmem:[%s4 + $0x10] sm:$0xf]
    %v352 = vld [vmem:[%s4 + $0x14] sm:$0xf]
    %v353 = vld [vmem:[%s4 + $0x18] sm:$0xf]
    %v354 = vld [vmem:[%s4 + $0x1c] sm:$0xf]
    %v355 = vld [vmem:[%s4 + $0x20] sm:$0xf]
    %v356 = vld [vmem:[%s4 + $0x24] sm:$0xf]
    %v357 = vld [vmem:[%s4 + $0x28] sm:$0xf]
    %v358 = vld [vmem:[%s4 + $0x2c] sm:$0xf]
    %v359 = vld [vmem:[%s4 + $0x30] sm:$0xf]
    %v360 = vld [vmem:[%s4 + $0x34] sm:$0xf]
    %v361 = vld [vmem:[%s4 + $0x38] sm:$0xf]
    %v362 = vld [vmem:[%s4 + $0x3c] sm:$0xf]
    %v363 = vld [vmem:[%s4 + $0x40] sm:$0xf]
    %v364 = vld [vmem:[%s4 + $0x44] sm:$0xf]
    %v365 = vld [vmem:[%s4 + $0x48] sm:$0xf]
    %v366 = vld [vmem:[%s4 + $0x4c] sm:$0xf]
    %v367 = vld [vmem:[%s4 + $0x50] sm:$0xf]
    %v368 = vld [vmem:[%s4 + $0x54] sm:$0xf]
    %v369 = vld [vmem:[%s4 + $0x58] sm:$0xf]
    %v370 = vld [vmem:[%s4 + $0x5c] sm:$0xf]
    %v371 = vld [vmem:[%s4 + $0x60] sm:$0xf]
    %v372 = vld [vmem:[%s4 + $0x64] sm:$0xf]
    %v373 = vld [vmem:[%s4 + $0x68] sm:$0xf]
    %v374 = vld [vmem:[%s4 + $0x6c] sm:$0xf]
    %v375 = vld [vmem:[%s4 + $0x70] sm:$0xf]
    %v376 = vld [vmem:[%s4 + $0x74] sm:$0xf]
    %v377 = vld [vmem:[%s4 + $0x78] sm:$0xf]
    %v378 = vld [vmem:[%s4 + $0x7c] sm:$0xf]
    %v379 = vld [vmem:[%s4 + $0x80] sm:$0xf]
    %v380 = vld [vmem:[%s4 + $0x84] sm:$0xf]
    %v381 = vld [vmem:[%s4 + $0x88] sm:$0xf]
    %v382 = vld [vmem:[%s4 + $0x8c] sm:$0xf]
    %v383 = vld [vmem:[%s4 + $0x90] sm:$0xf]
    %v384 = vld [vmem:[%s4 + $0x94] sm:$0xf]
    %v385 = vld [vmem:[%s4 + $0x98] sm:$0xf]
    %v386 = vld [vmem:[%s4 + $0x9c] sm:$0xf]
    %v387 = vld [vmem:[%s4 + $0xa0] sm:$0xf]
    %v388 = vld [vmem:[%s4 + $0xa4] sm:$0xf]
    %v389 = vld [vmem:[%s4 + $0xa8] sm:$0xf]
    %v390 = vld [vmem:[%s4 + $0xac] sm:$0xf]
    %v391 = vld [vmem:[%s4 + $0xb0] sm:$0xf]
    %v392 = vld [vmem:[%s4 + $0xb4] sm:$0xf]
    %v393 = vld [vmem:[%s4 + $0xb8] sm:$0xf]
    %v394 = vld [vmem:[%s4 + $0xbc] sm:$0xf]
    %v395 = vld [vmem:[%s5] sm:$0x1]
    %v397 = vlaneseq
    %v398 = vshrl.u32 %v397, 7
    %v399 = vsub.s32 0, %v398
    %v400 = vrot.slane %v395, %v399
    %v450 = vunpack.c.l.b16 %v347
    %v451 = vunpack.c.l.b16 %v348
    %v452 = vunpack.c.l.b16 %v349
    %v453 = vunpack.c.l.b16 %v350
    %v454 = vunpack.c.l.b16 %v351
    %v455 = vunpack.c.l.b16 %v352
    %v456 = vunpack.c.l.b16 %v353
    %v457 = vunpack.c.l.b16 %v354
    %v458 = vunpack.c.l.b16 %v355
    %v459 = vunpack.c.l.b16 %v356
    %v460 = vunpack.c.l.b16 %v357
    %v461 = vunpack.c.l.b16 %v358
    %v462 = vunpack.c.l.b16 %v359
    %v463 = vunpack.c.l.b16 %v360
    %v464 = vunpack.c.l.b16 %v361
    %v465 = vunpack.c.l.b16 %v362
    %v466 = vunpack.c.l.b16 %v363
    %v467 = vunpack.c.l.b16 %v364
    %v468 = vunpack.c.l.b16 %v365
    %v469 = vunpack.c.l.b16 %v366
    %v470 = vunpack.c.l.b16 %v367
    %v471 = vunpack.c.l.b16 %v368
    %v472 = vunpack.c.l.b16 %v369
    %v473 = vunpack.c.l.b16 %v370
    %v474 = vunpack.c.l.b16 %v371
    %v475 = vunpack.c.l.b16 %v372
    %v476 = vunpack.c.l.b16 %v373
    %v477 = vunpack.c.l.b16 %v374
    %v478 = vunpack.c.l.b16 %v375
    %v479 = vunpack.c.l.b16 %v376
    %v480 = vunpack.c.l.b16 %v377
    %v481 = vunpack.c.l.b16 %v378
    %v482 = vunpack.c.l.b16 %v379
    %v483 = vunpack.c.l.b16 %v380
    %v484 = vunpack.c.l.b16 %v381
    %v485 = vunpack.c.l.b16 %v382
    %v486 = vunpack.c.l.b16 %v383
    %v487 = vunpack.c.l.b16 %v384
    %v488 = vunpack.c.l.b16 %v385
    %v489 = vunpack.c.l.b16 %v386
    %v490 = vunpack.c.l.b16 %v387
    %v491 = vunpack.c.l.b16 %v388
    %v492 = vunpack.c.l.b16 %v389
    %v493 = vunpack.c.l.b16 %v390
    %v494 = vunpack.c.l.b16 %v391
    %v495 = vunpack.c.l.b16 %v392
    %v496 = vunpack.c.l.b16 %v393
    %v497 = vunpack.c.l.b16 %v394
    %v498 = vpack.c.b16 %v451, %v450
    %v499 = vpack.c.b16 %v453, %v452
    %v500 = vpack.c.b16 %v455, %v454
    %v501 = vpack.c.b16 %v457, %v456
    %v502 = vpack.c.b16 %v459, %v458
    %v503 = vpack.c.b16 %v461, %v460
    %v504 = vpack.c.b16 %v463, %v462
    %v505 = vpack.c.b16 %v465, %v464
    %v506 = vpack.c.b16 %v467, %v466
    %v507 = vpack.c.b16 %v469, %v468
    %v508 = vpack.c.b16 %v471, %v470
    %v509 = vpack.c.b16 %v473, %v472
    %v510 = vpack.c.b16 %v475, %v474
    %v511 = vpack.c.b16 %v477, %v476
    %v512 = vpack.c.b16 %v479, %v478
    %v513 = vpack.c.b16 %v481, %v480
    %v514 = vpack.c.b16 %v483, %v482
    %v515 = vpack.c.b16 %v485, %v484
    %v516 = vpack.c.b16 %v487, %v486
    %v517 = vpack.c.b16 %v489, %v488
    %v518 = vpack.c.b16 %v491, %v490
    %v519 = vpack.c.b16 %v493, %v492
    %v520 = vpack.c.b16 %v495, %v494
    %v521 = vpack.c.b16 %v497, %v496
    %546 = vmatprep.subr.bf16.mxu0 0
    %547 = vmatpush1.bf16.msra.mxu0 %v505
    %548 = vmatprep.subr.bf16.mxu0 0
    %549 = vmatpush1.bf16.msra.mxu0 %v504
    %550 = vmatprep.subr.bf16.mxu0 0
    %551 = vmatpush1.bf16.msra.mxu0 %v503
    %552 = vmatprep.subr.bf16.mxu0 0
    %553 = vmatpush1.bf16.msra.mxu0 %v502
    %554 = vmatprep.subr.bf16.mxu0 0
    %555 = vmatpush1.bf16.msra.mxu0 %v501
    %556 = vmatprep.subr.bf16.mxu0 0
    %557 = vmatpush1.bf16.msra.mxu0 %v500
    %558 = vmatprep.subr.bf16.mxu0 0
    %559 = vmatpush1.bf16.msra.mxu0 %v499
    %560 = vmatprep.subr.bf16.mxu0 0
    %561 = vmatpush1.bf16.msra.mxu0 %v498
    %562 = vmatprep.subr.bf16.mxu0 0
    %563 = vmatpush2.bf16.msra.mxu0 %v513
    %564 = vmatprep.subr.bf16.mxu0 0
    %565 = vmatpush2.bf16.msra.mxu0 %v512
    %566 = vmatprep.subr.bf16.mxu0 0
    %567 = vmatpush2.bf16.msra.mxu0 %v511
    %568 = vmatprep.subr.bf16.mxu0 0
    %569 = vmatpush2.bf16.msra.mxu0 %v510
    %570 = vmatprep.subr.bf16.mxu0 0
    %571 = vmatpush2.bf16.msra.mxu0 %v509
    %572 = vmatprep.subr.bf16.mxu0 0
    %573 = vmatpush2.bf16.msra.mxu0 %v508
    %574 = vmatprep.subr.bf16.mxu0 0
    %575 = vmatpush2.bf16.msra.mxu0 %v507
    %576 = vmatprep.subr.bf16.mxu0 0
    %577 = vmatpush2.bf16.msra.mxu0 %v506
    %578 = vmatprep.mubr.bf16.mxu0 %v336
    %579 = vmatmul.mubr.bf16.gmra.mxu0 %v335
    %v580 = vpop.f32.mrf.mxu0
    %v581 = vadd.f32 %v400, %v580
    %v582 = vpop.f32.mrf.mxu0
    %v583 = vpop.f32.mrf.mxu0
    %v584 = vadd.f32 %v400, %v583
    %v585 = vpop.f32.mrf.mxu0
    %586 = vmatprep.mubr.bf16.mxu0 %v339
    %587 = vmatmul.mubr.bf16.gmra.mxu0 %v338
    %v588 = vpop.f32.mrf.mxu0
    %v589 = vadd.f32 %v400, %v588
    %v590 = vpop.f32.mrf.mxu0
    %v591 = vpop.f32.mrf.mxu0
    %v592 = vadd.f32 %v400, %v591
    %v593 = vpop.f32.mrf.mxu0
    %594 = vmatprep.mubr.bf16.mxu0 %v342
    %595 = vmatmul.mubr.bf16.gmra.mxu0 %v341
    %v596 = vpop.f32.mrf.mxu0
    %v597 = vadd.f32 %v400, %v596
    %v598 = vpop.f32.mrf.mxu0
    %v599 = vpop.f32.mrf.mxu0
    %v600 = vadd.f32 %v400, %v599
    %v601 = vpop.f32.mrf.mxu0
    %602 = vmatprep.mubr.bf16.mxu0 %v345
    %603 = vmatmul.mubr.bf16.gmra.mxu0 %v344
    %v604 = vpop.f32.mrf.mxu0
    %v605 = vadd.f32 %v400, %v604
    %v606 = vpop.f32.mrf.mxu0
    %v607 = vpop.f32.mrf.mxu0
    %v608 = vadd.f32 %v400, %v607
    %v609 = vpop.f32.mrf.mxu0
    %610 = vdwg.mxu0
    %611 = vmatprep.subr.bf16.mxu0 0
    %612 = vmatpush1.bf16.msra.mxu0 %v521
    %613 = vmatprep.subr.bf16.mxu0 0
    %614 = vmatpush1.bf16.msra.mxu0 %v520
    %615 = vmatprep.subr.bf16.mxu0 0
    %616 = vmatpush1.bf16.msra.mxu0 %v519
    %617 = vmatprep.subr.bf16.mxu0 0
    %618 = vmatpush1.bf16.msra.mxu0 %v518
    %619 = vmatprep.subr.bf16.mxu0 0
    %620 = vmatpush1.bf16.msra.mxu0 %v517
    %621 = vmatprep.subr.bf16.mxu0 0
    %622 = vmatpush1.bf16.msra.mxu0 %v516
    %623 = vmatprep.subr.bf16.mxu0 0
    %624 = vmatpush1.bf16.msra.mxu0 %v515
    %625 = vmatprep.subr.bf16.mxu0 0
    %626 = vmatpush1.bf16.msra.mxu0 %v514
    %627 = vmatprep.subr.bf16.mxu0 0
    %628 = vmatpush2.bf16.msra.mxu0 0
    %629 = vmatprep.subr.bf16.mxu0 0
    %630 = vmatpush2.bf16.msra.mxu0 0
    %631 = vmatprep.subr.bf16.mxu0 0
    %632 = vmatpush2.bf16.msra.mxu0 0
    %633 = vmatprep.subr.bf16.mxu0 0
    %634 = vmatpush2.bf16.msra.mxu0 0
    %635 = vmatprep.subr.bf16.mxu0 0
    %636 = vmatpush2.bf16.msra.mxu0 0
    %637 = vmatprep.subr.bf16.mxu0 0
    %638 = vmatpush2.bf16.msra.mxu0 0
    %639 = vmatprep.subr.bf16.mxu0 0
    %640 = vmatpush2.bf16.msra.mxu0 0
    %641 = vmatprep.subr.bf16.mxu0 0
    %642 = vmatpush2.bf16.msra.mxu0 0
    %643 = vmatprep.mubr.bf16.mxu0 0
    %644 = vmatmul.mubr.bf16.gmra.mxu0 %v337
    %v645 = vpop.f32.mrf.mxu0
    %v646 = vadd.f32 %v581, %v645
    %v647 = vpop.f32.mrf.mxu0
    %v648 = vpop.f32.mrf.mxu0
    %v649 = vadd.f32 %v584, %v648
    %v650 = vpop.f32.mrf.mxu0
    %651 = vmatprep.mubr.bf16.mxu0 0
    %652 = vmatmul.mubr.bf16.gmra.mxu0 %v340
    %v653 = vpop.f32.mrf.mxu0
    %v654 = vadd.f32 %v589, %v653
    %v655 = vpop.f32.mrf.mxu0
    %v656 = vpop.f32.mrf.mxu0
    %v657 = vadd.f32 %v592, %v656
    %v658 = vpop.f32.mrf.mxu0
    %659 = vmatprep.mubr.bf16.mxu0 0
    %660 = vmatmul.mubr.bf16.gmra.mxu0 %v343
    %v661 = vpop.f32.mrf.mxu0
    %v662 = vadd.f32 %v597, %v661
    %v663 = vpop.f32.mrf.mxu0
    %v664 = vpop.f32.mrf.mxu0
    %v665 = vadd.f32 %v600, %v664
    %v666 = vpop.f32.mrf.mxu0
    %667 = vmatprep.mubr.bf16.mxu0 0
    %668 = vmatmul.mubr.bf16.gmra.mxu0 %v346
    %v669 = vpop.f32.mrf.mxu0
    %v670 = vadd.f32 %v605, %v669
    %v671 = vpop.f32.mrf.mxu0
    %v672 = vpop.f32.mrf.mxu0
    %v673 = vadd.f32 %v608, %v672
    %v674 = vpop.f32.mrf.mxu0
    %675 = vdwg.mxu0
    %677 = vset.pattern.permute.xlu0 0
    %678 = vperm.xlu0 %677, %v157
    %v679 = vpop.permute.xlu0 %678
    %682 = vset.pattern.permute.xlu0 0
    %683 = vperm.xlu0 %682, %v158
    %v684 = vpop.permute.xlu0 %683
    %687 = vset.pattern.permute.xlu0 0
    %688 = vperm.xlu0 %687, %v159
    %v689 = vpop.permute.xlu0 %688
    %692 = vset.pattern.permute.xlu0 0
    %693 = vperm.xlu0 %692, %v160
    %v694 = vpop.permute.xlu0 %693
    %697 = vset.pattern.permute.xlu0 0
    %698 = vperm.xlu0 %697, %v161
    %v699 = vpop.permute.xlu0 %698
    %702 = vset.pattern.permute.xlu0 0
    %703 = vperm.xlu0 %702, %v162
    %v704 = vpop.permute.xlu0 %703
    %707 = vset.pattern.permute.xlu0 0
    %708 = vperm.xlu0 %707, %v163
    %v709 = vpop.permute.xlu0 %708
    %712 = vset.pattern.permute.xlu0 0
    %713 = vperm.xlu0 %712, %v164
    %v714 = vpop.permute.xlu0 %713
    %v716 = vmul.f32 %v646, %v679
    %v717 = vmul.f32 %v649, %v684
    %v718 = vmul.f32 %v654, %v689
    %v719 = vmul.f32 %v657, %v694
    %v720 = vmul.f32 %v662, %v699
    %v721 = vmul.f32 %v665, %v704
    %v722 = vmul.f32 %v670, %v709
    %v723 = vmul.f32 %v673, %v714
    %v724 = vadd.f32 %v716, %v717
    %v725 = vadd.f32 %v724, %v718
    %v726 = vadd.f32 %v725, %v719
    %v727 = vadd.f32 %v726, %v720
    %v728 = vadd.f32 %v727, %v721
    %v729 = vadd.f32 %v728, %v722
    %v730 = vadd.f32 %v729, %v723
    %v731 = vrot.slane %v730, 4
    %v732 = vadd.f32 %v730, %v731
    %v733 = vrot.slane %v732, 2
    %v734 = vadd.f32 %v732, %v733
    %v735 = vrot.slane %v734, 1
    %v736 = vadd.f32 %v734, %v735
    %v737 = vmul.f32 %v716, %v646
    %v738 = vmul.f32 %v717, %v649
    %v739 = vmul.f32 %v718, %v654
    %v740 = vmul.f32 %v719, %v657
    %v741 = vmul.f32 %v720, %v662
    %v742 = vmul.f32 %v721, %v665
    %v743 = vmul.f32 %v722, %v670
    %v744 = vmul.f32 %v723, %v673
    %v745 = vadd.f32 %v737, %v738
    %v746 = vadd.f32 %v745, %v739
    %v747 = vadd.f32 %v746, %v740
    %v748 = vadd.f32 %v747, %v741
    %v749 = vadd.f32 %v748, %v742
    %v750 = vadd.f32 %v749, %v743
    %v751 = vadd.f32 %v750, %v744
    %v752 = vrot.slane %v751, 4
    %v753 = vadd.f32 %v751, %v752
    %v754 = vrot.slane %v753, 2
    %v755 = vadd.f32 %v753, %v754
    %v756 = vrot.slane %v755, 1
    %v757 = vadd.f32 %v755, %v756
    %v758 = vmul.f32 %v736, 0.0625
    %v759 = vmul.f32 %v757, 0.0625
    %v760 = vmul.f32 %v758, %v758
    %v761 = vsub.f32 %v759, %v760
    %v762 = vmax.f32 %v761, 0.0
    %v763 = vsub.f32 %v646, %v758
    %v764 = vsub.f32 %v649, %v758
    %v765 = vsub.f32 %v654, %v758
    %v766 = vsub.f32 %v657, %v758
    %v767 = vsub.f32 %v662, %v758
    %v768 = vsub.f32 %v665, %v758
    %v769 = vsub.f32 %v670, %v758
    %v770 = vsub.f32 %v673, %v758
    %v771 = vadd.f32 %v762, 1e-05
    %v772 = vrsqrt.pop %v771
    %v773 = vmul.f32 %v763, %v772
    %v774 = vmul.f32 %v764, %v772
    %v775 = vmul.f32 %v765, %v772
    %v776 = vmul.f32 %v766, %v772
    %v777 = vmul.f32 %v767, %v772
    %v778 = vmul.f32 %v768, %v772
    %v779 = vmul.f32 %v769, %v772
    %v780 = vmul.f32 %v770, %v772
    %v781 = vld [vmem:[%s6] sm:$0x1]
    %v783 = vlaneseq
    %v784 = vshrl.u32 %v783, 7
    %v785 = vsub.s32 0, %v784
    %v786 = vrot.slane %v781, %v785
    %v788 = vmul.f32 %v773, %v786
    %v789 = vmul.f32 %v774, %v786
    %v790 = vmul.f32 %v775, %v786
    %v791 = vmul.f32 %v776, %v786
    %v792 = vmul.f32 %v777, %v786
    %v793 = vmul.f32 %v778, %v786
    %v794 = vmul.f32 %v779, %v786
    %v795 = vmul.f32 %v780, %v786
    %v796 = vld [vmem:[%s7] sm:$0x1]
    %v798 = vlaneseq
    %v799 = vshrl.u32 %v798, 7
    %v800 = vsub.s32 0, %v799
    %v801 = vrot.slane %v796, %v800
    %v803 = vadd.f32 %v788, %v801
    %v804 = vadd.f32 %v789, %v801
    %v805 = vadd.f32 %v790, %v801
    %v806 = vadd.f32 %v791, %v801
    %v807 = vadd.f32 %v792, %v801
    %v808 = vadd.f32 %v793, %v801
    %v809 = vadd.f32 %v794, %v801
    %v810 = vadd.f32 %v795, %v801
    %v811 = vmax.f32 %v803, 0.0
    %v812 = vmax.f32 %v804, 0.0
    %v813 = vmax.f32 %v805, 0.0
    %v814 = vmax.f32 %v806, 0.0
    %v815 = vmax.f32 %v807, 0.0
    %v816 = vmax.f32 %v808, 0.0
    %v817 = vmax.f32 %v809, 0.0
    %v818 = vmax.f32 %v810, 0.0
    %v819 = vpack.c.bf16 %v811, 0.0
    %v820 = vpack.c.bf16 %v812, %v811
    %v821 = vpack.c.bf16 %v813, %v812
    %v822 = vpack.c.bf16 %v814, %v813
    %v823 = vpack.c.bf16 %v815, %v814
    %v824 = vpack.c.bf16 %v816, %v815
    %v825 = vpack.c.bf16 %v817, %v816
    %v826 = vpack.c.bf16 %v818, %v817
    %v827 = vpack.c.bf16 0.0, %v818
    %v828 = vld [vmem:[#allocation2] sm:$0xf]
    %v829 = vld [vmem:[#allocation2 + $0x4] sm:$0xf]
    %v830 = vld [vmem:[#allocation2 + $0x8] sm:$0xf]
    %v831 = vld [vmem:[#allocation2 + $0xc] sm:$0xf]
    %v832 = vld [vmem:[#allocation2 + $0x10] sm:$0xf]
    %v833 = vld [vmem:[#allocation2 + $0x14] sm:$0xf]
    %v834 = vld [vmem:[#allocation2 + $0x18] sm:$0xf]
    %v835 = vld [vmem:[#allocation2 + $0x1c] sm:$0xf]
    %v836 = vld [vmem:[#allocation2 + $0x20] sm:$0xf]
    %v837 = vld [vmem:[#allocation2 + $0x24] sm:$0xf]
    %v838 = vld [vmem:[#allocation2 + $0x28] sm:$0xf]
    %v839 = vld [vmem:[#allocation2 + $0x2c] sm:$0xf]
    %v840 = vld [vmem:[#allocation2 + $0x30] sm:$0xf]
    %v841 = vld [vmem:[#allocation2 + $0x34] sm:$0xf]
    %v842 = vld [vmem:[#allocation2 + $0x38] sm:$0xf]
    %v843 = vld [vmem:[#allocation2 + $0x3c] sm:$0xf]
    %v844 = vld [vmem:[#allocation2 + $0x40] sm:$0xf]
    %v845 = vld [vmem:[#allocation2 + $0x44] sm:$0xf]
    %v846 = vld [vmem:[#allocation2 + $0x48] sm:$0xf]
    %v847 = vld [vmem:[#allocation2 + $0x4c] sm:$0xf]
    %v848 = vld [vmem:[#allocation2 + $0x50] sm:$0xf]
    %v849 = vld [vmem:[#allocation2 + $0x54] sm:$0xf]
    %v850 = vld [vmem:[#allocation2 + $0x58] sm:$0xf]
    %v851 = vld [vmem:[#allocation2 + $0x5c] sm:$0xf]
    %v852 = vld [vmem:[#allocation2 + $0x60] sm:$0xf]
    %v853 = vld [vmem:[#allocation2 + $0x64] sm:$0xf]
    %v854 = vld [vmem:[#allocation2 + $0x68] sm:$0xf]
    %v855 = vld [vmem:[#allocation2 + $0x6c] sm:$0xf]
    %v856 = vld [vmem:[#allocation2 + $0x70] sm:$0xf]
    %v857 = vld [vmem:[#allocation2 + $0x74] sm:$0xf]
    %v858 = vld [vmem:[#allocation2 + $0x78] sm:$0xf]
    %v859 = vld [vmem:[#allocation2 + $0x7c] sm:$0xf]
    %v860 = vld [vmem:[#allocation2 + $0x80] sm:$0xf]
    %v861 = vld [vmem:[#allocation2 + $0x84] sm:$0xf]
    %v862 = vld [vmem:[#allocation2 + $0x88] sm:$0xf]
    %v863 = vld [vmem:[#allocation2 + $0x8c] sm:$0xf]
    %v864 = vld [vmem:[#allocation2 + $0x90] sm:$0xf]
    %v865 = vld [vmem:[#allocation2 + $0x94] sm:$0xf]
    %v866 = vld [vmem:[#allocation2 + $0x98] sm:$0xf]
    %v867 = vld [vmem:[#allocation2 + $0x9c] sm:$0xf]
    %v868 = vld [vmem:[#allocation2 + $0xa0] sm:$0xf]
    %v869 = vld [vmem:[#allocation2 + $0xa4] sm:$0xf]
    %v870 = vld [vmem:[#allocation2 + $0xa8] sm:$0xf]
    %v871 = vld [vmem:[#allocation2 + $0xac] sm:$0xf]
    %v872 = vld [vmem:[#allocation2 + $0xb0] sm:$0xf]
    %v873 = vld [vmem:[#allocation2 + $0xb4] sm:$0xf]
    %v874 = vld [vmem:[#allocation2 + $0xb8] sm:$0xf]
    %v875 = vld [vmem:[#allocation2 + $0xbc] sm:$0xf]
    %v876 = vld [vmem:[%s9] sm:$0x1]
    %v878 = vlaneseq
    %v879 = vshrl.u32 %v878, 7
    %v880 = vsub.s32 0, %v879
    %v881 = vrot.slane %v876, %v880
    %v931 = vunpack.c.l.b16 %v828
    %v932 = vunpack.c.l.b16 %v829
    %v933 = vunpack.c.l.b16 %v830
    %v934 = vunpack.c.l.b16 %v831
    %v935 = vunpack.c.l.b16 %v832
    %v936 = vunpack.c.l.b16 %v833
    %v937 = vunpack.c.l.b16 %v834
    %v938 = vunpack.c.l.b16 %v835
    %v939 = vunpack.c.l.b16 %v836
    %v940 = vunpack.c.l.b16 %v837
    %v941 = vunpack.c.l.b16 %v838
    %v942 = vunpack.c.l.b16 %v839
    %v943 = vunpack.c.l.b16 %v840
    %v944 = vunpack.c.l.b16 %v841
    %v945 = vunpack.c.l.b16 %v842
    %v946 = vunpack.c.l.b16 %v843
    %v947 = vunpack.c.l.b16 %v844
    %v948 = vunpack.c.l.b16 %v845
    %v949 = vunpack.c.l.b16 %v846
    %v950 = vunpack.c.l.b16 %v847
    %v951 = vunpack.c.l.b16 %v848
    %v952 = vunpack.c.l.b16 %v849
    %v953 = vunpack.c.l.b16 %v850
    %v954 = vunpack.c.l.b16 %v851
    %v955 = vunpack.c.l.b16 %v852
    %v956 = vunpack.c.l.b16 %v853
    %v957 = vunpack.c.l.b16 %v854
    %v958 = vunpack.c.l.b16 %v855
    %v959 = vunpack.c.l.b16 %v856
    %v960 = vunpack.c.l.b16 %v857
    %v961 = vunpack.c.l.b16 %v858
    %v962 = vunpack.c.l.b16 %v859
    %v963 = vunpack.c.l.b16 %v860
    %v964 = vunpack.c.l.b16 %v861
    %v965 = vunpack.c.l.b16 %v862
    %v966 = vunpack.c.l.b16 %v863
    %v967 = vunpack.c.l.b16 %v864
    %v968 = vunpack.c.l.b16 %v865
    %v969 = vunpack.c.l.b16 %v866
    %v970 = vunpack.c.l.b16 %v867
    %v971 = vunpack.c.l.b16 %v868
    %v972 = vunpack.c.l.b16 %v869
    %v973 = vunpack.c.l.b16 %v870
    %v974 = vunpack.c.l.b16 %v871
    %v975 = vunpack.c.l.b16 %v872
    %v976 = vunpack.c.l.b16 %v873
    %v977 = vunpack.c.l.b16 %v874
    %v978 = vunpack.c.l.b16 %v875
    %v979 = vpack.c.b16 %v932, %v931
    %v980 = vpack.c.b16 %v934, %v933
    %v981 = vpack.c.b16 %v936, %v935
    %v982 = vpack.c.b16 %v938, %v937
    %v983 = vpack.c.b16 %v940, %v939
    %v984 = vpack.c.b16 %v942, %v941
    %v985 = vpack.c.b16 %v944, %v943
    %v986 = vpack.c.b16 %v946, %v945
    %v987 = vpack.c.b16 %v948, %v947
    %v988 = vpack.c.b16 %v950, %v949
    %v989 = vpack.c.b16 %v952, %v951
    %v990 = vpack.c.b16 %v954, %v953
    %v991 = vpack.c.b16 %v956, %v955
    %v992 = vpack.c.b16 %v958, %v957
    %v993 = vpack.c.b16 %v960, %v959
    %v994 = vpack.c.b16 %v962, %v961
    %v995 = vpack.c.b16 %v964, %v963
    %v996 = vpack.c.b16 %v966, %v965
    %v997 = vpack.c.b16 %v968, %v967
    %v998 = vpack.c.b16 %v970, %v969
    %v999 = vpack.c.b16 %v972, %v971
    %v1000 = vpack.c.b16 %v974, %v973
    %v1001 = vpack.c.b16 %v976, %v975
    %v1002 = vpack.c.b16 %v978, %v977
    %1027 = vmatprep.subr.bf16.mxu0 0
    %1028 = vmatpush1.bf16.msra.mxu0 %v986
    %1029 = vmatprep.subr.bf16.mxu0 0
    %1030 = vmatpush1.bf16.msra.mxu0 %v985
    %1031 = vmatprep.subr.bf16.mxu0 0
    %1032 = vmatpush1.bf16.msra.mxu0 %v984
    %1033 = vmatprep.subr.bf16.mxu0 0
    %1034 = vmatpush1.bf16.msra.mxu0 %v983
    %1035 = vmatprep.subr.bf16.mxu0 0
    %1036 = vmatpush1.bf16.msra.mxu0 %v982
    %1037 = vmatprep.subr.bf16.mxu0 0
    %1038 = vmatpush1.bf16.msra.mxu0 %v981
    %1039 = vmatprep.subr.bf16.mxu0 0
    %1040 = vmatpush1.bf16.msra.mxu0 %v980
    %1041 = vmatprep.subr.bf16.mxu0 0
    %1042 = vmatpush1.bf16.msra.mxu0 %v979
    %1043 = vmatprep.subr.bf16.mxu0 0
    %1044 = vmatpush2.bf16.msra.mxu0 %v994
    %1045 = vmatprep.subr.bf16.mxu0 0
    %1046 = vmatpush2.bf16.msra.mxu0 %v993
    %1047 = vmatprep.subr.bf16.mxu0 0
    %1048 = vmatpush2.bf16.msra.mxu0 %v992
    %1049 = vmatprep.subr.bf16.mxu0 0
    %1050 = vmatpush2.bf16.msra.mxu0 %v991
    %1051 = vmatprep.subr.bf16.mxu0 0
    %1052 = vmatpush2.bf16.msra.mxu0 %v990
    %1053 = vmatprep.subr.bf16.mxu0 0
    %1054 = vmatpush2.bf16.msra.mxu0 %v989
    %1055 = vmatprep.subr.bf16.mxu0 0
    %1056 = vmatpush2.bf16.msra.mxu0 %v988
    %1057 = vmatprep.subr.bf16.mxu0 0
    %1058 = vmatpush2.bf16.msra.mxu0 %v987
    %1059 = vmatprep.mubr.bf16.mxu0 %v820
    %1060 = vmatmul.mubr.bf16.gmra.mxu0 %v819
    %v1061 = vpop.f32.mrf.mxu0
    %v1062 = vadd.f32 %v881, %v1061
    %v1063 = vpop.f32.mrf.mxu0
    %v1064 = vpop.f32.mrf.mxu0
    %v1065 = vadd.f32 %v881, %v1064
    %v1066 = vpop.f32.mrf.mxu0
    %1067 = vmatprep.mubr.bf16.mxu0 %v822
    %1068 = vmatmul.mubr.bf16.gmra.mxu0 %v821
    %v1069 = vpop.f32.mrf.mxu0
    %v1070 = vadd.f32 %v881, %v1069
    %v1071 = vpop.f32.mrf.mxu0
    %v1072 = vpop.f32.mrf.mxu0
    %v1073 = vadd.f32 %v881, %v1072
    %v1074 = vpop.f32.mrf.mxu0
    %1075 = vmatprep.mubr.bf16.mxu0 %v824
    %1076 = vmatmul.mubr.bf16.gmra.mxu0 %v823
    %v1077 = vpop.f32.mrf.mxu0
    %v1078 = vadd.f32 %v881, %v1077
    %v1079 = vpop.f32.mrf.mxu0
    %v1080 = vpop.f32.mrf.mxu0
    %v1081 = vadd.f32 %v881, %v1080
    %v1082 = vpop.f32.mrf.mxu0
    %1083 = vmatprep.mubr.bf16.mxu0 %v826
    %1084 = vmatmul.mubr.bf16.gmra.mxu0 %v825
    %v1085 = vpop.f32.mrf.mxu0
    %v1086 = vadd.f32 %v881, %v1085
    %v1087 = vpop.f32.mrf.mxu0
    %v1088 = vpop.f32.mrf.mxu0
    %v1089 = vadd.f32 %v881, %v1088
    %v1090 = vpop.f32.mrf.mxu0
    %1091 = vdwg.mxu0
    %1092 = vmatprep.subr.bf16.mxu0 0
    %1093 = vmatpush1.bf16.msra.mxu0 %v1002
    %1094 = vmatprep.subr.bf16.mxu0 0
    %1095 = vmatpush1.bf16.msra.mxu0 %v1001
    %1096 = vmatprep.subr.bf16.mxu0 0
    %1097 = vmatpush1.bf16.msra.mxu0 %v1000
    %1098 = vmatprep.subr.bf16.mxu0 0
    %1099 = vmatpush1.bf16.msra.mxu0 %v999
    %1100 = vmatprep.subr.bf16.mxu0 0
    %1101 = vmatpush1.bf16.msra.mxu0 %v998
    %1102 = vmatprep.subr.bf16.mxu0 0
    %1103 = vmatpush1.bf16.msra.mxu0 %v997
    %1104 = vmatprep.subr.bf16.mxu0 0
    %1105 = vmatpush1.bf16.msra.mxu0 %v996
    %1106 = vmatprep.subr.bf16.mxu0 0
    %1107 = vmatpush1.bf16.msra.mxu0 %v995
    %1108 = vmatprep.subr.bf16.mxu0 0
    %1109 = vmatpush2.bf16.msra.mxu0 0
    %1110 = vmatprep.subr.bf16.mxu0 0
    %1111 = vmatpush2.bf16.msra.mxu0 0
    %1112 = vmatprep.subr.bf16.mxu0 0
    %1113 = vmatpush2.bf16.msra.mxu0 0
    %1114 = vmatprep.subr.bf16.mxu0 0
    %1115 = vmatpush2.bf16.msra.mxu0 0
    %1116 = vmatprep.subr.bf16.mxu0 0
    %1117 = vmatpush2.bf16.msra.mxu0 0
    %1118 = vmatprep.subr.bf16.mxu0 0
    %1119 = vmatpush2.bf16.msra.mxu0 0
    %1120 = vmatprep.subr.bf16.mxu0 0
    %1121 = vmatpush2.bf16.msra.mxu0 0
    %1122 = vmatprep.subr.bf16.mxu0 0
    %1123 = vmatpush2.bf16.msra.mxu0 0
    %1124 = vmatprep.mubr.bf16.mxu0 0
    %1125 = vmatmul.mubr.bf16.gmra.mxu0 %v821
    %v1126 = vpop.f32.mrf.mxu0
    %v1127 = vadd.f32 %v1062, %v1126
    %v1128 = vpop.f32.mrf.mxu0
    %v1129 = vpop.f32.mrf.mxu0
    %v1130 = vadd.f32 %v1065, %v1129
    %v1131 = vpop.f32.mrf.mxu0
    %1132 = vmatprep.mubr.bf16.mxu0 0
    %1133 = vmatmul.mubr.bf16.gmra.mxu0 %v823
    %v1134 = vpop.f32.mrf.mxu0
    %v1135 = vadd.f32 %v1070, %v1134
    %v1136 = vpop.f32.mrf.mxu0
    %v1137 = vpop.f32.mrf.mxu0
    %v1138 = vadd.f32 %v1073, %v1137
    %v1139 = vpop.f32.mrf.mxu0
    %1140 = vmatprep.mubr.bf16.mxu0 0
    %1141 = vmatmul.mubr.bf16.gmra.mxu0 %v825
    %v1142 = vpop.f32.mrf.mxu0
    %v1143 = vadd.f32 %v1078, %v1142
    %v1144 = vpop.f32.mrf.mxu0
    %v1145 = vpop.f32.mrf.mxu0
    %v1146 = vadd.f32 %v1081, %v1145
    %v1147 = vpop.f32.mrf.mxu0
    %1148 = vmatprep.mubr.bf16.mxu0 0
    %1149 = vmatmul.mubr.bf16.gmra.mxu0 %v827
    %v1150 = vpop.f32.mrf.mxu0
    %v1151 = vadd.f32 %v1086, %v1150
    %v1152 = vpop.f32.mrf.mxu0
    %v1153 = vpop.f32.mrf.mxu0
    %v1154 = vadd.f32 %v1089, %v1153
    %v1155 = vpop.f32.mrf.mxu0
    %1156 = vdwg.mxu0
    %v1157 = vmul.f32 %v1127, %v679
    %v1158 = vmul.f32 %v1130, %v684
    %v1159 = vmul.f32 %v1135, %v689
    %v1160 = vmul.f32 %v1138, %v694
    %v1161 = vmul.f32 %v1143, %v699
    %v1162 = vmul.f32 %v1146, %v704
    %v1163 = vmul.f32 %v1151, %v709
    %v1164 = vmul.f32 %v1154, %v714
    %v1165 = vadd.f32 %v1157, %v1158
    %v1166 = vadd.f32 %v1165, %v1159
    %v1167 = vadd.f32 %v1166, %v1160
    %v1168 = vadd.f32 %v1167, %v1161
    %v1169 = vadd.f32 %v1168, %v1162
    %v1170 = vadd.f32 %v1169, %v1163
    %v1171 = vadd.f32 %v1170, %v1164
    %v1172 = vrot.slane %v1171, 4
    %v1173 = vadd.f32 %v1171, %v1172
    %v1174 = vrot.slane %v1173, 2
    %v1175 = vadd.f32 %v1173, %v1174
    %v1176 = vrot.slane %v1175, 1
    %v1177 = vadd.f32 %v1175, %v1176
    %v1178 = vmul.f32 %v1157, %v1127
    %v1179 = vmul.f32 %v1158, %v1130
    %v1180 = vmul.f32 %v1159, %v1135
    %v1181 = vmul.f32 %v1160, %v1138
    %v1182 = vmul.f32 %v1161, %v1143
    %v1183 = vmul.f32 %v1162, %v1146
    %v1184 = vmul.f32 %v1163, %v1151
    %v1185 = vmul.f32 %v1164, %v1154
    %v1186 = vadd.f32 %v1178, %v1179
    %v1187 = vadd.f32 %v1186, %v1180
    %v1188 = vadd.f32 %v1187, %v1181
    %v1189 = vadd.f32 %v1188, %v1182
    %v1190 = vadd.f32 %v1189, %v1183
    %v1191 = vadd.f32 %v1190, %v1184
    %v1192 = vadd.f32 %v1191, %v1185
    %v1193 = vrot.slane %v1192, 4
    %v1194 = vadd.f32 %v1192, %v1193
    %v1195 = vrot.slane %v1194, 2
    %v1196 = vadd.f32 %v1194, %v1195
    %v1197 = vrot.slane %v1196, 1
    %v1198 = vadd.f32 %v1196, %v1197
    %v1199 = vmul.f32 %v1177, 0.0625
    %v1200 = vmul.f32 %v1198, 0.0625
    %v1201 = vmul.f32 %v1199, %v1199
    %v1202 = vsub.f32 %v1200, %v1201
    %v1203 = vmax.f32 %v1202, 0.0
    %v1204 = vsub.f32 %v1127, %v1199
    %v1205 = vsub.f32 %v1130, %v1199
    %v1206 = vsub.f32 %v1135, %v1199
    %v1207 = vsub.f32 %v1138, %v1199
    %v1208 = vsub.f32 %v1143, %v1199
    %v1209 = vsub.f32 %v1146, %v1199
    %v1210 = vsub.f32 %v1151, %v1199
    %v1211 = vsub.f32 %v1154, %v1199
    %v1212 = vadd.f32 %v1203, 1e-05
    %v1213 = vrsqrt.pop %v1212
    %v1214 = vmul.f32 %v1204, %v1213
    %v1215 = vmul.f32 %v1205, %v1213
    %v1216 = vmul.f32 %v1206, %v1213
    %v1217 = vmul.f32 %v1207, %v1213
    %v1218 = vmul.f32 %v1208, %v1213
    %v1219 = vmul.f32 %v1209, %v1213
    %v1220 = vmul.f32 %v1210, %v1213
    %v1221 = vmul.f32 %v1211, %v1213
    %v1222 = vld [vmem:[%s10] sm:$0x1]
    %v1224 = vlaneseq
    %v1225 = vshrl.u32 %v1224, 7
    %v1226 = vsub.s32 0, %v1225
    %v1227 = vrot.slane %v1222, %v1226
    %v1229 = vmul.f32 %v1214, %v1227
    %v1230 = vmul.f32 %v1215, %v1227
    %v1231 = vmul.f32 %v1216, %v1227
    %v1232 = vmul.f32 %v1217, %v1227
    %v1233 = vmul.f32 %v1218, %v1227
    %v1234 = vmul.f32 %v1219, %v1227
    %v1235 = vmul.f32 %v1220, %v1227
    %v1236 = vmul.f32 %v1221, %v1227
    %v1237 = vld [vmem:[%s11] sm:$0x1]
    %v1239 = vlaneseq
    %v1240 = vshrl.u32 %v1239, 7
    %v1241 = vsub.s32 0, %v1240
    %v1242 = vrot.slane %v1237, %v1241
    %v1244 = vadd.f32 %v1229, %v1242
    %v1245 = vadd.f32 %v1230, %v1242
    %v1246 = vadd.f32 %v1231, %v1242
    %v1247 = vadd.f32 %v1232, %v1242
    %v1248 = vadd.f32 %v1233, %v1242
    %v1249 = vadd.f32 %v1234, %v1242
    %v1250 = vadd.f32 %v1235, %v1242
    %v1251 = vadd.f32 %v1236, %v1242
    %v1252 = vmax.f32 %v1244, 0.0
    %v1253 = vmax.f32 %v1245, 0.0
    %v1254 = vmax.f32 %v1246, 0.0
    %v1255 = vmax.f32 %v1247, 0.0
    %v1256 = vmax.f32 %v1248, 0.0
    %v1257 = vmax.f32 %v1249, 0.0
    %v1258 = vmax.f32 %v1250, 0.0
    %v1259 = vmax.f32 %v1251, 0.0
    %1260 = vst [vmem:[#allocation12] sm:$0xff] %v1252
    %1261 = vst [vmem:[#allocation12 + $0x8] sm:$0xff] %v1253
    %1262 = vst [vmem:[#allocation12 + $0x10] sm:$0xff] %v1254
    %1263 = vst [vmem:[#allocation12 + $0x18] sm:$0xff] %v1255
    %1264 = vst [vmem:[#allocation12 + $0x20] sm:$0xff] %v1256
    %1265 = vst [vmem:[#allocation12 + $0x28] sm:$0xff] %v1257
    %1266 = vst [vmem:[#allocation12 + $0x30] sm:$0xff] %v1258
    %1267 = vst [vmem:[#allocation12 + $0x38] sm:$0xff] %v1259
    %v1268 = vld [vmem:[%s13] sm:$0x1]
    %v1270 = vlaneseq
    %v1271 = vshrl.u32 %v1270, 7
    %v1272 = vsub.s32 0, %v1271
    %v1273 = vrot.slane %v1268, %v1272
    %v1275 = vadd.f32 %v1273, 0.0
    %v1276 = vpack.c.bf16 %v1252, %v1252
    %v1277 = vld [vmem:[#allocation5] sm:$0xf]
    %v1278 = vld [vmem:[#allocation5 + $0x4] sm:$0xf]
    %v1279 = vld [vmem:[#allocation5 + $0x8] sm:$0xf]
    %v1280 = vld [vmem:[#allocation5 + $0xc] sm:$0xf]
    %v1281 = vld [vmem:[#allocation5 + $0x10] sm:$0xf]
    %v1282 = vld [vmem:[#allocation5 + $0x14] sm:$0xf]
    %v1283 = vld [vmem:[#allocation5 + $0x18] sm:$0xf]
    %v1284 = vld [vmem:[#allocation5 + $0x1c] sm:$0xf]
    %v1285 = vld [vmem:[#allocation5 + $0x20] sm:$0xf]
    %v1286 = vld [vmem:[#allocation5 + $0x24] sm:$0xf]
    %v1287 = vld [vmem:[#allocation5 + $0x28] sm:$0xf]
    %v1288 = vld [vmem:[#allocation5 + $0x2c] sm:$0xf]
    %v1289 = vld [vmem:[#allocation5 + $0x30] sm:$0xf]
    %v1290 = vld [vmem:[#allocation5 + $0x34] sm:$0xf]
    %v1291 = vld [vmem:[#allocation5 + $0x38] sm:$0xf]
    %v1292 = vld [vmem:[#allocation5 + $0x3c] sm:$0xf]
    %v1309 = vunpack.c.l.b16 %v1277
    %v1310 = vunpack.c.l.b16 %v1278
    %v1311 = vunpack.c.l.b16 %v1279
    %v1312 = vunpack.c.l.b16 %v1280
    %v1313 = vunpack.c.l.b16 %v1281
    %v1314 = vunpack.c.l.b16 %v1282
    %v1315 = vunpack.c.l.b16 %v1283
    %v1316 = vunpack.c.l.b16 %v1284
    %v1317 = vunpack.c.l.b16 %v1285
    %v1318 = vunpack.c.l.b16 %v1286
    %v1319 = vunpack.c.l.b16 %v1287
    %v1320 = vunpack.c.l.b16 %v1288
    %v1321 = vunpack.c.l.b16 %v1289
    %v1322 = vunpack.c.l.b16 %v1290
    %v1323 = vunpack.c.l.b16 %v1291
    %v1324 = vunpack.c.l.b16 %v1292
    %v1325 = vpack.c.b16 %v1310, %v1309
    %v1326 = vpack.c.b16 %v1312, %v1311
    %v1327 = vpack.c.b16 %v1314, %v1313
    %v1328 = vpack.c.b16 %v1316, %v1315
    %v1329 = vpack.c.b16 %v1318, %v1317
    %v1330 = vpack.c.b16 %v1320, %v1319
    %v1331 = vpack.c.b16 %v1322, %v1321
    %v1332 = vpack.c.b16 %v1324, %v1323
    %1341 = vmatprep.subr.bf16.mxu0 0
    %1342 = vmatpush1.bf16.msra.mxu0 %v1332
    %1343 = vmatprep.subr.bf16.mxu0 0
    %1344 = vmatpush1.bf16.msra.mxu0 %v1331
    %1345 = vmatprep.subr.bf16.mxu0 0
    %1346 = vmatpush1.bf16.msra.mxu0 %v1330
    %1347 = vmatprep.subr.bf16.mxu0 0
    %1348 = vmatpush1.bf16.msra.mxu0 %v1329
    %1349 = vmatprep.subr.bf16.mxu0 0
    %1350 = vmatpush1.bf16.msra.mxu0 %v1328
    %1351 = vmatprep.subr.bf16.mxu0 0
    %1352 = vmatpush1.bf16.msra.mxu0 %v1327
    %1353 = vmatprep.subr.bf16.mxu0 0
    %1354 = vmatpush1.bf16.msra.mxu0 %v1326
    %1355 = vmatprep.subr.bf16.mxu0 0
    %1356 = vmatpush1.bf16.msra.mxu0 %v1325
    %1357 = vmatprep.subr.bf16.mxu0 0
    %1358 = vmatpush2.bf16.msra.mxu0 0
    %1359 = vmatprep.subr.bf16.mxu0 0
    %1360 = vmatpush2.bf16.msra.mxu0 0
    %1361 = vmatprep.subr.bf16.mxu0 0
    %1362 = vmatpush2.bf16.msra.mxu0 0
    %1363 = vmatprep.subr.bf16.mxu0 0
    %1364 = vmatpush2.bf16.msra.mxu0 0
    %1365 = vmatprep.subr.bf16.mxu0 0
    %1366 = vmatpush2.bf16.msra.mxu0 0
    %1367 = vmatprep.subr.bf16.mxu0 0
    %1368 = vmatpush2.bf16.msra.mxu0 0
    %1369 = vmatprep.subr.bf16.mxu0 0
    %1370 = vmatpush2.bf16.msra.mxu0 0
    %1371 = vmatprep.subr.bf16.mxu0 0
    %1372 = vmatpush2.bf16.msra.mxu0 0
    %1373 = vmatprep.mubr.bf16.mxu0 0
    %1374 = vmatmul.mubr.bf16.gmra.mxu0 %v1276
    %v1375 = vpop.f32.mrf.mxu0
    %v1376 = vadd.f32 0.0, %v1375
    %v1377 = vpop.f32.mrf.mxu0
    %v1378 = vpop.f32.mrf.mxu0
    %v1379 = vpop.f32.mrf.mxu0
    %1380 = vdwg.mxu0
    %v1381 = vadd.f32 %v1275, %v1376
    %v1382 = vpack.c.bf16 %v1253, %v1253
    %s1383 = scalar_lea.vmem [#allocation5], 64
    %v1384 = vld [vmem:[%s1383] sm:$0xf]
    %v1385 = vld [vmem:[%s1383 + $0x4] sm:$0xf]
    %v1386 = vld [vmem:[%s1383 + $0x8] sm:$0xf]
    %v1387 = vld [vmem:[%s1383 + $0xc] sm:$0xf]
    %v1388 = vld [vmem:[%s1383 + $0x10] sm:$0xf]
    %v1389 = vld [vmem:[%s1383 + $0x14] sm:$0xf]
    %v1390 = vld [vmem:[%s1383 + $0x18] sm:$0xf]
    %v1391 = vld [vmem:[%s1383 + $0x1c] sm:$0xf]
    %v1392 = vld [vmem:[%s1383 + $0x20] sm:$0xf]
    %v1393 = vld [vmem:[%s1383 + $0x24] sm:$0xf]
    %v1394 = vld [vmem:[%s1383 + $0x28] sm:$0xf]
    %v1395 = vld [vmem:[%s1383 + $0x2c] sm:$0xf]
    %v1396 = vld [vmem:[%s1383 + $0x30] sm:$0xf]
    %v1397 = vld [vmem:[%s1383 + $0x34] sm:$0xf]
    %v1398 = vld [vmem:[%s1383 + $0x38] sm:$0xf]
    %v1399 = vld [vmem:[%s1383 + $0x3c] sm:$0xf]
    %v1416 = vunpack.c.l.b16 %v1384
    %v1417 = vunpack.c.l.b16 %v1385
    %v1418 = vunpack.c.l.b16 %v1386
    %v1419 = vunpack.c.l.b16 %v1387
    %v1420 = vunpack.c.l.b16 %v1388
    %v1421 = vunpack.c.l.b16 %v1389
    %v1422 = vunpack.c.l.b16 %v1390
    %v1423 = vunpack.c.l.b16 %v1391
    %v1424 = vunpack.c.l.b16 %v1392
    %v1425 = vunpack.c.l.b16 %v1393
    %v1426 = vunpack.c.l.b16 %v1394
    %v1427 = vunpack.c.l.b16 %v1395
    %v1428 = vunpack.c.l.b16 %v1396
    %v1429 = vunpack.c.l.b16 %v1397
    %v1430 = vunpack.c.l.b16 %v1398
    %v1431 = vunpack.c.l.b16 %v1399
    %v1432 = vpack.c.b16 %v1417, %v1416
    %v1433 = vpack.c.b16 %v1419, %v1418
    %v1434 = vpack.c.b16 %v1421, %v1420
    %v1435 = vpack.c.b16 %v1423, %v1422
    %v1436 = vpack.c.b16 %v1425, %v1424
    %v1437 = vpack.c.b16 %v1427, %v1426
    %v1438 = vpack.c.b16 %v1429, %v1428
    %v1439 = vpack.c.b16 %v1431, %v1430
    %1448 = vmatprep.subr.bf16.mxu0 0
    %1449 = vmatpush1.bf16.msra.mxu0 %v1439
    %1450 = vmatprep.subr.bf16.mxu0 0
    %1451 = vmatpush1.bf16.msra.mxu0 %v1438
    %1452 = vmatprep.subr.bf16.mxu0 0
    %1453 = vmatpush1.bf16.msra.mxu0 %v1437
    %1454 = vmatprep.subr.bf16.mxu0 0
    %1455 = vmatpush1.bf16.msra.mxu0 %v1436
    %1456 = vmatprep.subr.bf16.mxu0 0
    %1457 = vmatpush1.bf16.msra.mxu0 %v1435
    %1458 = vmatprep.subr.bf16.mxu0 0
    %1459 = vmatpush1.bf16.msra.mxu0 %v1434
    %1460 = vmatprep.subr.bf16.mxu0 0
    %1461 = vmatpush1.bf16.msra.mxu0 %v1433
    %1462 = vmatprep.subr.bf16.mxu0 0
    %1463 = vmatpush1.bf16.msra.mxu0 %v1432
    %1464 = vmatprep.subr.bf16.mxu0 0
    %1465 = vmatpush2.bf16.msra.mxu0 0
    %1466 = vmatprep.subr.bf16.mxu0 0
    %1467 = vmatpush2.bf16.msra.mxu0 0
    %1468 = vmatprep.subr.bf16.mxu0 0
    %1469 = vmatpush2.bf16.msra.mxu0 0
    %1470 = vmatprep.subr.bf16.mxu0 0
    %1471 = vmatpush2.bf16.msra.mxu0 0
    %1472 = vmatprep.subr.bf16.mxu0 0
    %1473 = vmatpush2.bf16.msra.mxu0 0
    %1474 = vmatprep.subr.bf16.mxu0 0
    %1475 = vmatpush2.bf16.msra.mxu0 0
    %1476 = vmatprep.subr.bf16.mxu0 0
    %1477 = vmatpush2.bf16.msra.mxu0 0
    %1478 = vmatprep.subr.bf16.mxu0 0
    %1479 = vmatpush2.bf16.msra.mxu0 0
    %1480 = vmatprep.mubr.bf16.mxu0 0
    %1481 = vmatmul.mubr.bf16.gmra.mxu0 %v1382
    %v1482 = vpop.f32.mrf.mxu0
    %v1483 = vadd.f32 0.0, %v1482
    %v1484 = vpop.f32.mrf.mxu0
    %v1485 = vpop.f32.mrf.mxu0
    %v1486 = vpop.f32.mrf.mxu0
    %1487 = vdwg.mxu0
    %v1488 = vadd.f32 %v1381, %v1483
    %v1489 = vpack.c.bf16 %v1254, %v1254
    %s1490 = scalar_lea.vmem [#allocation5], 128
    %v1491 = vld [vmem:[%s1490] sm:$0xf]
    %v1492 = vld [vmem:[%s1490 + $0x4] sm:$0xf]
    %v1493 = vld [vmem:[%s1490 + $0x8] sm:$0xf]
    %v1494 = vld [vmem:[%s1490 + $0xc] sm:$0xf]
    %v1495 = vld [vmem:[%s1490 + $0x10] sm:$0xf]
    %v1496 = vld [vmem:[%s1490 + $0x14] sm:$0xf]
    %v1497 = vld [vmem:[%s1490 + $0x18] sm:$0xf]
    %v1498 = vld [vmem:[%s1490 + $0x1c] sm:$0xf]
    %v1499 = vld [vmem:[%s1490 + $0x20] sm:$0xf]
    %v1500 = vld [vmem:[%s1490 + $0x24] sm:$0xf]
    %v1501 = vld [vmem:[%s1490 + $0x28] sm:$0xf]
    %v1502 = vld [vmem:[%s1490 + $0x2c] sm:$0xf]
    %v1503 = vld [vmem:[%s1490 + $0x30] sm:$0xf]
    %v1504 = vld [vmem:[%s1490 + $0x34] sm:$0xf]
    %v1505 = vld [vmem:[%s1490 + $0x38] sm:$0xf]
    %v1506 = vld [vmem:[%s1490 + $0x3c] sm:$0xf]
    %v1523 = vunpack.c.l.b16 %v1491
    %v1524 = vunpack.c.l.b16 %v1492
    %v1525 = vunpack.c.l.b16 %v1493
    %v1526 = vunpack.c.l.b16 %v1494
    %v1527 = vunpack.c.l.b16 %v1495
    %v1528 = vunpack.c.l.b16 %v1496
    %v1529 = vunpack.c.l.b16 %v1497
    %v1530 = vunpack.c.l.b16 %v1498
    %v1531 = vunpack.c.l.b16 %v1499
    %v1532 = vunpack.c.l.b16 %v1500
    %v1533 = vunpack.c.l.b16 %v1501
    %v1534 = vunpack.c.l.b16 %v1502
    %v1535 = vunpack.c.l.b16 %v1503
    %v1536 = vunpack.c.l.b16 %v1504
    %v1537 = vunpack.c.l.b16 %v1505
    %v1538 = vunpack.c.l.b16 %v1506
    %v1539 = vpack.c.b16 %v1524, %v1523
    %v1540 = vpack.c.b16 %v1526, %v1525
    %v1541 = vpack.c.b16 %v1528, %v1527
    %v1542 = vpack.c.b16 %v1530, %v1529
    %v1543 = vpack.c.b16 %v1532, %v1531
    %v1544 = vpack.c.b16 %v1534, %v1533
    %v1545 = vpack.c.b16 %v1536, %v1535
    %v1546 = vpack.c.b16 %v1538, %v1537
    %1555 = vmatprep.subr.bf16.mxu0 0
    %1556 = vmatpush1.bf16.msra.mxu0 %v1546
    %1557 = vmatprep.subr.bf16.mxu0 0
    %1558 = vmatpush1.bf16.msra.mxu0 %v1545
    %1559 = vmatprep.subr.bf16.mxu0 0
    %1560 = vmatpush1.bf16.msra.mxu0 %v1544
    %1561 = vmatprep.subr.bf16.mxu0 0
    %1562 = vmatpush1.bf16.msra.mxu0 %v1543
    %1563 = vmatprep.subr.bf16.mxu0 0
    %1564 = vmatpush1.bf16.msra.mxu0 %v1542
    %1565 = vmatprep.subr.bf16.mxu0 0
    %1566 = vmatpush1.bf16.msra.mxu0 %v1541
    %1567 = vmatprep.subr.bf16.mxu0 0
    %1568 = vmatpush1.bf16.msra.mxu0 %v1540
    %1569 = vmatprep.subr.bf16.mxu0 0
    %1570 = vmatpush1.bf16.msra.mxu0 %v1539
    %1571 = vmatprep.subr.bf16.mxu0 0
    %1572 = vmatpush2.bf16.msra.mxu0 0
    %1573 = vmatprep.subr.bf16.mxu0 0
    %1574 = vmatpush2.bf16.msra.mxu0 0
    %1575 = vmatprep.subr.bf16.mxu0 0
    %1576 = vmatpush2.bf16.msra.mxu0 0
    %1577 = vmatprep.subr.bf16.mxu0 0
    %1578 = vmatpush2.bf16.msra.mxu0 0
    %1579 = vmatprep.subr.bf16.mxu0 0
    %1580 = vmatpush2.bf16.msra.mxu0 0
    %1581 = vmatprep.subr.bf16.mxu0 0
    %1582 = vmatpush2.bf16.msra.mxu0 0
    %1583 = vmatprep.subr.bf16.mxu0 0
    %1584 = vmatpush2.bf16.msra.mxu0 0
    %1585 = vmatprep.subr.bf16.mxu0 0
    %1586 = vmatpush2.bf16.msra.mxu0 0
    %1587 = vmatprep.mubr.bf16.mxu0 0
    %1588 = vmatmul.mubr.bf16.gmra.mxu0 %v1489
    %v1589 = vpop.f32.mrf.mxu0
    %v1590 = vadd.f32 0.0, %v1589
    %v1591 = vpop.f32.mrf.mxu0
    %v1592 = vpop.f32.mrf.mxu0
    %v1593 = vpop.f32.mrf.mxu0
    %1594 = vdwg.mxu0
    %v1595 = vadd.f32 %v1488, %v1590
    %v1596 = vpack.c.bf16 %v1255, %v1255
    %s1597 = scalar_lea.vmem [#allocation5], 192
    %v1598 = vld [vmem:[%s1597] sm:$0xf]
    %v1599 = vld [vmem:[%s1597 + $0x4] sm:$0xf]
    %v1600 = vld [vmem:[%s1597 + $0x8] sm:$0xf]
    %v1601 = vld [vmem:[%s1597 + $0xc] sm:$0xf]
    %v1602 = vld [vmem:[%s1597 + $0x10] sm:$0xf]
    %v1603 = vld [vmem:[%s1597 + $0x14] sm:$0xf]
    %v1604 = vld [vmem:[%s1597 + $0x18] sm:$0xf]
    %v1605 = vld [vmem:[%s1597 + $0x1c] sm:$0xf]
    %v1606 = vld [vmem:[%s1597 + $0x20] sm:$0xf]
    %v1607 = vld [vmem:[%s1597 + $0x24] sm:$0xf]
    %v1608 = vld [vmem:[%s1597 + $0x28] sm:$0xf]
    %v1609 = vld [vmem:[%s1597 + $0x2c] sm:$0xf]
    %v1610 = vld [vmem:[%s1597 + $0x30] sm:$0xf]
    %v1611 = vld [vmem:[%s1597 + $0x34] sm:$0xf]
    %v1612 = vld [vmem:[%s1597 + $0x38] sm:$0xf]
    %v1613 = vld [vmem:[%s1597 + $0x3c] sm:$0xf]
    %v1630 = vunpack.c.l.b16 %v1598
    %v1631 = vunpack.c.l.b16 %v1599
    %v1632 = vunpack.c.l.b16 %v1600
    %v1633 = vunpack.c.l.b16 %v1601
    %v1634 = vunpack.c.l.b16 %v1602
    %v1635 = vunpack.c.l.b16 %v1603
    %v1636 = vunpack.c.l.b16 %v1604
    %v1637 = vunpack.c.l.b16 %v1605
    %v1638 = vunpack.c.l.b16 %v1606
    %v1639 = vunpack.c.l.b16 %v1607
    %v1640 = vunpack.c.l.b16 %v1608
    %v1641 = vunpack.c.l.b16 %v1609
    %v1642 = vunpack.c.l.b16 %v1610
    %v1643 = vunpack.c.l.b16 %v1611
    %v1644 = vunpack.c.l.b16 %v1612
    %v1645 = vunpack.c.l.b16 %v1613
    %v1646 = vpack.c.b16 %v1631, %v1630
    %v1647 = vpack.c.b16 %v1633, %v1632
    %v1648 = vpack.c.b16 %v1635, %v1634
    %v1649 = vpack.c.b16 %v1637, %v1636
    %v1650 = vpack.c.b16 %v1639, %v1638
    %v1651 = vpack.c.b16 %v1641, %v1640
    %v1652 = vpack.c.b16 %v1643, %v1642
    %v1653 = vpack.c.b16 %v1645, %v1644
    %1662 = vmatprep.subr.bf16.mxu0 0
    %1663 = vmatpush1.bf16.msra.mxu0 %v1653
    %1664 = vmatprep.subr.bf16.mxu0 0
    %1665 = vmatpush1.bf16.msra.mxu0 %v1652
    %1666 = vmatprep.subr.bf16.mxu0 0
    %1667 = vmatpush1.bf16.msra.mxu0 %v1651
    %1668 = vmatprep.subr.bf16.mxu0 0
    %1669 = vmatpush1.bf16.msra.mxu0 %v1650
    %1670 = vmatprep.subr.bf16.mxu0 0
    %1671 = vmatpush1.bf16.msra.mxu0 %v1649
    %1672 = vmatprep.subr.bf16.mxu0 0
    %1673 = vmatpush1.bf16.msra.mxu0 %v1648
    %1674 = vmatprep.subr.bf16.mxu0 0
    %1675 = vmatpush1.bf16.msra.mxu0 %v1647
    %1676 = vmatprep.subr.bf16.mxu0 0
    %1677 = vmatpush1.bf16.msra.mxu0 %v1646
    %1678 = vmatprep.subr.bf16.mxu0 0
    %1679 = vmatpush2.bf16.msra.mxu0 0
    %1680 = vmatprep.subr.bf16.mxu0 0
    %1681 = vmatpush2.bf16.msra.mxu0 0
    %1682 = vmatprep.subr.bf16.mxu0 0
    %1683 = vmatpush2.bf16.msra.mxu0 0
    %1684 = vmatprep.subr.bf16.mxu0 0
    %1685 = vmatpush2.bf16.msra.mxu0 0
    %1686 = vmatprep.subr.bf16.mxu0 0
    %1687 = vmatpush2.bf16.msra.mxu0 0
    %1688 = vmatprep.subr.bf16.mxu0 0
    %1689 = vmatpush2.bf16.msra.mxu0 0
    %1690 = vmatprep.subr.bf16.mxu0 0
    %1691 = vmatpush2.bf16.msra.mxu0 0
    %1692 = vmatprep.subr.bf16.mxu0 0
    %1693 = vmatpush2.bf16.msra.mxu0 0
    %1694 = vmatprep.mubr.bf16.mxu0 0
    %1695 = vmatmul.mubr.bf16.gmra.mxu0 %v1596
    %v1696 = vpop.f32.mrf.mxu0
    %v1697 = vadd.f32 0.0, %v1696
    %v1698 = vpop.f32.mrf.mxu0
    %v1699 = vpop.f32.mrf.mxu0
    %v1700 = vpop.f32.mrf.mxu0
    %1701 = vdwg.mxu0
    %v1702 = vadd.f32 %v1595, %v1697
    %v1703 = vpack.c.bf16 %v1256, %v1256
    %s1704 = scalar_lea.vmem [#allocation5], 256
    %v1705 = vld [vmem:[%s1704] sm:$0xf]
    %v1706 = vld [vmem:[%s1704 + $0x4] sm:$0xf]
    %v1707 = vld [vmem:[%s1704 + $0x8] sm:$0xf]
    %v1708 = vld [vmem:[%s1704 + $0xc] sm:$0xf]
    %v1709 = vld [vmem:[%s1704 + $0x10] sm:$0xf]
    %v1710 = vld [vmem:[%s1704 + $0x14] sm:$0xf]
    %v1711 = vld [vmem:[%s1704 + $0x18] sm:$0xf]
    %v1712 = vld [vmem:[%s1704 + $0x1c] sm:$0xf]
    %v1713 = vld [vmem:[%s1704 + $0x20] sm:$0xf]
    %v1714 = vld [vmem:[%s1704 + $0x24] sm:$0xf]
    %v1715 = vld [vmem:[%s1704 + $0x28] sm:$0xf]
    %v1716 = vld [vmem:[%s1704 + $0x2c] sm:$0xf]
    %v1717 = vld [vmem:[%s1704 + $0x30] sm:$0xf]
    %v1718 = vld [vmem:[%s1704 + $0x34] sm:$0xf]
    %v1719 = vld [vmem:[%s1704 + $0x38] sm:$0xf]
    %v1720 = vld [vmem:[%s1704 + $0x3c] sm:$0xf]
    %v1737 = vunpack.c.l.b16 %v1705
    %v1738 = vunpack.c.l.b16 %v1706
    %v1739 = vunpack.c.l.b16 %v1707
    %v1740 = vunpack.c.l.b16 %v1708
    %v1741 = vunpack.c.l.b16 %v1709
    %v1742 = vunpack.c.l.b16 %v1710
    %v1743 = vunpack.c.l.b16 %v1711
    %v1744 = vunpack.c.l.b16 %v1712
    %v1745 = vunpack.c.l.b16 %v1713
    %v1746 = vunpack.c.l.b16 %v1714
    %v1747 = vunpack.c.l.b16 %v1715
    %v1748 = vunpack.c.l.b16 %v1716
    %v1749 = vunpack.c.l.b16 %v1717
    %v1750 = vunpack.c.l.b16 %v1718
    %v1751 = vunpack.c.l.b16 %v1719
    %v1752 = vunpack.c.l.b16 %v1720
    %v1753 = vpack.c.b16 %v1738, %v1737
    %v1754 = vpack.c.b16 %v1740, %v1739
    %v1755 = vpack.c.b16 %v1742, %v1741
    %v1756 = vpack.c.b16 %v1744, %v1743
    %v1757 = vpack.c.b16 %v1746, %v1745
    %v1758 = vpack.c.b16 %v1748, %v1747
    %v1759 = vpack.c.b16 %v1750, %v1749
    %v1760 = vpack.c.b16 %v1752, %v1751
    %1769 = vmatprep.subr.bf16.mxu0 0
    %1770 = vmatpush1.bf16.msra.mxu0 %v1760
    %1771 = vmatprep.subr.bf16.mxu0 0
    %1772 = vmatpush1.bf16.msra.mxu0 %v1759
    %1773 = vmatprep.subr.bf16.mxu0 0
    %1774 = vmatpush1.bf16.msra.mxu0 %v1758
    %1775 = vmatprep.subr.bf16.mxu0 0
    %1776 = vmatpush1.bf16.msra.mxu0 %v1757
    %1777 = vmatprep.subr.bf16.mxu0 0
    %1778 = vmatpush1.bf16.msra.mxu0 %v1756
    %1779 = vmatprep.subr.bf16.mxu0 0
    %1780 = vmatpush1.bf16.msra.mxu0 %v1755
    %1781 = vmatprep.subr.bf16.mxu0 0
    %1782 = vmatpush1.bf16.msra.mxu0 %v1754
    %1783 = vmatprep.subr.bf16.mxu0 0
    %1784 = vmatpush1.bf16.msra.mxu0 %v1753
    %1785 = vmatprep.subr.bf16.mxu0 0
    %1786 = vmatpush2.bf16.msra.mxu0 0
    %1787 = vmatprep.subr.bf16.mxu0 0
    %1788 = vmatpush2.bf16.msra.mxu0 0
    %1789 = vmatprep.subr.bf16.mxu0 0
    %1790 = vmatpush2.bf16.msra.mxu0 0
    %1791 = vmatprep.subr.bf16.mxu0 0
    %1792 = vmatpush2.bf16.msra.mxu0 0
    %1793 = vmatprep.subr.bf16.mxu0 0
    %1794 = vmatpush2.bf16.msra.mxu0 0
    %1795 = vmatprep.subr.bf16.mxu0 0
    %1796 = vmatpush2.bf16.msra.mxu0 0
    %1797 = vmatprep.subr.bf16.mxu0 0
    %1798 = vmatpush2.bf16.msra.mxu0 0
    %1799 = vmatprep.subr.bf16.mxu0 0
    %1800 = vmatpush2.bf16.msra.mxu0 0
    %1801 = vmatprep.mubr.bf16.mxu0 0
    %1802 = vmatmul.mubr.bf16.gmra.mxu0 %v1703
    %v1803 = vpop.f32.mrf.mxu0
    %v1804 = vadd.f32 0.0, %v1803
    %v1805 = vpop.f32.mrf.mxu0
    %v1806 = vpop.f32.mrf.mxu0
    %v1807 = vpop.f32.mrf.mxu0
    %1808 = vdwg.mxu0
    %v1809 = vadd.f32 %v1702, %v1804
    %v1810 = vpack.c.bf16 %v1257, %v1257
    %s1811 = scalar_lea.vmem [#allocation5], 320
    %v1812 = vld [vmem:[%s1811] sm:$0xf]
    %v1813 = vld [vmem:[%s1811 + $0x4] sm:$0xf]
    %v1814 = vld [vmem:[%s1811 + $0x8] sm:$0xf]
    %v1815 = vld [vmem:[%s1811 + $0xc] sm:$0xf]
    %v1816 = vld [vmem:[%s1811 + $0x10] sm:$0xf]
    %v1817 = vld [vmem:[%s1811 + $0x14] sm:$0xf]
    %v1818 = vld [vmem:[%s1811 + $0x18] sm:$0xf]
    %v1819 = vld [vmem:[%s1811 + $0x1c] sm:$0xf]
    %v1820 = vld [vmem:[%s1811 + $0x20] sm:$0xf]
    %v1821 = vld [vmem:[%s1811 + $0x24] sm:$0xf]
    %v1822 = vld [vmem:[%s1811 + $0x28] sm:$0xf]
    %v1823 = vld [vmem:[%s1811 + $0x2c] sm:$0xf]
    %v1824 = vld [vmem:[%s1811 + $0x30] sm:$0xf]
    %v1825 = vld [vmem:[%s1811 + $0x34] sm:$0xf]
    %v1826 = vld [vmem:[%s1811 + $0x38] sm:$0xf]
    %v1827 = vld [vmem:[%s1811 + $0x3c] sm:$0xf]
    %v1844 = vunpack.c.l.b16 %v1812
    %v1845 = vunpack.c.l.b16 %v1813
    %v1846 = vunpack.c.l.b16 %v1814
    %v1847 = vunpack.c.l.b16 %v1815
    %v1848 = vunpack.c.l.b16 %v1816
    %v1849 = vunpack.c.l.b16 %v1817
    %v1850 = vunpack.c.l.b16 %v1818
    %v1851 = vunpack.c.l.b16 %v1819
    %v1852 = vunpack.c.l.b16 %v1820
    %v1853 = vunpack.c.l.b16 %v1821
    %v1854 = vunpack.c.l.b16 %v1822
    %v1855 = vunpack.c.l.b16 %v1823
    %v1856 = vunpack.c.l.b16 %v1824
    %v1857 = vunpack.c.l.b16 %v1825
    %v1858 = vunpack.c.l.b16 %v1826
    %v1859 = vunpack.c.l.b16 %v1827
    %v1860 = vpack.c.b16 %v1845, %v1844
    %v1861 = vpack.c.b16 %v1847, %v1846
    %v1862 = vpack.c.b16 %v1849, %v1848
    %v1863 = vpack.c.b16 %v1851, %v1850
    %v1864 = vpack.c.b16 %v1853, %v1852
    %v1865 = vpack.c.b16 %v1855, %v1854
    %v1866 = vpack.c.b16 %v1857, %v1856
    %v1867 = vpack.c.b16 %v1859, %v1858
    %1876 = vmatprep.subr.bf16.mxu0 0
    %1877 = vmatpush1.bf16.msra.mxu0 %v1867
    %1878 = vmatprep.subr.bf16.mxu0 0
    %1879 = vmatpush1.bf16.msra.mxu0 %v1866
    %1880 = vmatprep.subr.bf16.mxu0 0
    %1881 = vmatpush1.bf16.msra.mxu0 %v1865
    %1882 = vmatprep.subr.bf16.mxu0 0
    %1883 = vmatpush1.bf16.msra.mxu0 %v1864
    %1884 = vmatprep.subr.bf16.mxu0 0
    %1885 = vmatpush1.bf16.msra.mxu0 %v1863
    %1886 = vmatprep.subr.bf16.mxu0 0
    %1887 = vmatpush1.bf16.msra.mxu0 %v1862
    %1888 = vmatprep.subr.bf16.mxu0 0
    %1889 = vmatpush1.bf16.msra.mxu0 %v1861
    %1890 = vmatprep.subr.bf16.mxu0 0
    %1891 = vmatpush1.bf16.msra.mxu0 %v1860
    %1892 = vmatprep.subr.bf16.mxu0 0
    %1893 = vmatpush2.bf16.msra.mxu0 0
    %1894 = vmatprep.subr.bf16.mxu0 0
    %1895 = vmatpush2.bf16.msra.mxu0 0
    %1896 = vmatprep.subr.bf16.mxu0 0
    %1897 = vmatpush2.bf16.msra.mxu0 0
    %1898 = vmatprep.subr.bf16.mxu0 0
    %1899 = vmatpush2.bf16.msra.mxu0 0
    %1900 = vmatprep.subr.bf16.mxu0 0
    %1901 = vmatpush2.bf16.msra.mxu0 0
    %1902 = vmatprep.subr.bf16.mxu0 0
    %1903 = vmatpush2.bf16.msra.mxu0 0
    %1904 = vmatprep.subr.bf16.mxu0 0
    %1905 = vmatpush2.bf16.msra.mxu0 0
    %1906 = vmatprep.subr.bf16.mxu0 0
    %1907 = vmatpush2.bf16.msra.mxu0 0
    %1908 = vmatprep.mubr.bf16.mxu0 0
    %1909 = vmatmul.mubr.bf16.gmra.mxu0 %v1810
    %v1910 = vpop.f32.mrf.mxu0
    %v1911 = vadd.f32 0.0, %v1910
    %v1912 = vpop.f32.mrf.mxu0
    %v1913 = vpop.f32.mrf.mxu0
    %v1914 = vpop.f32.mrf.mxu0
    %1915 = vdwg.mxu0
    %v1916 = vadd.f32 %v1809, %v1911
    %v1917 = vpack.c.bf16 %v1258, %v1258
    %s1918 = scalar_lea.vmem [#allocation5], 384
    %v1919 = vld [vmem:[%s1918] sm:$0xf]
    %v1920 = vld [vmem:[%s1918 + $0x4] sm:$0xf]
    %v1921 = vld [vmem:[%s1918 + $0x8] sm:$0xf]
    %v1922 = vld [vmem:[%s1918 + $0xc] sm:$0xf]
    %v1923 = vld [vmem:[%s1918 + $0x10] sm:$0xf]
    %v1924 = vld [vmem:[%s1918 + $0x14] sm:$0xf]
    %v1925 = vld [vmem:[%s1918 + $0x18] sm:$0xf]
    %v1926 = vld [vmem:[%s1918 + $0x1c] sm:$0xf]
    %v1927 = vld [vmem:[%s1918 + $0x20] sm:$0xf]
    %v1928 = vld [vmem:[%s1918 + $0x24] sm:$0xf]
    %v1929 = vld [vmem:[%s1918 + $0x28] sm:$0xf]
    %v1930 = vld [vmem:[%s1918 + $0x2c] sm:$0xf]
    %v1931 = vld [vmem:[%s1918 + $0x30] sm:$0xf]
    %v1932 = vld [vmem:[%s1918 + $0x34] sm:$0xf]
    %v1933 = vld [vmem:[%s1918 + $0x38] sm:$0xf]
    %v1934 = vld [vmem:[%s1918 + $0x3c] sm:$0xf]
    %v1951 = vunpack.c.l.b16 %v1919
    %v1952 = vunpack.c.l.b16 %v1920
    %v1953 = vunpack.c.l.b16 %v1921
    %v1954 = vunpack.c.l.b16 %v1922
    %v1955 = vunpack.c.l.b16 %v1923
    %v1956 = vunpack.c.l.b16 %v1924
    %v1957 = vunpack.c.l.b16 %v1925
    %v1958 = vunpack.c.l.b16 %v1926
    %v1959 = vunpack.c.l.b16 %v1927
    %v1960 = vunpack.c.l.b16 %v1928
    %v1961 = vunpack.c.l.b16 %v1929
    %v1962 = vunpack.c.l.b16 %v1930
    %v1963 = vunpack.c.l.b16 %v1931
    %v1964 = vunpack.c.l.b16 %v1932
    %v1965 = vunpack.c.l.b16 %v1933
    %v1966 = vunpack.c.l.b16 %v1934
    %v1967 = vpack.c.b16 %v1952, %v1951
    %v1968 = vpack.c.b16 %v1954, %v1953
    %v1969 = vpack.c.b16 %v1956, %v1955
    %v1970 = vpack.c.b16 %v1958, %v1957
    %v1971 = vpack.c.b16 %v1960, %v1959
    %v1972 = vpack.c.b16 %v1962, %v1961
    %v1973 = vpack.c.b16 %v1964, %v1963
    %v1974 = vpack.c.b16 %v1966, %v1965
    %1983 = vmatprep.subr.bf16.mxu0 0
    %1984 = vmatpush1.bf16.msra.mxu0 %v1974
    %1985 = vmatprep.subr.bf16.mxu0 0
    %1986 = vmatpush1.bf16.msra.mxu0 %v1973
    %1987 = vmatprep.subr.bf16.mxu0 0
    %1988 = vmatpush1.bf16.msra.mxu0 %v1972
    %1989 = vmatprep.subr.bf16.mxu0 0
    %1990 = vmatpush1.bf16.msra.mxu0 %v1971
    %1991 = vmatprep.subr.bf16.mxu0 0
    %1992 = vmatpush1.bf16.msra.mxu0 %v1970
    %1993 = vmatprep.subr.bf16.mxu0 0
    %1994 = vmatpush1.bf16.msra.mxu0 %v1969
    %1995 = vmatprep.subr.bf16.mxu0 0
    %1996 = vmatpush1.bf16.msra.mxu0 %v1968
    %1997 = vmatprep.subr.bf16.mxu0 0
    %1998 = vmatpush1.bf16.msra.mxu0 %v1967
    %1999 = vmatprep.subr.bf16.mxu0 0
    %2000 = vmatpush2.bf16.msra.mxu0 0
    %2001 = vmatprep.subr.bf16.mxu0 0
    %2002 = vmatpush2.bf16.msra.mxu0 0
    %2003 = vmatprep.subr.bf16.mxu0 0
    %2004 = vmatpush2.bf16.msra.mxu0 0
    %2005 = vmatprep.subr.bf16.mxu0 0
    %2006 = vmatpush2.bf16.msra.mxu0 0
    %2007 = vmatprep.subr.bf16.mxu0 0
    %2008 = vmatpush2.bf16.msra.mxu0 0
    %2009 = vmatprep.subr.bf16.mxu0 0
    %2010 = vmatpush2.bf16.msra.mxu0 0
    %2011 = vmatprep.subr.bf16.mxu0 0
    %2012 = vmatpush2.bf16.msra.mxu0 0
    %2013 = vmatprep.subr.bf16.mxu0 0
    %2014 = vmatpush2.bf16.msra.mxu0 0
    %2015 = vmatprep.mubr.bf16.mxu0 0
    %2016 = vmatmul.mubr.bf16.gmra.mxu0 %v1917
    %v2017 = vpop.f32.mrf.mxu0
    %v2018 = vadd.f32 0.0, %v2017
    %v2019 = vpop.f32.mrf.mxu0
    %v2020 = vpop.f32.mrf.mxu0
    %v2021 = vpop.f32.mrf.mxu0
    %2022 = vdwg.mxu0
    %v2023 = vadd.f32 %v1916, %v2018
    %v2024 = vpack.c.bf16 %v1259, %v1259
    %s2025 = scalar_lea.vmem [#allocation5], 448
    %v2026 = vld [vmem:[%s2025] sm:$0xf]
    %v2027 = vld [vmem:[%s2025 + $0x4] sm:$0xf]
    %v2028 = vld [vmem:[%s2025 + $0x8] sm:$0xf]
    %v2029 = vld [vmem:[%s2025 + $0xc] sm:$0xf]
    %v2030 = vld [vmem:[%s2025 + $0x10] sm:$0xf]
    %v2031 = vld [vmem:[%s2025 + $0x14] sm:$0xf]
    %v2032 = vld [vmem:[%s2025 + $0x18] sm:$0xf]
    %v2033 = vld [vmem:[%s2025 + $0x1c] sm:$0xf]
    %v2034 = vld [vmem:[%s2025 + $0x20] sm:$0xf]
    %v2035 = vld [vmem:[%s2025 + $0x24] sm:$0xf]
    %v2036 = vld [vmem:[%s2025 + $0x28] sm:$0xf]
    %v2037 = vld [vmem:[%s2025 + $0x2c] sm:$0xf]
    %v2038 = vld [vmem:[%s2025 + $0x30] sm:$0xf]
    %v2039 = vld [vmem:[%s2025 + $0x34] sm:$0xf]
    %v2040 = vld [vmem:[%s2025 + $0x38] sm:$0xf]
    %v2041 = vld [vmem:[%s2025 + $0x3c] sm:$0xf]
    %v2058 = vunpack.c.l.b16 %v2026
    %v2059 = vunpack.c.l.b16 %v2027
    %v2060 = vunpack.c.l.b16 %v2028
    %v2061 = vunpack.c.l.b16 %v2029
    %v2062 = vunpack.c.l.b16 %v2030
    %v2063 = vunpack.c.l.b16 %v2031
    %v2064 = vunpack.c.l.b16 %v2032
    %v2065 = vunpack.c.l.b16 %v2033
    %v2066 = vunpack.c.l.b16 %v2034
    %v2067 = vunpack.c.l.b16 %v2035
    %v2068 = vunpack.c.l.b16 %v2036
    %v2069 = vunpack.c.l.b16 %v2037
    %v2070 = vunpack.c.l.b16 %v2038
    %v2071 = vunpack.c.l.b16 %v2039
    %v2072 = vunpack.c.l.b16 %v2040
    %v2073 = vunpack.c.l.b16 %v2041
    %v2074 = vpack.c.b16 %v2059, %v2058
    %v2075 = vpack.c.b16 %v2061, %v2060
    %v2076 = vpack.c.b16 %v2063, %v2062
    %v2077 = vpack.c.b16 %v2065, %v2064
    %v2078 = vpack.c.b16 %v2067, %v2066
    %v2079 = vpack.c.b16 %v2069, %v2068
    %v2080 = vpack.c.b16 %v2071, %v2070
    %v2081 = vpack.c.b16 %v2073, %v2072
    %2090 = vmatprep.subr.bf16.mxu0 0
    %2091 = vmatpush1.bf16.msra.mxu0 %v2081
    %2092 = vmatprep.subr.bf16.mxu0 0
    %2093 = vmatpush1.bf16.msra.mxu0 %v2080
    %2094 = vmatprep.subr.bf16.mxu0 0
    %2095 = vmatpush1.bf16.msra.mxu0 %v2079
    %2096 = vmatprep.subr.bf16.mxu0 0
    %2097 = vmatpush1.bf16.msra.mxu0 %v2078
    %2098 = vmatprep.subr.bf16.mxu0 0
    %2099 = vmatpush1.bf16.msra.mxu0 %v2077
    %2100 = vmatprep.subr.bf16.mxu0 0
    %2101 = vmatpush1.bf16.msra.mxu0 %v2076
    %2102 = vmatprep.subr.bf16.mxu0 0
    %2103 = vmatpush1.bf16.msra.mxu0 %v2075
    %2104 = vmatprep.subr.bf16.mxu0 0
    %2105 = vmatpush1.bf16.msra.mxu0 %v2074
    %2106 = vmatprep.subr.bf16.mxu0 0
    %2107 = vmatpush2.bf16.msra.mxu0 0
    %2108 = vmatprep.subr.bf16.mxu0 0
    %2109 = vmatpush2.bf16.msra.mxu0 0
    %2110 = vmatprep.subr.bf16.mxu0 0
    %2111 = vmatpush2.bf16.msra.mxu0 0
    %2112 = vmatprep.subr.bf16.mxu0 0
    %2113 = vmatpush2.bf16.msra.mxu0 0
    %2114 = vmatprep.subr.bf16.mxu0 0
    %2115 = vmatpush2.bf16.msra.mxu0 0
    %2116 = vmatprep.subr.bf16.mxu0 0
    %2117 = vmatpush2.bf16.msra.mxu0 0
    %2118 = vmatprep.subr.bf16.mxu0 0
    %2119 = vmatpush2.bf16.msra.mxu0 0
    %2120 = vmatprep.subr.bf16.mxu0 0
    %2121 = vmatpush2.bf16.msra.mxu0 0
    %2122 = vmatprep.mubr.bf16.mxu0 0
    %2123 = vmatmul.mubr.bf16.gmra.mxu0 %v2024
    %v2124 = vpop.f32.mrf.mxu0
    %v2125 = vadd.f32 0.0, %v2124
    %v2126 = vpop.f32.mrf.mxu0
    %v2127 = vpop.f32.mrf.mxu0
    %v2128 = vpop.f32.mrf.mxu0
    %2129 = vdwg.mxu0
    %v2130 = vadd.f32 %v2023, %v2125
    %v2131 = vmax.f32 %v2130, 0.0
    %2132 = vst [vmem:[#allocation14] sm:$0xff] %v2131
    %v2133 = vpack.c.bf16 %v2131, %v2131
    %v2134 = vld [vmem:[#allocation7] sm:$0xf]
    %v2135 = vld [vmem:[#allocation7 + $0x4] sm:$0xf]
    %v2136 = vld [vmem:[#allocation7 + $0x8] sm:$0xf]
    %v2137 = vld [vmem:[#allocation7 + $0xc] sm:$0xf]
    %v2138 = vld [vmem:[#allocation7 + $0x10] sm:$0xf]
    %v2139 = vld [vmem:[#allocation7 + $0x14] sm:$0xf]
    %v2140 = vld [vmem:[#allocation7 + $0x18] sm:$0xf]
    %v2141 = vld [vmem:[#allocation7 + $0x1c] sm:$0xf]
    %v2142 = vld [vmem:[#allocation7 + $0x20] sm:$0xf]
    %v2143 = vld [vmem:[#allocation7 + $0x24] sm:$0xf]
    %v2144 = vld [vmem:[#allocation7 + $0x28] sm:$0xf]
    %v2145 = vld [vmem:[#allocation7 + $0x2c] sm:$0xf]
    %v2146 = vld [vmem:[#allocation7 + $0x30] sm:$0xf]
    %v2147 = vld [vmem:[#allocation7 + $0x34] sm:$0xf]
    %v2148 = vld [vmem:[#allocation7 + $0x38] sm:$0xf]
    %v2149 = vld [vmem:[#allocation7 + $0x3c] sm:$0xf]
    %v2150 = vld [vmem:[%s15] sm:$0x1]
    %v2152 = vlaneseq
    %v2153 = vshrl.u32 %v2152, 7
    %v2154 = vsub.s32 0, %v2153
    %v2155 = vrot.slane %v2150, %v2154
    %v2173 = vunpack.c.l.b16 %v2134
    %v2174 = vunpack.c.l.b16 %v2135
    %v2175 = vunpack.c.l.b16 %v2136
    %v2176 = vunpack.c.l.b16 %v2137
    %v2177 = vunpack.c.l.b16 %v2138
    %v2178 = vunpack.c.l.b16 %v2139
    %v2179 = vunpack.c.l.b16 %v2140
    %v2180 = vunpack.c.l.b16 %v2141
    %v2181 = vunpack.c.l.b16 %v2142
    %v2182 = vunpack.c.l.b16 %v2143
    %v2183 = vunpack.c.l.b16 %v2144
    %v2184 = vunpack.c.l.b16 %v2145
    %v2185 = vunpack.c.l.b16 %v2146
    %v2186 = vunpack.c.l.b16 %v2147
    %v2187 = vunpack.c.l.b16 %v2148
    %v2188 = vunpack.c.l.b16 %v2149
    %v2189 = vpack.c.b16 %v2174, %v2173
    %v2190 = vpack.c.b16 %v2176, %v2175
    %v2191 = vpack.c.b16 %v2178, %v2177
    %v2192 = vpack.c.b16 %v2180, %v2179
    %v2193 = vpack.c.b16 %v2182, %v2181
    %v2194 = vpack.c.b16 %v2184, %v2183
    %v2195 = vpack.c.b16 %v2186, %v2185
    %v2196 = vpack.c.b16 %v2188, %v2187
    %2205 = vmatprep.subr.bf16.mxu0 0
    %2206 = vmatpush1.bf16.msra.mxu0 %v2196
    %2207 = vmatprep.subr.bf16.mxu0 0
    %2208 = vmatpush1.bf16.msra.mxu0 %v2195
    %2209 = vmatprep.subr.bf16.mxu0 0
    %2210 = vmatpush1.bf16.msra.mxu0 %v2194
    %2211 = vmatprep.subr.bf16.mxu0 0
    %2212 = vmatpush1.bf16.msra.mxu0 %v2193
    %2213 = vmatprep.subr.bf16.mxu0 0
    %2214 = vmatpush1.bf16.msra.mxu0 %v2192
    %2215 = vmatprep.subr.bf16.mxu0 0
    %2216 = vmatpush1.bf16.msra.mxu0 %v2191
    %2217 = vmatprep.subr.bf16.mxu0 0
    %2218 = vmatpush1.bf16.msra.mxu0 %v2190
    %2219 = vmatprep.subr.bf16.mxu0 0
    %2220 = vmatpush1.bf16.msra.mxu0 %v2189
    %2221 = vmatprep.subr.bf16.mxu0 0
    %2222 = vmatpush2.bf16.msra.mxu0 0
    %2223 = vmatprep.subr.bf16.mxu0 0
    %2224 = vmatpush2.bf16.msra.mxu0 0
    %2225 = vmatprep.subr.bf16.mxu0 0
    %2226 = vmatpush2.bf16.msra.mxu0 0
    %2227 = vmatprep.subr.bf16.mxu0 0
    %2228 = vmatpush2.bf16.msra.mxu0 0
    %2229 = vmatprep.subr.bf16.mxu0 0
    %2230 = vmatpush2.bf16.msra.mxu0 0
    %2231 = vmatprep.subr.bf16.mxu0 0
    %2232 = vmatpush2.bf16.msra.mxu0 0
    %2233 = vmatprep.subr.bf16.mxu0 0
    %2234 = vmatpush2.bf16.msra.mxu0 0
    %2235 = vmatprep.subr.bf16.mxu0 0
    %2236 = vmatpush2.bf16.msra.mxu0 0
    %2237 = vmatprep.mubr.bf16.mxu0 0
    %2238 = vmatmul.mubr.bf16.gmra.mxu0 %v2133
    %v2239 = vpop.f32.mrf.mxu0
    %v2240 = vadd.f32 %v2155, %v2239
    %v2241 = vpop.f32.mrf.mxu0
    %v2242 = vpop.f32.mrf.mxu0
    %v2243 = vpop.f32.mrf.mxu0
    %2244 = vdwg.mxu0
    %v2245 = vmax.f32 %v2240, 0.0
    %s2246 = scalar_lea.vmem [#allocation7], 64
    %v2247 = vld [vmem:[%s2246] sm:$0xf]
    %v2248 = vld [vmem:[%s2246 + $0x4] sm:$0xf]
    %v2249 = vld [vmem:[%s2246 + $0x8] sm:$0xf]
    %v2250 = vld [vmem:[%s2246 + $0xc] sm:$0xf]
    %v2251 = vld [vmem:[%s2246 + $0x10] sm:$0xf]
    %v2252 = vld [vmem:[%s2246 + $0x14] sm:$0xf]
    %v2253 = vld [vmem:[%s2246 + $0x18] sm:$0xf]
    %v2254 = vld [vmem:[%s2246 + $0x1c] sm:$0xf]
    %v2255 = vld [vmem:[%s2246 + $0x20] sm:$0xf]
    %v2256 = vld [vmem:[%s2246 + $0x24] sm:$0xf]
    %v2257 = vld [vmem:[%s2246 + $0x28] sm:$0xf]
    %v2258 = vld [vmem:[%s2246 + $0x2c] sm:$0xf]
    %v2259 = vld [vmem:[%s2246 + $0x30] sm:$0xf]
    %v2260 = vld [vmem:[%s2246 + $0x34] sm:$0xf]
    %v2261 = vld [vmem:[%s2246 + $0x38] sm:$0xf]
    %v2262 = vld [vmem:[%s2246 + $0x3c] sm:$0xf]
    %s2263 = scalar_lea.vmem %s15, 1
    %v2264 = vld [vmem:[%s2263] sm:$0x1]
    %v2266 = vlaneseq
    %v2267 = vshrl.u32 %v2266, 7
    %v2268 = vsub.s32 0, %v2267
    %v2269 = vrot.slane %v2264, %v2268
    %v2287 = vunpack.c.l.b16 %v2247
    %v2288 = vunpack.c.l.b16 %v2248
    %v2289 = vunpack.c.l.b16 %v2249
    %v2290 = vunpack.c.l.b16 %v2250
    %v2291 = vunpack.c.l.b16 %v2251
    %v2292 = vunpack.c.l.b16 %v2252
    %v2293 = vunpack.c.l.b16 %v2253
    %v2294 = vunpack.c.l.b16 %v2254
    %v2295 = vunpack.c.l.b16 %v2255
    %v2296 = vunpack.c.l.b16 %v2256
    %v2297 = vunpack.c.l.b16 %v2257
    %v2298 = vunpack.c.l.b16 %v2258
    %v2299 = vunpack.c.l.b16 %v2259
    %v2300 = vunpack.c.l.b16 %v2260
    %v2301 = vunpack.c.l.b16 %v2261
    %v2302 = vunpack.c.l.b16 %v2262
    %v2303 = vpack.c.b16 %v2288, %v2287
    %v2304 = vpack.c.b16 %v2290, %v2289
    %v2305 = vpack.c.b16 %v2292, %v2291
    %v2306 = vpack.c.b16 %v2294, %v2293
    %v2307 = vpack.c.b16 %v2296, %v2295
    %v2308 = vpack.c.b16 %v2298, %v2297
    %v2309 = vpack.c.b16 %v2300, %v2299
    %v2310 = vpack.c.b16 %v2302, %v2301
    %2319 = vmatprep.subr.bf16.mxu0 0
    %2320 = vmatpush1.bf16.msra.mxu0 %v2310
    %2321 = vmatprep.subr.bf16.mxu0 0
    %2322 = vmatpush1.bf16.msra.mxu0 %v2309
    %2323 = vmatprep.subr.bf16.mxu0 0
    %2324 = vmatpush1.bf16.msra.mxu0 %v2308
    %2325 = vmatprep.subr.bf16.mxu0 0
    %2326 = vmatpush1.bf16.msra.mxu0 %v2307
    %2327 = vmatprep.subr.bf16.mxu0 0
    %2328 = vmatpush1.bf16.msra.mxu0 %v2306
    %2329 = vmatprep.subr.bf16.mxu0 0
    %2330 = vmatpush1.bf16.msra.mxu0 %v2305
    %2331 = vmatprep.subr.bf16.mxu0 0
    %2332 = vmatpush1.bf16.msra.mxu0 %v2304
    %2333 = vmatprep.subr.bf16.mxu0 0
    %2334 = vmatpush1.bf16.msra.mxu0 %v2303
    %2335 = vmatprep.subr.bf16.mxu0 0
    %2336 = vmatpush2.bf16.msra.mxu0 0
    %2337 = vmatprep.subr.bf16.mxu0 0
    %2338 = vmatpush2.bf16.msra.mxu0 0
    %2339 = vmatprep.subr.bf16.mxu0 0
    %2340 = vmatpush2.bf16.msra.mxu0 0
    %2341 = vmatprep.subr.bf16.mxu0 0
    %2342 = vmatpush2.bf16.msra.mxu0 0
    %2343 = vmatprep.subr.bf16.mxu0 0
    %2344 = vmatpush2.bf16.msra.mxu0 0
    %2345 = vmatprep.subr.bf16.mxu0 0
    %2346 = vmatpush2.bf16.msra.mxu0 0
    %2347 = vmatprep.subr.bf16.mxu0 0
    %2348 = vmatpush2.bf16.msra.mxu0 0
    %2349 = vmatprep.subr.bf16.mxu0 0
    %2350 = vmatpush2.bf16.msra.mxu0 0
    %2351 = vmatprep.mubr.bf16.mxu0 0
    %2352 = vmatmul.mubr.bf16.gmra.mxu0 %v2133
    %v2353 = vpop.f32.mrf.mxu0
    %v2354 = vadd.f32 %v2269, %v2353
    %v2355 = vpop.f32.mrf.mxu0
    %v2356 = vpop.f32.mrf.mxu0
    %v2357 = vpop.f32.mrf.mxu0
    %2358 = vdwg.mxu0
    %v2359 = vmax.f32 %v2354, 0.0
    %s2360 = scalar_lea.vmem [#allocation7], 128
    %v2361 = vld [vmem:[%s2360] sm:$0xf]
    %v2362 = vld [vmem:[%s2360 + $0x4] sm:$0xf]
    %v2363 = vld [vmem:[%s2360 + $0x8] sm:$0xf]
    %v2364 = vld [vmem:[%s2360 + $0xc] sm:$0xf]
    %v2365 = vld [vmem:[%s2360 + $0x10] sm:$0xf]
    %v2366 = vld [vmem:[%s2360 + $0x14] sm:$0xf]
    %v2367 = vld [vmem:[%s2360 + $0x18] sm:$0xf]
    %v2368 = vld [vmem:[%s2360 + $0x1c] sm:$0xf]
    %v2369 = vld [vmem:[%s2360 + $0x20] sm:$0xf]
    %v2370 = vld [vmem:[%s2360 + $0x24] sm:$0xf]
    %v2371 = vld [vmem:[%s2360 + $0x28] sm:$0xf]
    %v2372 = vld [vmem:[%s2360 + $0x2c] sm:$0xf]
    %v2373 = vld [vmem:[%s2360 + $0x30] sm:$0xf]
    %v2374 = vld [vmem:[%s2360 + $0x34] sm:$0xf]
    %v2375 = vld [vmem:[%s2360 + $0x38] sm:$0xf]
    %v2376 = vld [vmem:[%s2360 + $0x3c] sm:$0xf]
    %s2377 = scalar_lea.vmem %s15, 2
    %v2378 = vld [vmem:[%s2377] sm:$0x1]
    %v2380 = vlaneseq
    %v2381 = vshrl.u32 %v2380, 7
    %v2382 = vsub.s32 0, %v2381
    %v2383 = vrot.slane %v2378, %v2382
    %v2401 = vunpack.c.l.b16 %v2361
    %v2402 = vunpack.c.l.b16 %v2362
    %v2403 = vunpack.c.l.b16 %v2363
    %v2404 = vunpack.c.l.b16 %v2364
    %v2405 = vunpack.c.l.b16 %v2365
    %v2406 = vunpack.c.l.b16 %v2366
    %v2407 = vunpack.c.l.b16 %v2367
    %v2408 = vunpack.c.l.b16 %v2368
    %v2409 = vunpack.c.l.b16 %v2369
    %v2410 = vunpack.c.l.b16 %v2370
    %v2411 = vunpack.c.l.b16 %v2371
    %v2412 = vunpack.c.l.b16 %v2372
    %v2413 = vunpack.c.l.b16 %v2373
    %v2414 = vunpack.c.l.b16 %v2374
    %v2415 = vunpack.c.l.b16 %v2375
    %v2416 = vunpack.c.l.b16 %v2376
    %v2417 = vpack.c.b16 %v2402, %v2401
    %v2418 = vpack.c.b16 %v2404, %v2403
    %v2419 = vpack.c.b16 %v2406, %v2405
    %v2420 = vpack.c.b16 %v2408, %v2407
    %v2421 = vpack.c.b16 %v2410, %v2409
    %v2422 = vpack.c.b16 %v2412, %v2411
    %v2423 = vpack.c.b16 %v2414, %v2413
    %v2424 = vpack.c.b16 %v2416, %v2415
    %2433 = vmatprep.subr.bf16.mxu0 0
    %2434 = vmatpush1.bf16.msra.mxu0 %v2424
    %2435 = vmatprep.subr.bf16.mxu0 0
    %2436 = vmatpush1.bf16.msra.mxu0 %v2423
    %2437 = vmatprep.subr.bf16.mxu0 0
    %2438 = vmatpush1.bf16.msra.mxu0 %v2422
    %2439 = vmatprep.subr.bf16.mxu0 0
    %2440 = vmatpush1.bf16.msra.mxu0 %v2421
    %2441 = vmatprep.subr.bf16.mxu0 0
    %2442 = vmatpush1.bf16.msra.mxu0 %v2420
    %2443 = vmatprep.subr.bf16.mxu0 0
    %2444 = vmatpush1.bf16.msra.mxu0 %v2419
    %2445 = vmatprep.subr.bf16.mxu0 0
    %2446 = vmatpush1.bf16.msra.mxu0 %v2418
    %2447 = vmatprep.subr.bf16.mxu0 0
    %2448 = vmatpush1.bf16.msra.mxu0 %v2417
    %2449 = vmatprep.subr.bf16.mxu0 0
    %2450 = vmatpush2.bf16.msra.mxu0 0
    %2451 = vmatprep.subr.bf16.mxu0 0
    %2452 = vmatpush2.bf16.msra.mxu0 0
    %2453 = vmatprep.subr.bf16.mxu0 0
    %2454 = vmatpush2.bf16.msra.mxu0 0
    %2455 = vmatprep.subr.bf16.mxu0 0
    %2456 = vmatpush2.bf16.msra.mxu0 0
    %2457 = vmatprep.subr.bf16.mxu0 0
    %2458 = vmatpush2.bf16.msra.mxu0 0
    %2459 = vmatprep.subr.bf16.mxu0 0
    %2460 = vmatpush2.bf16.msra.mxu0 0
    %2461 = vmatprep.subr.bf16.mxu0 0
    %2462 = vmatpush2.bf16.msra.mxu0 0
    %2463 = vmatprep.subr.bf16.mxu0 0
    %2464 = vmatpush2.bf16.msra.mxu0 0
    %2465 = vmatprep.mubr.bf16.mxu0 0
    %2466 = vmatmul.mubr.bf16.gmra.mxu0 %v2133
    %v2467 = vpop.f32.mrf.mxu0
    %v2468 = vadd.f32 %v2383, %v2467
    %v2469 = vpop.f32.mrf.mxu0
    %v2470 = vpop.f32.mrf.mxu0
    %v2471 = vpop.f32.mrf.mxu0
    %2472 = vdwg.mxu0
    %v2473 = vmax.f32 %v2468, 0.0
    %s2474 = scalar_lea.vmem [#allocation7], 192
    %v2475 = vld [vmem:[%s2474] sm:$0xf]
    %v2476 = vld [vmem:[%s2474 + $0x4] sm:$0xf]
    %v2477 = vld [vmem:[%s2474 + $0x8] sm:$0xf]
    %v2478 = vld [vmem:[%s2474 + $0xc] sm:$0xf]
    %v2479 = vld [vmem:[%s2474 + $0x10] sm:$0xf]
    %v2480 = vld [vmem:[%s2474 + $0x14] sm:$0xf]
    %v2481 = vld [vmem:[%s2474 + $0x18] sm:$0xf]
    %v2482 = vld [vmem:[%s2474 + $0x1c] sm:$0xf]
    %v2483 = vld [vmem:[%s2474 + $0x20] sm:$0xf]
    %v2484 = vld [vmem:[%s2474 + $0x24] sm:$0xf]
    %v2485 = vld [vmem:[%s2474 + $0x28] sm:$0xf]
    %v2486 = vld [vmem:[%s2474 + $0x2c] sm:$0xf]
    %v2487 = vld [vmem:[%s2474 + $0x30] sm:$0xf]
    %v2488 = vld [vmem:[%s2474 + $0x34] sm:$0xf]
    %v2489 = vld [vmem:[%s2474 + $0x38] sm:$0xf]
    %v2490 = vld [vmem:[%s2474 + $0x3c] sm:$0xf]
    %s2491 = scalar_lea.vmem %s15, 3
    %v2492 = vld [vmem:[%s2491] sm:$0x1]
    %v2494 = vlaneseq
    %v2495 = vshrl.u32 %v2494, 7
    %v2496 = vsub.s32 0, %v2495
    %v2497 = vrot.slane %v2492, %v2496
    %v2515 = vunpack.c.l.b16 %v2475
    %v2516 = vunpack.c.l.b16 %v2476
    %v2517 = vunpack.c.l.b16 %v2477
    %v2518 = vunpack.c.l.b16 %v2478
    %v2519 = vunpack.c.l.b16 %v2479
    %v2520 = vunpack.c.l.b16 %v2480
    %v2521 = vunpack.c.l.b16 %v2481
    %v2522 = vunpack.c.l.b16 %v2482
    %v2523 = vunpack.c.l.b16 %v2483
    %v2524 = vunpack.c.l.b16 %v2484
    %v2525 = vunpack.c.l.b16 %v2485
    %v2526 = vunpack.c.l.b16 %v2486
    %v2527 = vunpack.c.l.b16 %v2487
    %v2528 = vunpack.c.l.b16 %v2488
    %v2529 = vunpack.c.l.b16 %v2489
    %v2530 = vunpack.c.l.b16 %v2490
    %v2531 = vpack.c.b16 %v2516, %v2515
    %v2532 = vpack.c.b16 %v2518, %v2517
    %v2533 = vpack.c.b16 %v2520, %v2519
    %v2534 = vpack.c.b16 %v2522, %v2521
    %v2535 = vpack.c.b16 %v2524, %v2523
    %v2536 = vpack.c.b16 %v2526, %v2525
    %v2537 = vpack.c.b16 %v2528, %v2527
    %v2538 = vpack.c.b16 %v2530, %v2529
    %2547 = vmatprep.subr.bf16.mxu0 0
    %2548 = vmatpush1.bf16.msra.mxu0 %v2538
    %2549 = vmatprep.subr.bf16.mxu0 0
    %2550 = vmatpush1.bf16.msra.mxu0 %v2537
    %2551 = vmatprep.subr.bf16.mxu0 0
    %2552 = vmatpush1.bf16.msra.mxu0 %v2536
    %2553 = vmatprep.subr.bf16.mxu0 0
    %2554 = vmatpush1.bf16.msra.mxu0 %v2535
    %2555 = vmatprep.subr.bf16.mxu0 0
    %2556 = vmatpush1.bf16.msra.mxu0 %v2534
    %2557 = vmatprep.subr.bf16.mxu0 0
    %2558 = vmatpush1.bf16.msra.mxu0 %v2533
    %2559 = vmatprep.subr.bf16.mxu0 0
    %2560 = vmatpush1.bf16.msra.mxu0 %v2532
    %2561 = vmatprep.subr.bf16.mxu0 0
    %2562 = vmatpush1.bf16.msra.mxu0 %v2531
    %2563 = vmatprep.subr.bf16.mxu0 0
    %2564 = vmatpush2.bf16.msra.mxu0 0
    %2565 = vmatprep.subr.bf16.mxu0 0
    %2566 = vmatpush2.bf16.msra.mxu0 0
    %2567 = vmatprep.subr.bf16.mxu0 0
    %2568 = vmatpush2.bf16.msra.mxu0 0
    %2569 = vmatprep.subr.bf16.mxu0 0
    %2570 = vmatpush2.bf16.msra.mxu0 0
    %2571 = vmatprep.subr.bf16.mxu0 0
    %2572 = vmatpush2.bf16.msra.mxu0 0
    %2573 = vmatprep.subr.bf16.mxu0 0
    %2574 = vmatpush2.bf16.msra.mxu0 0
    %2575 = vmatprep.subr.bf16.mxu0 0
    %2576 = vmatpush2.bf16.msra.mxu0 0
    %2577 = vmatprep.subr.bf16.mxu0 0
    %2578 = vmatpush2.bf16.msra.mxu0 0
    %2579 = vmatprep.mubr.bf16.mxu0 0
    %2580 = vmatmul.mubr.bf16.gmra.mxu0 %v2133
    %v2581 = vpop.f32.mrf.mxu0
    %v2582 = vadd.f32 %v2497, %v2581
    %v2583 = vpop.f32.mrf.mxu0
    %v2584 = vpop.f32.mrf.mxu0
    %v2585 = vpop.f32.mrf.mxu0
    %2586 = vdwg.mxu0
    %v2587 = vmax.f32 %v2582, 0.0
    %s2588 = scalar_lea.vmem [#allocation7], 256
    %v2589 = vld [vmem:[%s2588] sm:$0xf]
    %v2590 = vld [vmem:[%s2588 + $0x4] sm:$0xf]
    %v2591 = vld [vmem:[%s2588 + $0x8] sm:$0xf]
    %v2592 = vld [vmem:[%s2588 + $0xc] sm:$0xf]
    %v2593 = vld [vmem:[%s2588 + $0x10] sm:$0xf]
    %v2594 = vld [vmem:[%s2588 + $0x14] sm:$0xf]
    %v2595 = vld [vmem:[%s2588 + $0x18] sm:$0xf]
    %v2596 = vld [vmem:[%s2588 + $0x1c] sm:$0xf]
    %v2597 = vld [vmem:[%s2588 + $0x20] sm:$0xf]
    %v2598 = vld [vmem:[%s2588 + $0x24] sm:$0xf]
    %v2599 = vld [vmem:[%s2588 + $0x28] sm:$0xf]
    %v2600 = vld [vmem:[%s2588 + $0x2c] sm:$0xf]
    %v2601 = vld [vmem:[%s2588 + $0x30] sm:$0xf]
    %v2602 = vld [vmem:[%s2588 + $0x34] sm:$0xf]
    %v2603 = vld [vmem:[%s2588 + $0x38] sm:$0xf]
    %v2604 = vld [vmem:[%s2588 + $0x3c] sm:$0xf]
    %s2605 = scalar_lea.vmem %s15, 4
    %v2606 = vld [vmem:[%s2605] sm:$0x1]
    %v2608 = vlaneseq
    %v2609 = vshrl.u32 %v2608, 7
    %v2610 = vsub.s32 0, %v2609
    %v2611 = vrot.slane %v2606, %v2610
    %v2629 = vunpack.c.l.b16 %v2589
    %v2630 = vunpack.c.l.b16 %v2590
    %v2631 = vunpack.c.l.b16 %v2591
    %v2632 = vunpack.c.l.b16 %v2592
    %v2633 = vunpack.c.l.b16 %v2593
    %v2634 = vunpack.c.l.b16 %v2594
    %v2635 = vunpack.c.l.b16 %v2595
    %v2636 = vunpack.c.l.b16 %v2596
    %v2637 = vunpack.c.l.b16 %v2597
    %v2638 = vunpack.c.l.b16 %v2598
    %v2639 = vunpack.c.l.b16 %v2599
    %v2640 = vunpack.c.l.b16 %v2600
    %v2641 = vunpack.c.l.b16 %v2601
    %v2642 = vunpack.c.l.b16 %v2602
    %v2643 = vunpack.c.l.b16 %v2603
    %v2644 = vunpack.c.l.b16 %v2604
    %v2645 = vpack.c.b16 %v2630, %v2629
    %v2646 = vpack.c.b16 %v2632, %v2631
    %v2647 = vpack.c.b16 %v2634, %v2633
    %v2648 = vpack.c.b16 %v2636, %v2635
    %v2649 = vpack.c.b16 %v2638, %v2637
    %v2650 = vpack.c.b16 %v2640, %v2639
    %v2651 = vpack.c.b16 %v2642, %v2641
    %v2652 = vpack.c.b16 %v2644, %v2643
    %2661 = vmatprep.subr.bf16.mxu0 0
    %2662 = vmatpush1.bf16.msra.mxu0 %v2652
    %2663 = vmatprep.subr.bf16.mxu0 0
    %2664 = vmatpush1.bf16.msra.mxu0 %v2651
    %2665 = vmatprep.subr.bf16.mxu0 0
    %2666 = vmatpush1.bf16.msra.mxu0 %v2650
    %2667 = vmatprep.subr.bf16.mxu0 0
    %2668 = vmatpush1.bf16.msra.mxu0 %v2649
    %2669 = vmatprep.subr.bf16.mxu0 0
    %2670 = vmatpush1.bf16.msra.mxu0 %v2648
    %2671 = vmatprep.subr.bf16.mxu0 0
    %2672 = vmatpush1.bf16.msra.mxu0 %v2647
    %2673 = vmatprep.subr.bf16.mxu0 0
    %2674 = vmatpush1.bf16.msra.mxu0 %v2646
    %2675 = vmatprep.subr.bf16.mxu0 0
    %2676 = vmatpush1.bf16.msra.mxu0 %v2645
    %2677 = vmatprep.subr.bf16.mxu0 0
    %2678 = vmatpush2.bf16.msra.mxu0 0
    %2679 = vmatprep.subr.bf16.mxu0 0
    %2680 = vmatpush2.bf16.msra.mxu0 0
    %2681 = vmatprep.subr.bf16.mxu0 0
    %2682 = vmatpush2.bf16.msra.mxu0 0
    %2683 = vmatprep.subr.bf16.mxu0 0
    %2684 = vmatpush2.bf16.msra.mxu0 0
    %2685 = vmatprep.subr.bf16.mxu0 0
    %2686 = vmatpush2.bf16.msra.mxu0 0
    %2687 = vmatprep.subr.bf16.mxu0 0
    %2688 = vmatpush2.bf16.msra.mxu0 0
    %2689 = vmatprep.subr.bf16.mxu0 0
    %2690 = vmatpush2.bf16.msra.mxu0 0
    %2691 = vmatprep.subr.bf16.mxu0 0
    %2692 = vmatpush2.bf16.msra.mxu0 0
    %2693 = vmatprep.mubr.bf16.mxu0 0
    %2694 = vmatmul.mubr.bf16.gmra.mxu0 %v2133
    %v2695 = vpop.f32.mrf.mxu0
    %v2696 = vadd.f32 %v2611, %v2695
    %v2697 = vpop.f32.mrf.mxu0
    %v2698 = vpop.f32.mrf.mxu0
    %v2699 = vpop.f32.mrf.mxu0
    %2700 = vdwg.mxu0
    %v2701 = vmax.f32 %v2696, 0.0
    %s2702 = scalar_lea.vmem [#allocation7], 320
    %v2703 = vld [vmem:[%s2702] sm:$0xf]
    %v2704 = vld [vmem:[%s2702 + $0x4] sm:$0xf]
    %v2705 = vld [vmem:[%s2702 + $0x8] sm:$0xf]
    %v2706 = vld [vmem:[%s2702 + $0xc] sm:$0xf]
    %v2707 = vld [vmem:[%s2702 + $0x10] sm:$0xf]
    %v2708 = vld [vmem:[%s2702 + $0x14] sm:$0xf]
    %v2709 = vld [vmem:[%s2702 + $0x18] sm:$0xf]
    %v2710 = vld [vmem:[%s2702 + $0x1c] sm:$0xf]
    %v2711 = vld [vmem:[%s2702 + $0x20] sm:$0xf]
    %v2712 = vld [vmem:[%s2702 + $0x24] sm:$0xf]
    %v2713 = vld [vmem:[%s2702 + $0x28] sm:$0xf]
    %v2714 = vld [vmem:[%s2702 + $0x2c] sm:$0xf]
    %v2715 = vld [vmem:[%s2702 + $0x30] sm:$0xf]
    %v2716 = vld [vmem:[%s2702 + $0x34] sm:$0xf]
    %v2717 = vld [vmem:[%s2702 + $0x38] sm:$0xf]
    %v2718 = vld [vmem:[%s2702 + $0x3c] sm:$0xf]
    %s2719 = scalar_lea.vmem %s15, 5
    %v2720 = vld [vmem:[%s2719] sm:$0x1]
    %v2722 = vlaneseq
    %v2723 = vshrl.u32 %v2722, 7
    %v2724 = vsub.s32 0, %v2723
    %v2725 = vrot.slane %v2720, %v2724
    %v2743 = vunpack.c.l.b16 %v2703
    %v2744 = vunpack.c.l.b16 %v2704
    %v2745 = vunpack.c.l.b16 %v2705
    %v2746 = vunpack.c.l.b16 %v2706
    %v2747 = vunpack.c.l.b16 %v2707
    %v2748 = vunpack.c.l.b16 %v2708
    %v2749 = vunpack.c.l.b16 %v2709
    %v2750 = vunpack.c.l.b16 %v2710
    %v2751 = vunpack.c.l.b16 %v2711
    %v2752 = vunpack.c.l.b16 %v2712
    %v2753 = vunpack.c.l.b16 %v2713
    %v2754 = vunpack.c.l.b16 %v2714
    %v2755 = vunpack.c.l.b16 %v2715
    %v2756 = vunpack.c.l.b16 %v2716
    %v2757 = vunpack.c.l.b16 %v2717
    %v2758 = vunpack.c.l.b16 %v2718
    %v2759 = vpack.c.b16 %v2744, %v2743
    %v2760 = vpack.c.b16 %v2746, %v2745
    %v2761 = vpack.c.b16 %v2748, %v2747
    %v2762 = vpack.c.b16 %v2750, %v2749
    %v2763 = vpack.c.b16 %v2752, %v2751
    %v2764 = vpack.c.b16 %v2754, %v2753
    %v2765 = vpack.c.b16 %v2756, %v2755
    %v2766 = vpack.c.b16 %v2758, %v2757
    %2775 = vmatprep.subr.bf16.mxu0 0
    %2776 = vmatpush1.bf16.msra.mxu0 %v2766
    %2777 = vmatprep.subr.bf16.mxu0 0
    %2778 = vmatpush1.bf16.msra.mxu0 %v2765
    %2779 = vmatprep.subr.bf16.mxu0 0
    %2780 = vmatpush1.bf16.msra.mxu0 %v2764
    %2781 = vmatprep.subr.bf16.mxu0 0
    %2782 = vmatpush1.bf16.msra.mxu0 %v2763
    %2783 = vmatprep.subr.bf16.mxu0 0
    %2784 = vmatpush1.bf16.msra.mxu0 %v2762
    %2785 = vmatprep.subr.bf16.mxu0 0
    %2786 = vmatpush1.bf16.msra.mxu0 %v2761
    %2787 = vmatprep.subr.bf16.mxu0 0
    %2788 = vmatpush1.bf16.msra.mxu0 %v2760
    %2789 = vmatprep.subr.bf16.mxu0 0
    %2790 = vmatpush1.bf16.msra.mxu0 %v2759
    %2791 = vmatprep.subr.bf16.mxu0 0
    %2792 = vmatpush2.bf16.msra.mxu0 0
    %2793 = vmatprep.subr.bf16.mxu0 0
    %2794 = vmatpush2.bf16.msra.mxu0 0
    %2795 = vmatprep.subr.bf16.mxu0 0
    %2796 = vmatpush2.bf16.msra.mxu0 0
    %2797 = vmatprep.subr.bf16.mxu0 0
    %2798 = vmatpush2.bf16.msra.mxu0 0
    %2799 = vmatprep.subr.bf16.mxu0 0
    %2800 = vmatpush2.bf16.msra.mxu0 0
    %2801 = vmatprep.subr.bf16.mxu0 0
    %2802 = vmatpush2.bf16.msra.mxu0 0
    %2803 = vmatprep.subr.bf16.mxu0 0
    %2804 = vmatpush2.bf16.msra.mxu0 0
    %2805 = vmatprep.subr.bf16.mxu0 0
    %2806 = vmatpush2.bf16.msra.mxu0 0
    %2807 = vmatprep.mubr.bf16.mxu0 0
    %2808 = vmatmul.mubr.bf16.gmra.mxu0 %v2133
    %v2809 = vpop.f32.mrf.mxu0
    %v2810 = vadd.f32 %v2725, %v2809
    %v2811 = vpop.f32.mrf.mxu0
    %v2812 = vpop.f32.mrf.mxu0
    %v2813 = vpop.f32.mrf.mxu0
    %2814 = vdwg.mxu0
    %v2815 = vmax.f32 %v2810, 0.0
    %s2816 = scalar_lea.vmem [#allocation7], 384
    %v2817 = vld [vmem:[%s2816] sm:$0xf]
    %v2818 = vld [vmem:[%s2816 + $0x4] sm:$0xf]
    %v2819 = vld [vmem:[%s2816 + $0x8] sm:$0xf]
    %v2820 = vld [vmem:[%s2816 + $0xc] sm:$0xf]
    %v2821 = vld [vmem:[%s2816 + $0x10] sm:$0xf]
    %v2822 = vld [vmem:[%s2816 + $0x14] sm:$0xf]
    %v2823 = vld [vmem:[%s2816 + $0x18] sm:$0xf]
    %v2824 = vld [vmem:[%s2816 + $0x1c] sm:$0xf]
    %v2825 = vld [vmem:[%s2816 + $0x20] sm:$0xf]
    %v2826 = vld [vmem:[%s2816 + $0x24] sm:$0xf]
    %v2827 = vld [vmem:[%s2816 + $0x28] sm:$0xf]
    %v2828 = vld [vmem:[%s2816 + $0x2c] sm:$0xf]
    %v2829 = vld [vmem:[%s2816 + $0x30] sm:$0xf]
    %v2830 = vld [vmem:[%s2816 + $0x34] sm:$0xf]
    %v2831 = vld [vmem:[%s2816 + $0x38] sm:$0xf]
    %v2832 = vld [vmem:[%s2816 + $0x3c] sm:$0xf]
    %s2833 = scalar_lea.vmem %s15, 6
    %v2834 = vld [vmem:[%s2833] sm:$0x1]
    %v2836 = vlaneseq
    %v2837 = vshrl.u32 %v2836, 7
    %v2838 = vsub.s32 0, %v2837
    %v2839 = vrot.slane %v2834, %v2838
    %v2857 = vunpack.c.l.b16 %v2817
    %v2858 = vunpack.c.l.b16 %v2818
    %v2859 = vunpack.c.l.b16 %v2819
    %v2860 = vunpack.c.l.b16 %v2820
    %v2861 = vunpack.c.l.b16 %v2821
    %v2862 = vunpack.c.l.b16 %v2822
    %v2863 = vunpack.c.l.b16 %v2823
    %v2864 = vunpack.c.l.b16 %v2824
    %v2865 = vunpack.c.l.b16 %v2825
    %v2866 = vunpack.c.l.b16 %v2826
    %v2867 = vunpack.c.l.b16 %v2827
    %v2868 = vunpack.c.l.b16 %v2828
    %v2869 = vunpack.c.l.b16 %v2829
    %v2870 = vunpack.c.l.b16 %v2830
    %v2871 = vunpack.c.l.b16 %v2831
    %v2872 = vunpack.c.l.b16 %v2832
    %v2873 = vpack.c.b16 %v2858, %v2857
    %v2874 = vpack.c.b16 %v2860, %v2859
    %v2875 = vpack.c.b16 %v2862, %v2861
    %v2876 = vpack.c.b16 %v2864, %v2863
    %v2877 = vpack.c.b16 %v2866, %v2865
    %v2878 = vpack.c.b16 %v2868, %v2867
    %v2879 = vpack.c.b16 %v2870, %v2869
    %v2880 = vpack.c.b16 %v2872, %v2871
    %2889 = vmatprep.subr.bf16.mxu0 0
    %2890 = vmatpush1.bf16.msra.mxu0 %v2880
    %2891 = vmatprep.subr.bf16.mxu0 0
    %2892 = vmatpush1.bf16.msra.mxu0 %v2879
    %2893 = vmatprep.subr.bf16.mxu0 0
    %2894 = vmatpush1.bf16.msra.mxu0 %v2878
    %2895 = vmatprep.subr.bf16.mxu0 0
    %2896 = vmatpush1.bf16.msra.mxu0 %v2877
    %2897 = vmatprep.subr.bf16.mxu0 0
    %2898 = vmatpush1.bf16.msra.mxu0 %v2876
    %2899 = vmatprep.subr.bf16.mxu0 0
    %2900 = vmatpush1.bf16.msra.mxu0 %v2875
    %2901 = vmatprep.subr.bf16.mxu0 0
    %2902 = vmatpush1.bf16.msra.mxu0 %v2874
    %2903 = vmatprep.subr.bf16.mxu0 0
    %2904 = vmatpush1.bf16.msra.mxu0 %v2873
    %2905 = vmatprep.subr.bf16.mxu0 0
    %2906 = vmatpush2.bf16.msra.mxu0 0
    %2907 = vmatprep.subr.bf16.mxu0 0
    %2908 = vmatpush2.bf16.msra.mxu0 0
    %2909 = vmatprep.subr.bf16.mxu0 0
    %2910 = vmatpush2.bf16.msra.mxu0 0
    %2911 = vmatprep.subr.bf16.mxu0 0
    %2912 = vmatpush2.bf16.msra.mxu0 0
    %2913 = vmatprep.subr.bf16.mxu0 0
    %2914 = vmatpush2.bf16.msra.mxu0 0
    %2915 = vmatprep.subr.bf16.mxu0 0
    %2916 = vmatpush2.bf16.msra.mxu0 0
    %2917 = vmatprep.subr.bf16.mxu0 0
    %2918 = vmatpush2.bf16.msra.mxu0 0
    %2919 = vmatprep.subr.bf16.mxu0 0
    %2920 = vmatpush2.bf16.msra.mxu0 0
    %2921 = vmatprep.mubr.bf16.mxu0 0
    %2922 = vmatmul.mubr.bf16.gmra.mxu0 %v2133
    %v2923 = vpop.f32.mrf.mxu0
    %v2924 = vadd.f32 %v2839, %v2923
    %v2925 = vpop.f32.mrf.mxu0
    %v2926 = vpop.f32.mrf.mxu0
    %v2927 = vpop.f32.mrf.mxu0
    %2928 = vdwg.mxu0
    %v2929 = vmax.f32 %v2924, 0.0
    %s2930 = scalar_lea.vmem [#allocation7], 448
    %v2931 = vld [vmem:[%s2930] sm:$0xf]
    %v2932 = vld [vmem:[%s2930 + $0x4] sm:$0xf]
    %v2933 = vld [vmem:[%s2930 + $0x8] sm:$0xf]
    %v2934 = vld [vmem:[%s2930 + $0xc] sm:$0xf]
    %v2935 = vld [vmem:[%s2930 + $0x10] sm:$0xf]
    %v2936 = vld [vmem:[%s2930 + $0x14] sm:$0xf]
    %v2937 = vld [vmem:[%s2930 + $0x18] sm:$0xf]
    %v2938 = vld [vmem:[%s2930 + $0x1c] sm:$0xf]
    %v2939 = vld [vmem:[%s2930 + $0x20] sm:$0xf]
    %v2940 = vld [vmem:[%s2930 + $0x24] sm:$0xf]
    %v2941 = vld [vmem:[%s2930 + $0x28] sm:$0xf]
    %v2942 = vld [vmem:[%s2930 + $0x2c] sm:$0xf]
    %v2943 = vld [vmem:[%s2930 + $0x30] sm:$0xf]
    %v2944 = vld [vmem:[%s2930 + $0x34] sm:$0xf]
    %v2945 = vld [vmem:[%s2930 + $0x38] sm:$0xf]
    %v2946 = vld [vmem:[%s2930 + $0x3c] sm:$0xf]
    %s2947 = scalar_lea.vmem %s15, 7
    %v2948 = vld [vmem:[%s2947] sm:$0x1]
    %v2950 = vlaneseq
    %v2951 = vshrl.u32 %v2950, 7
    %v2952 = vsub.s32 0, %v2951
    %v2953 = vrot.slane %v2948, %v2952
    %v2971 = vunpack.c.l.b16 %v2931
    %v2972 = vunpack.c.l.b16 %v2932
    %v2973 = vunpack.c.l.b16 %v2933
    %v2974 = vunpack.c.l.b16 %v2934
    %v2975 = vunpack.c.l.b16 %v2935
    %v2976 = vunpack.c.l.b16 %v2936
    %v2977 = vunpack.c.l.b16 %v2937
    %v2978 = vunpack.c.l.b16 %v2938
    %v2979 = vunpack.c.l.b16 %v2939
    %v2980 = vunpack.c.l.b16 %v2940
    %v2981 = vunpack.c.l.b16 %v2941
    %v2982 = vunpack.c.l.b16 %v2942
    %v2983 = vunpack.c.l.b16 %v2943
    %v2984 = vunpack.c.l.b16 %v2944
    %v2985 = vunpack.c.l.b16 %v2945
    %v2986 = vunpack.c.l.b16 %v2946
    %v2987 = vpack.c.b16 %v2972, %v2971
    %v2988 = vpack.c.b16 %v2974, %v2973
    %v2989 = vpack.c.b16 %v2976, %v2975
    %v2990 = vpack.c.b16 %v2978, %v2977
    %v2991 = vpack.c.b16 %v2980, %v2979
    %v2992 = vpack.c.b16 %v2982, %v2981
    %v2993 = vpack.c.b16 %v2984, %v2983
    %v2994 = vpack.c.b16 %v2986, %v2985
    %3003 = vmatprep.subr.bf16.mxu0 0
    %3004 = vmatpush1.bf16.msra.mxu0 %v2994
    %3005 = vmatprep.subr.bf16.mxu0 0
    %3006 = vmatpush1.bf16.msra.mxu0 %v2993
    %3007 = vmatprep.subr.bf16.mxu0 0
    %3008 = vmatpush1.bf16.msra.mxu0 %v2992
    %3009 = vmatprep.subr.bf16.mxu0 0
    %3010 = vmatpush1.bf16.msra.mxu0 %v2991
    %3011 = vmatprep.subr.bf16.mxu0 0
    %3012 = vmatpush1.bf16.msra.mxu0 %v2990
    %3013 = vmatprep.subr.bf16.mxu0 0
    %3014 = vmatpush1.bf16.msra.mxu0 %v2989
    %3015 = vmatprep.subr.bf16.mxu0 0
    %3016 = vmatpush1.bf16.msra.mxu0 %v2988
    %3017 = vmatprep.subr.bf16.mxu0 0
    %3018 = vmatpush1.bf16.msra.mxu0 %v2987
    %3019 = vmatprep.subr.bf16.mxu0 0
    %3020 = vmatpush2.bf16.msra.mxu0 0
    %3021 = vmatprep.subr.bf16.mxu0 0
    %3022 = vmatpush2.bf16.msra.mxu0 0
    %3023 = vmatprep.subr.bf16.mxu0 0
    %3024 = vmatpush2.bf16.msra.mxu0 0
    %3025 = vmatprep.subr.bf16.mxu0 0
    %3026 = vmatpush2.bf16.msra.mxu0 0
    %3027 = vmatprep.subr.bf16.mxu0 0
    %3028 = vmatpush2.bf16.msra.mxu0 0
    %3029 = vmatprep.subr.bf16.mxu0 0
    %3030 = vmatpush2.bf16.msra.mxu0 0
    %3031 = vmatprep.subr.bf16.mxu0 0
    %3032 = vmatpush2.bf16.msra.mxu0 0
    %3033 = vmatprep.subr.bf16.mxu0 0
    %3034 = vmatpush2.bf16.msra.mxu0 0
    %3035 = vmatprep.mubr.bf16.mxu0 0
    %3036 = vmatmul.mubr.bf16.gmra.mxu0 %v2133
    %v3037 = vpop.f32.mrf.mxu0
    %v3038 = vadd.f32 %v2953, %v3037
    %v3039 = vpop.f32.mrf.mxu0
    %v3040 = vpop.f32.mrf.mxu0
    %v3041 = vpop.f32.mrf.mxu0
    %3042 = vdwg.mxu0
    %v3043 = vmax.f32 %v3038, 0.0
    %v3044 = vpack.c.bf16 %v2245, 0.0
    %v3045 = vpack.c.bf16 %v2359, %v2245
    %v3046 = vpack.c.bf16 %v2473, %v2359
    %v3047 = vpack.c.bf16 %v2587, %v2473
    %v3048 = vpack.c.bf16 %v2701, %v2587
    %v3049 = vpack.c.bf16 %v2815, %v2701
    %v3050 = vpack.c.bf16 %v2929, %v2815
    %v3051 = vpack.c.bf16 %v3043, %v2929
    %v3052 = vpack.c.bf16 0.0, %v3043
    %v3053 = vld [vmem:[#allocation8] sm:$0xf]
    %v3054 = vld [vmem:[#allocation8 + $0x4] sm:$0xf]
    %v3055 = vld [vmem:[#allocation8 + $0x8] sm:$0xf]
    %v3056 = vld [vmem:[#allocation8 + $0xc] sm:$0xf]
    %v3057 = vld [vmem:[#allocation8 + $0x10] sm:$0xf]
    %v3058 = vld [vmem:[#allocation8 + $0x14] sm:$0xf]
    %v3059 = vld [vmem:[#allocation8 + $0x18] sm:$0xf]
    %v3060 = vld [vmem:[#allocation8 + $0x1c] sm:$0xf]
    %v3061 = vld [vmem:[#allocation8 + $0x20] sm:$0xf]
    %v3062 = vld [vmem:[#allocation8 + $0x24] sm:$0xf]
    %v3063 = vld [vmem:[#allocation8 + $0x28] sm:$0xf]
    %v3064 = vld [vmem:[#allocation8 + $0x2c] sm:$0xf]
    %v3065 = vld [vmem:[#allocation8 + $0x30] sm:$0xf]
    %v3066 = vld [vmem:[#allocation8 + $0x34] sm:$0xf]
    %v3067 = vld [vmem:[#allocation8 + $0x38] sm:$0xf]
    %v3068 = vld [vmem:[#allocation8 + $0x3c] sm:$0xf]
    %v3069 = vld [vmem:[#allocation8 + $0x40] sm:$0xf]
    %v3070 = vld [vmem:[#allocation8 + $0x44] sm:$0xf]
    %v3071 = vld [vmem:[#allocation8 + $0x48] sm:$0xf]
    %v3072 = vld [vmem:[#allocation8 + $0x4c] sm:$0xf]
    %v3073 = vld [vmem:[#allocation8 + $0x50] sm:$0xf]
    %v3074 = vld [vmem:[#allocation8 + $0x54] sm:$0xf]
    %v3075 = vld [vmem:[#allocation8 + $0x58] sm:$0xf]
    %v3076 = vld [vmem:[#allocation8 + $0x5c] sm:$0xf]
    %v3077 = vld [vmem:[#allocation8 + $0x60] sm:$0xf]
    %v3078 = vld [vmem:[#allocation8 + $0x64] sm:$0xf]
    %v3079 = vld [vmem:[#allocation8 + $0x68] sm:$0xf]
    %v3080 = vld [vmem:[#allocation8 + $0x6c] sm:$0xf]
    %v3081 = vld [vmem:[#allocation8 + $0x70] sm:$0xf]
    %v3082 = vld [vmem:[#allocation8 + $0x74] sm:$0xf]
    %v3083 = vld [vmem:[#allocation8 + $0x78] sm:$0xf]
    %v3084 = vld [vmem:[#allocation8 + $0x7c] sm:$0xf]
    %v3085 = vld [vmem:[#allocation8 + $0x80] sm:$0xf]
    %v3086 = vld [vmem:[#allocation8 + $0x84] sm:$0xf]
    %v3087 = vld [vmem:[#allocation8 + $0x88] sm:$0xf]
    %v3088 = vld [vmem:[#allocation8 + $0x8c] sm:$0xf]
    %v3089 = vld [vmem:[#allocation8 + $0x90] sm:$0xf]
    %v3090 = vld [vmem:[#allocation8 + $0x94] sm:$0xf]
    %v3091 = vld [vmem:[#allocation8 + $0x98] sm:$0xf]
    %v3092 = vld [vmem:[#allocation8 + $0x9c] sm:$0xf]
    %v3093 = vld [vmem:[#allocation8 + $0xa0] sm:$0xf]
    %v3094 = vld [vmem:[#allocation8 + $0xa4] sm:$0xf]
    %v3095 = vld [vmem:[#allocation8 + $0xa8] sm:$0xf]
    %v3096 = vld [vmem:[#allocation8 + $0xac] sm:$0xf]
    %v3097 = vld [vmem:[#allocation8 + $0xb0] sm:$0xf]
    %v3098 = vld [vmem:[#allocation8 + $0xb4] sm:$0xf]
    %v3099 = vld [vmem:[#allocation8 + $0xb8] sm:$0xf]
    %v3100 = vld [vmem:[#allocation8 + $0xbc] sm:$0xf]
    %v3101 = vld [vmem:[%s17] sm:$0x1]
    %v3103 = vlaneseq
    %v3104 = vshrl.u32 %v3103, 7
    %v3105 = vsub.s32 0, %v3104
    %v3106 = vrot.slane %v3101, %v3105
    %v3156 = vunpack.c.l.b16 %v3053
    %v3157 = vunpack.c.l.b16 %v3054
    %v3158 = vunpack.c.l.b16 %v3055
    %v3159 = vunpack.c.l.b16 %v3056
    %v3160 = vunpack.c.l.b16 %v3057
    %v3161 = vunpack.c.l.b16 %v3058
    %v3162 = vunpack.c.l.b16 %v3059
    %v3163 = vunpack.c.l.b16 %v3060
    %v3164 = vunpack.c.l.b16 %v3061
    %v3165 = vunpack.c.l.b16 %v3062
    %v3166 = vunpack.c.l.b16 %v3063
    %v3167 = vunpack.c.l.b16 %v3064
    %v3168 = vunpack.c.l.b16 %v3065
    %v3169 = vunpack.c.l.b16 %v3066
    %v3170 = vunpack.c.l.b16 %v3067
    %v3171 = vunpack.c.l.b16 %v3068
    %v3172 = vunpack.c.l.b16 %v3069
    %v3173 = vunpack.c.l.b16 %v3070
    %v3174 = vunpack.c.l.b16 %v3071
    %v3175 = vunpack.c.l.b16 %v3072
    %v3176 = vunpack.c.l.b16 %v3073
    %v3177 = vunpack.c.l.b16 %v3074
    %v3178 = vunpack.c.l.b16 %v3075
    %v3179 = vunpack.c.l.b16 %v3076
    %v3180 = vunpack.c.l.b16 %v3077
    %v3181 = vunpack.c.l.b16 %v3078
    %v3182 = vunpack.c.l.b16 %v3079
    %v3183 = vunpack.c.l.b16 %v3080
    %v3184 = vunpack.c.l.b16 %v3081
    %v3185 = vunpack.c.l.b16 %v3082
    %v3186 = vunpack.c.l.b16 %v3083
    %v3187 = vunpack.c.l.b16 %v3084
    %v3188 = vunpack.c.l.b16 %v3085
    %v3189 = vunpack.c.l.b16 %v3086
    %v3190 = vunpack.c.l.b16 %v3087
    %v3191 = vunpack.c.l.b16 %v3088
    %v3192 = vunpack.c.l.b16 %v3089
    %v3193 = vunpack.c.l.b16 %v3090
    %v3194 = vunpack.c.l.b16 %v3091
    %v3195 = vunpack.c.l.b16 %v3092
    %v3196 = vunpack.c.l.b16 %v3093
    %v3197 = vunpack.c.l.b16 %v3094
    %v3198 = vunpack.c.l.b16 %v3095
    %v3199 = vunpack.c.l.b16 %v3096
    %v3200 = vunpack.c.l.b16 %v3097
    %v3201 = vunpack.c.l.b16 %v3098
    %v3202 = vunpack.c.l.b16 %v3099
    %v3203 = vunpack.c.l.b16 %v3100
    %v3204 = vpack.c.b16 %v3157, %v3156
    %v3205 = vpack.c.b16 %v3159, %v3158
    %v3206 = vpack.c.b16 %v3161, %v3160
    %v3207 = vpack.c.b16 %v3163, %v3162
    %v3208 = vpack.c.b16 %v3165, %v3164
    %v3209 = vpack.c.b16 %v3167, %v3166
    %v3210 = vpack.c.b16 %v3169, %v3168
    %v3211 = vpack.c.b16 %v3171, %v3170
    %v3212 = vpack.c.b16 %v3173, %v3172
    %v3213 = vpack.c.b16 %v3175, %v3174
    %v3214 = vpack.c.b16 %v3177, %v3176
    %v3215 = vpack.c.b16 %v3179, %v3178
    %v3216 = vpack.c.b16 %v3181, %v3180
    %v3217 = vpack.c.b16 %v3183, %v3182
    %v3218 = vpack.c.b16 %v3185, %v3184
    %v3219 = vpack.c.b16 %v3187, %v3186
    %v3220 = vpack.c.b16 %v3189, %v3188
    %v3221 = vpack.c.b16 %v3191, %v3190
    %v3222 = vpack.c.b16 %v3193, %v3192
    %v3223 = vpack.c.b16 %v3195, %v3194
    %v3224 = vpack.c.b16 %v3197, %v3196
    %v3225 = vpack.c.b16 %v3199, %v3198
    %v3226 = vpack.c.b16 %v3201, %v3200
    %v3227 = vpack.c.b16 %v3203, %v3202
    %3252 = vmatprep.subr.bf16.mxu0 0
    %3253 = vmatpush1.bf16.msra.mxu0 %v3211
    %3254 = vmatprep.subr.bf16.mxu0 0
    %3255 = vmatpush1.bf16.msra.mxu0 %v3210
    %3256 = vmatprep.subr.bf16.mxu0 0
    %3257 = vmatpush1.bf16.msra.mxu0 %v3209
    %3258 = vmatprep.subr.bf16.mxu0 0
    %3259 = vmatpush1.bf16.msra.mxu0 %v3208
    %3260 = vmatprep.subr.bf16.mxu0 0
    %3261 = vmatpush1.bf16.msra.mxu0 %v3207
    %3262 = vmatprep.subr.bf16.mxu0 0
    %3263 = vmatpush1.bf16.msra.mxu0 %v3206
    %3264 = vmatprep.subr.bf16.mxu0 0
    %3265 = vmatpush1.bf16.msra.mxu0 %v3205
    %3266 = vmatprep.subr.bf16.mxu0 0
    %3267 = vmatpush1.bf16.msra.mxu0 %v3204
    %3268 = vmatprep.subr.bf16.mxu0 0
    %3269 = vmatpush2.bf16.msra.mxu0 %v3219
    %3270 = vmatprep.subr.bf16.mxu0 0
    %3271 = vmatpush2.bf16.msra.mxu0 %v3218
    %3272 = vmatprep.subr.bf16.mxu0 0
    %3273 = vmatpush2.bf16.msra.mxu0 %v3217
    %3274 = vmatprep.subr.bf16.mxu0 0
    %3275 = vmatpush2.bf16.msra.mxu0 %v3216
    %3276 = vmatprep.subr.bf16.mxu0 0
    %3277 = vmatpush2.bf16.msra.mxu0 %v3215
    %3278 = vmatprep.subr.bf16.mxu0 0
    %3279 = vmatpush2.bf16.msra.mxu0 %v3214
    %3280 = vmatprep.subr.bf16.mxu0 0
    %3281 = vmatpush2.bf16.msra.mxu0 %v3213
    %3282 = vmatprep.subr.bf16.mxu0 0
    %3283 = vmatpush2.bf16.msra.mxu0 %v3212
    %3284 = vmatprep.mubr.bf16.mxu0 %v3045
    %3285 = vmatmul.mubr.bf16.gmra.mxu0 %v3044
    %v3286 = vpop.f32.mrf.mxu0
    %v3287 = vadd.f32 %v3106, %v3286
    %v3288 = vpop.f32.mrf.mxu0
    %v3289 = vpop.f32.mrf.mxu0
    %v3290 = vadd.f32 %v3106, %v3289
    %v3291 = vpop.f32.mrf.mxu0
    %3292 = vmatprep.mubr.bf16.mxu0 %v3047
    %3293 = vmatmul.mubr.bf16.gmra.mxu0 %v3046
    %v3294 = vpop.f32.mrf.mxu0
    %v3295 = vadd.f32 %v3106, %v3294
    %v3296 = vpop.f32.mrf.mxu0
    %v3297 = vpop.f32.mrf.mxu0
    %v3298 = vadd.f32 %v3106, %v3297
    %v3299 = vpop.f32.mrf.mxu0
    %3300 = vmatprep.mubr.bf16.mxu0 %v3049
    %3301 = vmatmul.mubr.bf16.gmra.mxu0 %v3048
    %v3302 = vpop.f32.mrf.mxu0
    %v3303 = vadd.f32 %v3106, %v3302
    %v3304 = vpop.f32.mrf.mxu0
    %v3305 = vpop.f32.mrf.mxu0
    %v3306 = vadd.f32 %v3106, %v3305
    %v3307 = vpop.f32.mrf.mxu0
    %3308 = vmatprep.mubr.bf16.mxu0 %v3051
    %3309 = vmatmul.mubr.bf16.gmra.mxu0 %v3050
    %v3310 = vpop.f32.mrf.mxu0
    %v3311 = vadd.f32 %v3106, %v3310
    %v3312 = vpop.f32.mrf.mxu0
    %v3313 = vpop.f32.mrf.mxu0
    %v3314 = vadd.f32 %v3106, %v3313
    %v3315 = vpop.f32.mrf.mxu0
    %3316 = vdwg.mxu0
    %3317 = vmatprep.subr.bf16.mxu0 0
    %3318 = vmatpush1.bf16.msra.mxu0 %v3227
    %3319 = vmatprep.subr.bf16.mxu0 0
    %3320 = vmatpush1.bf16.msra.mxu0 %v3226
    %3321 = vmatprep.subr.bf16.mxu0 0
    %3322 = vmatpush1.bf16.msra.mxu0 %v3225
    %3323 = vmatprep.subr.bf16.mxu0 0
    %3324 = vmatpush1.bf16.msra.mxu0 %v3224
    %3325 = vmatprep.subr.bf16.mxu0 0
    %3326 = vmatpush1.bf16.msra.mxu0 %v3223
    %3327 = vmatprep.subr.bf16.mxu0 0
    %3328 = vmatpush1.bf16.msra.mxu0 %v3222
    %3329 = vmatprep.subr.bf16.mxu0 0
    %3330 = vmatpush1.bf16.msra.mxu0 %v3221
    %3331 = vmatprep.subr.bf16.mxu0 0
    %3332 = vmatpush1.bf16.msra.mxu0 %v3220
    %3333 = vmatprep.subr.bf16.mxu0 0
    %3334 = vmatpush2.bf16.msra.mxu0 0
    %3335 = vmatprep.subr.bf16.mxu0 0
    %3336 = vmatpush2.bf16.msra.mxu0 0
    %3337 = vmatprep.subr.bf16.mxu0 0
    %3338 = vmatpush2.bf16.msra.mxu0 0
    %3339 = vmatprep.subr.bf16.mxu0 0
    %3340 = vmatpush2.bf16.msra.mxu0 0
    %3341 = vmatprep.subr.bf16.mxu0 0
    %3342 = vmatpush2.bf16.msra.mxu0 0
    %3343 = vmatprep.subr.bf16.mxu0 0
    %3344 = vmatpush2.bf16.msra.mxu0 0
    %3345 = vmatprep.subr.bf16.mxu0 0
    %3346 = vmatpush2.bf16.msra.mxu0 0
    %3347 = vmatprep.subr.bf16.mxu0 0
    %3348 = vmatpush2.bf16.msra.mxu0 0
    %3349 = vmatprep.mubr.bf16.mxu0 0
    %3350 = vmatmul.mubr.bf16.gmra.mxu0 %v3046
    %v3351 = vpop.f32.mrf.mxu0
    %v3352 = vadd.f32 %v3287, %v3351
    %v3353 = vpop.f32.mrf.mxu0
    %v3354 = vpop.f32.mrf.mxu0
    %v3355 = vadd.f32 %v3290, %v3354
    %v3356 = vpop.f32.mrf.mxu0
    %3357 = vmatprep.mubr.bf16.mxu0 0
    %3358 = vmatmul.mubr.bf16.gmra.mxu0 %v3048
    %v3359 = vpop.f32.mrf.mxu0
    %v3360 = vadd.f32 %v3295, %v3359
    %v3361 = vpop.f32.mrf.mxu0
    %v3362 = vpop.f32.mrf.mxu0
    %v3363 = vadd.f32 %v3298, %v3362
    %v3364 = vpop.f32.mrf.mxu0
    %3365 = vmatprep.mubr.bf16.mxu0 0
    %3366 = vmatmul.mubr.bf16.gmra.mxu0 %v3050
    %v3367 = vpop.f32.mrf.mxu0
    %v3368 = vadd.f32 %v3303, %v3367
    %v3369 = vpop.f32.mrf.mxu0
    %v3370 = vpop.f32.mrf.mxu0
    %v3371 = vadd.f32 %v3306, %v3370
    %v3372 = vpop.f32.mrf.mxu0
    %3373 = vmatprep.mubr.bf16.mxu0 0
    %3374 = vmatmul.mubr.bf16.gmra.mxu0 %v3052
    %v3375 = vpop.f32.mrf.mxu0
    %v3376 = vadd.f32 %v3311, %v3375
    %v3377 = vpop.f32.mrf.mxu0
    %v3378 = vpop.f32.mrf.mxu0
    %v3379 = vadd.f32 %v3314, %v3378
    %v3380 = vpop.f32.mrf.mxu0
    %3381 = vdwg.mxu0
    %v3382 = vmul.f32 %v3352, %v679
    %v3383 = vmul.f32 %v3355, %v684
    %v3384 = vmul.f32 %v3360, %v689
    %v3385 = vmul.f32 %v3363, %v694
    %v3386 = vmul.f32 %v3368, %v699
    %v3387 = vmul.f32 %v3371, %v704
    %v3388 = vmul.f32 %v3376, %v709
    %v3389 = vmul.f32 %v3379, %v714
    %v3390 = vadd.f32 %v3382, %v3383
    %v3391 = vadd.f32 %v3390, %v3384
    %v3392 = vadd.f32 %v3391, %v3385
    %v3393 = vadd.f32 %v3392, %v3386
    %v3394 = vadd.f32 %v3393, %v3387
    %v3395 = vadd.f32 %v3394, %v3388
    %v3396 = vadd.f32 %v3395, %v3389
    %v3397 = vrot.slane %v3396, 4
    %v3398 = vadd.f32 %v3396, %v3397
    %v3399 = vrot.slane %v3398, 2
    %v3400 = vadd.f32 %v3398, %v3399
    %v3401 = vrot.slane %v3400, 1
    %v3402 = vadd.f32 %v3400, %v3401
    %v3403 = vmul.f32 %v3382, %v3352
    %v3404 = vmul.f32 %v3383, %v3355
    %v3405 = vmul.f32 %v3384, %v3360
    %v3406 = vmul.f32 %v3385, %v3363
    %v3407 = vmul.f32 %v3386, %v3368
    %v3408 = vmul.f32 %v3387, %v3371
    %v3409 = vmul.f32 %v3388, %v3376
    %v3410 = vmul.f32 %v3389, %v3379
    %v3411 = vadd.f32 %v3403, %v3404
    %v3412 = vadd.f32 %v3411, %v3405
    %v3413 = vadd.f32 %v3412, %v3406
    %v3414 = vadd.f32 %v3413, %v3407
    %v3415 = vadd.f32 %v3414, %v3408
    %v3416 = vadd.f32 %v3415, %v3409
    %v3417 = vadd.f32 %v3416, %v3410
    %v3418 = vrot.slane %v3417, 4
    %v3419 = vadd.f32 %v3417, %v3418
    %v3420 = vrot.slane %v3419, 2
    %v3421 = vadd.f32 %v3419, %v3420
    %v3422 = vrot.slane %v3421, 1
    %v3423 = vadd.f32 %v3421, %v3422
    %v3424 = vmul.f32 %v3402, 0.0625
    %v3425 = vmul.f32 %v3423, 0.0625
    %v3426 = vmul.f32 %v3424, %v3424
    %v3427 = vsub.f32 %v3425, %v3426
    %v3428 = vmax.f32 %v3427, 0.0
    %v3429 = vsub.f32 %v3352, %v3424
    %v3430 = vsub.f32 %v3355, %v3424
    %v3431 = vsub.f32 %v3360, %v3424
    %v3432 = vsub.f32 %v3363, %v3424
    %v3433 = vsub.f32 %v3368, %v3424
    %v3434 = vsub.f32 %v3371, %v3424
    %v3435 = vsub.f32 %v3376, %v3424
    %v3436 = vsub.f32 %v3379, %v3424
    %v3437 = vadd.f32 %v3428, 1e-05
    %v3438 = vrsqrt.pop %v3437
    %v3439 = vmul.f32 %v3429, %v3438
    %v3440 = vmul.f32 %v3430, %v3438
    %v3441 = vmul.f32 %v3431, %v3438
    %v3442 = vmul.f32 %v3432, %v3438
    %v3443 = vmul.f32 %v3433, %v3438
    %v3444 = vmul.f32 %v3434, %v3438
    %v3445 = vmul.f32 %v3435, %v3438
    %v3446 = vmul.f32 %v3436, %v3438
    %v3447 = vld [vmem:[%s18] sm:$0x1]
    %v3449 = vlaneseq
    %v3450 = vshrl.u32 %v3449, 7
    %v3451 = vsub.s32 0, %v3450
    %v3452 = vrot.slane %v3447, %v3451
    %v3454 = vmul.f32 %v3439, %v3452
    %v3455 = vmul.f32 %v3440, %v3452
    %v3456 = vmul.f32 %v3441, %v3452
    %v3457 = vmul.f32 %v3442, %v3452
    %v3458 = vmul.f32 %v3443, %v3452
    %v3459 = vmul.f32 %v3444, %v3452
    %v3460 = vmul.f32 %v3445, %v3452
    %v3461 = vmul.f32 %v3446, %v3452
    %v3462 = vld [vmem:[%s19] sm:$0x1]
    %v3464 = vlaneseq
    %v3465 = vshrl.u32 %v3464, 7
    %v3466 = vsub.s32 0, %v3465
    %v3467 = vrot.slane %v3462, %v3466
    %v3469 = vadd.f32 %v3454, %v3467
    %v3470 = vadd.f32 %v3455, %v3467
    %v3471 = vadd.f32 %v3456, %v3467
    %v3472 = vadd.f32 %v3457, %v3467
    %v3473 = vadd.f32 %v3458, %v3467
    %v3474 = vadd.f32 %v3459, %v3467
    %v3475 = vadd.f32 %v3460, %v3467
    %v3476 = vadd.f32 %v3461, %v3467
    %v3477 = vmax.f32 %v3469, 0.0
    %v3478 = vmax.f32 %v3470, 0.0
    %v3479 = vmax.f32 %v3471, 0.0
    %v3480 = vmax.f32 %v3472, 0.0
    %v3481 = vmax.f32 %v3473, 0.0
    %v3482 = vmax.f32 %v3474, 0.0
    %v3483 = vmax.f32 %v3475, 0.0
    %v3484 = vmax.f32 %v3476, 0.0
    %v3485 = vpack.c.bf16 %v3477, 0.0
    %v3486 = vpack.c.bf16 %v3478, %v3477
    %v3487 = vpack.c.bf16 %v3479, %v3478
    %v3488 = vpack.c.bf16 %v3480, %v3479
    %v3489 = vpack.c.bf16 %v3481, %v3480
    %v3490 = vpack.c.bf16 %v3482, %v3481
    %v3491 = vpack.c.bf16 %v3483, %v3482
    %v3492 = vpack.c.bf16 %v3484, %v3483
    %v3493 = vpack.c.bf16 0.0, %v3484
    %v3494 = vld [vmem:[#allocation10] sm:$0xf]
    %v3495 = vld [vmem:[#allocation10 + $0x4] sm:$0xf]
    %v3496 = vld [vmem:[#allocation10 + $0x8] sm:$0xf]
    %v3497 = vld [vmem:[#allocation10 + $0xc] sm:$0xf]
    %v3498 = vld [vmem:[#allocation10 + $0x10] sm:$0xf]
    %v3499 = vld [vmem:[#allocation10 + $0x14] sm:$0xf]
    %v3500 = vld [vmem:[#allocation10 + $0x18] sm:$0xf]
    %v3501 = vld [vmem:[#allocation10 + $0x1c] sm:$0xf]
    %v3502 = vld [vmem:[#allocation10 + $0x20] sm:$0xf]
    %v3503 = vld [vmem:[#allocation10 + $0x24] sm:$0xf]
    %v3504 = vld [vmem:[#allocation10 + $0x28] sm:$0xf]
    %v3505 = vld [vmem:[#allocation10 + $0x2c] sm:$0xf]
    %v3506 = vld [vmem:[#allocation10 + $0x30] sm:$0xf]
    %v3507 = vld [vmem:[#allocation10 + $0x34] sm:$0xf]
    %v3508 = vld [vmem:[#allocation10 + $0x38] sm:$0xf]
    %v3509 = vld [vmem:[#allocation10 + $0x3c] sm:$0xf]
    %v3510 = vld [vmem:[#allocation10 + $0x40] sm:$0xf]
    %v3511 = vld [vmem:[#allocation10 + $0x44] sm:$0xf]
    %v3512 = vld [vmem:[#allocation10 + $0x48] sm:$0xf]
    %v3513 = vld [vmem:[#allocation10 + $0x4c] sm:$0xf]
    %v3514 = vld [vmem:[#allocation10 + $0x50] sm:$0xf]
    %v3515 = vld [vmem:[#allocation10 + $0x54] sm:$0xf]
    %v3516 = vld [vmem:[#allocation10 + $0x58] sm:$0xf]
    %v3517 = vld [vmem:[#allocation10 + $0x5c] sm:$0xf]
    %v3518 = vld [vmem:[#allocation10 + $0x60] sm:$0xf]
    %v3519 = vld [vmem:[#allocation10 + $0x64] sm:$0xf]
    %v3520 = vld [vmem:[#allocation10 + $0x68] sm:$0xf]
    %v3521 = vld [vmem:[#allocation10 + $0x6c] sm:$0xf]
    %v3522 = vld [vmem:[#allocation10 + $0x70] sm:$0xf]
    %v3523 = vld [vmem:[#allocation10 + $0x74] sm:$0xf]
    %v3524 = vld [vmem:[#allocation10 + $0x78] sm:$0xf]
    %v3525 = vld [vmem:[#allocation10 + $0x7c] sm:$0xf]
    %v3526 = vld [vmem:[#allocation10 + $0x80] sm:$0xf]
    %v3527 = vld [vmem:[#allocation10 + $0x84] sm:$0xf]
    %v3528 = vld [vmem:[#allocation10 + $0x88] sm:$0xf]
    %v3529 = vld [vmem:[#allocation10 + $0x8c] sm:$0xf]
    %v3530 = vld [vmem:[#allocation10 + $0x90] sm:$0xf]
    %v3531 = vld [vmem:[#allocation10 + $0x94] sm:$0xf]
    %v3532 = vld [vmem:[#allocation10 + $0x98] sm:$0xf]
    %v3533 = vld [vmem:[#allocation10 + $0x9c] sm:$0xf]
    %v3534 = vld [vmem:[#allocation10 + $0xa0] sm:$0xf]
    %v3535 = vld [vmem:[#allocation10 + $0xa4] sm:$0xf]
    %v3536 = vld [vmem:[#allocation10 + $0xa8] sm:$0xf]
    %v3537 = vld [vmem:[#allocation10 + $0xac] sm:$0xf]
    %v3538 = vld [vmem:[#allocation10 + $0xb0] sm:$0xf]
    %v3539 = vld [vmem:[#allocation10 + $0xb4] sm:$0xf]
    %v3540 = vld [vmem:[#allocation10 + $0xb8] sm:$0xf]
    %v3541 = vld [vmem:[#allocation10 + $0xbc] sm:$0xf]
    %v3542 = vld [vmem:[%s21] sm:$0x1]
    %v3544 = vlaneseq
    %v3545 = vshrl.u32 %v3544, 7
    %v3546 = vsub.s32 0, %v3545
    %v3547 = vrot.slane %v3542, %v3546
    %v3597 = vunpack.c.l.b16 %v3494
    %v3598 = vunpack.c.l.b16 %v3495
    %v3599 = vunpack.c.l.b16 %v3496
    %v3600 = vunpack.c.l.b16 %v3497
    %v3601 = vunpack.c.l.b16 %v3498
    %v3602 = vunpack.c.l.b16 %v3499
    %v3603 = vunpack.c.l.b16 %v3500
    %v3604 = vunpack.c.l.b16 %v3501
    %v3605 = vunpack.c.l.b16 %v3502
    %v3606 = vunpack.c.l.b16 %v3503
    %v3607 = vunpack.c.l.b16 %v3504
    %v3608 = vunpack.c.l.b16 %v3505
    %v3609 = vunpack.c.l.b16 %v3506
    %v3610 = vunpack.c.l.b16 %v3507
    %v3611 = vunpack.c.l.b16 %v3508
    %v3612 = vunpack.c.l.b16 %v3509
    %v3613 = vunpack.c.l.b16 %v3510
    %v3614 = vunpack.c.l.b16 %v3511
    %v3615 = vunpack.c.l.b16 %v3512
    %v3616 = vunpack.c.l.b16 %v3513
    %v3617 = vunpack.c.l.b16 %v3514
    %v3618 = vunpack.c.l.b16 %v3515
    %v3619 = vunpack.c.l.b16 %v3516
    %v3620 = vunpack.c.l.b16 %v3517
    %v3621 = vunpack.c.l.b16 %v3518
    %v3622 = vunpack.c.l.b16 %v3519
    %v3623 = vunpack.c.l.b16 %v3520
    %v3624 = vunpack.c.l.b16 %v3521
    %v3625 = vunpack.c.l.b16 %v3522
    %v3626 = vunpack.c.l.b16 %v3523
    %v3627 = vunpack.c.l.b16 %v3524
    %v3628 = vunpack.c.l.b16 %v3525
    %v3629 = vunpack.c.l.b16 %v3526
    %v3630 = vunpack.c.l.b16 %v3527
    %v3631 = vunpack.c.l.b16 %v3528
    %v3632 = vunpack.c.l.b16 %v3529
    %v3633 = vunpack.c.l.b16 %v3530
    %v3634 = vunpack.c.l.b16 %v3531
    %v3635 = vunpack.c.l.b16 %v3532
    %v3636 = vunpack.c.l.b16 %v3533
    %v3637 = vunpack.c.l.b16 %v3534
    %v3638 = vunpack.c.l.b16 %v3535
    %v3639 = vunpack.c.l.b16 %v3536
    %v3640 = vunpack.c.l.b16 %v3537
    %v3641 = vunpack.c.l.b16 %v3538
    %v3642 = vunpack.c.l.b16 %v3539
    %v3643 = vunpack.c.l.b16 %v3540
    %v3644 = vunpack.c.l.b16 %v3541
    %v3645 = vpack.c.b16 %v3598, %v3597
    %v3646 = vpack.c.b16 %v3600, %v3599
    %v3647 = vpack.c.b16 %v3602, %v3601
    %v3648 = vpack.c.b16 %v3604, %v3603
    %v3649 = vpack.c.b16 %v3606, %v3605
    %v3650 = vpack.c.b16 %v3608, %v3607
    %v3651 = vpack.c.b16 %v3610, %v3609
    %v3652 = vpack.c.b16 %v3612, %v3611
    %v3653 = vpack.c.b16 %v3614, %v3613
    %v3654 = vpack.c.b16 %v3616, %v3615
    %v3655 = vpack.c.b16 %v3618, %v3617
    %v3656 = vpack.c.b16 %v3620, %v3619
    %v3657 = vpack.c.b16 %v3622, %v3621
    %v3658 = vpack.c.b16 %v3624, %v3623
    %v3659 = vpack.c.b16 %v3626, %v3625
    %v3660 = vpack.c.b16 %v3628, %v3627
    %v3661 = vpack.c.b16 %v3630, %v3629
    %v3662 = vpack.c.b16 %v3632, %v3631
    %v3663 = vpack.c.b16 %v3634, %v3633
    %v3664 = vpack.c.b16 %v3636, %v3635
    %v3665 = vpack.c.b16 %v3638, %v3637
    %v3666 = vpack.c.b16 %v3640, %v3639
    %v3667 = vpack.c.b16 %v3642, %v3641
    %v3668 = vpack.c.b16 %v3644, %v3643
    %3693 = vmatprep.subr.bf16.mxu0 0
    %3694 = vmatpush1.bf16.msra.mxu0 %v3652
    %3695 = vmatprep.subr.bf16.mxu0 0
    %3696 = vmatpush1.bf16.msra.mxu0 %v3651
    %3697 = vmatprep.subr.bf16.mxu0 0
    %3698 = vmatpush1.bf16.msra.mxu0 %v3650
    %3699 = vmatprep.subr.bf16.mxu0 0
    %3700 = vmatpush1.bf16.msra.mxu0 %v3649
    %3701 = vmatprep.subr.bf16.mxu0 0
    %3702 = vmatpush1.bf16.msra.mxu0 %v3648
    %3703 = vmatprep.subr.bf16.mxu0 0
    %3704 = vmatpush1.bf16.msra.mxu0 %v3647
    %3705 = vmatprep.subr.bf16.mxu0 0
    %3706 = vmatpush1.bf16.msra.mxu0 %v3646
    %3707 = vmatprep.subr.bf16.mxu0 0
    %3708 = vmatpush1.bf16.msra.mxu0 %v3645
    %3709 = vmatprep.subr.bf16.mxu0 0
    %3710 = vmatpush2.bf16.msra.mxu0 %v3660
    %3711 = vmatprep.subr.bf16.mxu0 0
    %3712 = vmatpush2.bf16.msra.mxu0 %v3659
    %3713 = vmatprep.subr.bf16.mxu0 0
    %3714 = vmatpush2.bf16.msra.mxu0 %v3658
    %3715 = vmatprep.subr.bf16.mxu0 0
    %3716 = vmatpush2.bf16.msra.mxu0 %v3657
    %3717 = vmatprep.subr.bf16.mxu0 0
    %3718 = vmatpush2.bf16.msra.mxu0 %v3656
    %3719 = vmatprep.subr.bf16.mxu0 0
    %3720 = vmatpush2.bf16.msra.mxu0 %v3655
    %3721 = vmatprep.subr.bf16.mxu0 0
    %3722 = vmatpush2.bf16.msra.mxu0 %v3654
    %3723 = vmatprep.subr.bf16.mxu0 0
    %3724 = vmatpush2.bf16.msra.mxu0 %v3653
    %3725 = vmatprep.mubr.bf16.mxu0 %v3486
    %3726 = vmatmul.mubr.bf16.gmra.mxu0 %v3485
    %v3727 = vpop.f32.mrf.mxu0
    %v3728 = vadd.f32 %v3547, %v3727
    %v3729 = vpop.f32.mrf.mxu0
    %v3730 = vpop.f32.mrf.mxu0
    %v3731 = vadd.f32 %v3547, %v3730
    %v3732 = vpop.f32.mrf.mxu0
    %3733 = vmatprep.mubr.bf16.mxu0 %v3488
    %3734 = vmatmul.mubr.bf16.gmra.mxu0 %v3487
    %v3735 = vpop.f32.mrf.mxu0
    %v3736 = vadd.f32 %v3547, %v3735
    %v3737 = vpop.f32.mrf.mxu0
    %v3738 = vpop.f32.mrf.mxu0
    %v3739 = vadd.f32 %v3547, %v3738
    %v3740 = vpop.f32.mrf.mxu0
    %3741 = vmatprep.mubr.bf16.mxu0 %v3490
    %3742 = vmatmul.mubr.bf16.gmra.mxu0 %v3489
    %v3743 = vpop.f32.mrf.mxu0
    %v3744 = vadd.f32 %v3547, %v3743
    %v3745 = vpop.f32.mrf.mxu0
    %v3746 = vpop.f32.mrf.mxu0
    %v3747 = vadd.f32 %v3547, %v3746
    %v3748 = vpop.f32.mrf.mxu0
    %3749 = vmatprep.mubr.bf16.mxu0 %v3492
    %3750 = vmatmul.mubr.bf16.gmra.mxu0 %v3491
    %v3751 = vpop.f32.mrf.mxu0
    %v3752 = vadd.f32 %v3547, %v3751
    %v3753 = vpop.f32.mrf.mxu0
    %v3754 = vpop.f32.mrf.mxu0
    %v3755 = vadd.f32 %v3547, %v3754
    %v3756 = vpop.f32.mrf.mxu0
    %3757 = vdwg.mxu0
    %3758 = vmatprep.subr.bf16.mxu0 0
    %3759 = vmatpush1.bf16.msra.mxu0 %v3668
    %3760 = vmatprep.subr.bf16.mxu0 0
    %3761 = vmatpush1.bf16.msra.mxu0 %v3667
    %3762 = vmatprep.subr.bf16.mxu0 0
    %3763 = vmatpush1.bf16.msra.mxu0 %v3666
    %3764 = vmatprep.subr.bf16.mxu0 0
    %3765 = vmatpush1.bf16.msra.mxu0 %v3665
    %3766 = vmatprep.subr.bf16.mxu0 0
    %3767 = vmatpush1.bf16.msra.mxu0 %v3664
    %3768 = vmatprep.subr.bf16.mxu0 0
    %3769 = vmatpush1.bf16.msra.mxu0 %v3663
    %3770 = vmatprep.subr.bf16.mxu0 0
    %3771 = vmatpush1.bf16.msra.mxu0 %v3662
    %3772 = vmatprep.subr.bf16.mxu0 0
    %3773 = vmatpush1.bf16.msra.mxu0 %v3661
    %3774 = vmatprep.subr.bf16.mxu0 0
    %3775 = vmatpush2.bf16.msra.mxu0 0
    %3776 = vmatprep.subr.bf16.mxu0 0
    %3777 = vmatpush2.bf16.msra.mxu0 0
    %3778 = vmatprep.subr.bf16.mxu0 0
    %3779 = vmatpush2.bf16.msra.mxu0 0
    %3780 = vmatprep.subr.bf16.mxu0 0
    %3781 = vmatpush2.bf16.msra.mxu0 0
    %3782 = vmatprep.subr.bf16.mxu0 0
    %3783 = vmatpush2.bf16.msra.mxu0 0
    %3784 = vmatprep.subr.bf16.mxu0 0
    %3785 = vmatpush2.bf16.msra.mxu0 0
    %3786 = vmatprep.subr.bf16.mxu0 0
    %3787 = vmatpush2.bf16.msra.mxu0 0
    %3788 = vmatprep.subr.bf16.mxu0 0
    %3789 = vmatpush2.bf16.msra.mxu0 0
    %3790 = vmatprep.mubr.bf16.mxu0 0
    %3791 = vmatmul.mubr.bf16.gmra.mxu0 %v3487
    %v3792 = vpop.f32.mrf.mxu0
    %v3793 = vadd.f32 %v3728, %v3792
    %v3794 = vpop.f32.mrf.mxu0
    %v3795 = vpop.f32.mrf.mxu0
    %v3796 = vadd.f32 %v3731, %v3795
    %v3797 = vpop.f32.mrf.mxu0
    %3798 = vmatprep.mubr.bf16.mxu0 0
    %3799 = vmatmul.mubr.bf16.gmra.mxu0 %v3489
    %v3800 = vpop.f32.mrf.mxu0
    %v3801 = vadd.f32 %v3736, %v3800
    %v3802 = vpop.f32.mrf.mxu0
    %v3803 = vpop.f32.mrf.mxu0
    %v3804 = vadd.f32 %v3739, %v3803
    %v3805 = vpop.f32.mrf.mxu0
    %3806 = vmatprep.mubr.bf16.mxu0 0
    %3807 = vmatmul.mubr.bf16.gmra.mxu0 %v3491
    %v3808 = vpop.f32.mrf.mxu0
    %v3809 = vadd.f32 %v3744, %v3808
    %v3810 = vpop.f32.mrf.mxu0
    %v3811 = vpop.f32.mrf.mxu0
    %v3812 = vadd.f32 %v3747, %v3811
    %v3813 = vpop.f32.mrf.mxu0
    %3814 = vmatprep.mubr.bf16.mxu0 0
    %3815 = vmatmul.mubr.bf16.gmra.mxu0 %v3493
    %v3816 = vpop.f32.mrf.mxu0
    %v3817 = vadd.f32 %v3752, %v3816
    %v3818 = vpop.f32.mrf.mxu0
    %v3819 = vpop.f32.mrf.mxu0
    %v3820 = vadd.f32 %v3755, %v3819
    %v3821 = vpop.f32.mrf.mxu0
    %3822 = vdwg.mxu0
    %v3823 = vmul.f32 %v3793, %v679
    %v3824 = vmul.f32 %v3796, %v684
    %v3825 = vmul.f32 %v3801, %v689
    %v3826 = vmul.f32 %v3804, %v694
    %v3827 = vmul.f32 %v3809, %v699
    %v3828 = vmul.f32 %v3812, %v704
    %v3829 = vmul.f32 %v3817, %v709
    %v3830 = vmul.f32 %v3820, %v714
    %v3831 = vadd.f32 %v3823, %v3824
    %v3832 = vadd.f32 %v3831, %v3825
    %v3833 = vadd.f32 %v3832, %v3826
    %v3834 = vadd.f32 %v3833, %v3827
    %v3835 = vadd.f32 %v3834, %v3828
    %v3836 = vadd.f32 %v3835, %v3829
    %v3837 = vadd.f32 %v3836, %v3830
    %v3838 = vrot.slane %v3837, 4
    %v3839 = vadd.f32 %v3837, %v3838
    %v3840 = vrot.slane %v3839, 2
    %v3841 = vadd.f32 %v3839, %v3840
    %v3842 = vrot.slane %v3841, 1
    %v3843 = vadd.f32 %v3841, %v3842
    %v3844 = vmul.f32 %v3823, %v3793
    %v3845 = vmul.f32 %v3824, %v3796
    %v3846 = vmul.f32 %v3825, %v3801
    %v3847 = vmul.f32 %v3826, %v3804
    %v3848 = vmul.f32 %v3827, %v3809
    %v3849 = vmul.f32 %v3828, %v3812
    %v3850 = vmul.f32 %v3829, %v3817
    %v3851 = vmul.f32 %v3830, %v3820
    %v3852 = vadd.f32 %v3844, %v3845
    %v3853 = vadd.f32 %v3852, %v3846
    %v3854 = vadd.f32 %v3853, %v3847
    %v3855 = vadd.f32 %v3854, %v3848
    %v3856 = vadd.f32 %v3855, %v3849
    %v3857 = vadd.f32 %v3856, %v3850
    %v3858 = vadd.f32 %v3857, %v3851
    %v3859 = vrot.slane %v3858, 4
    %v3860 = vadd.f32 %v3858, %v3859
    %v3861 = vrot.slane %v3860, 2
    %v3862 = vadd.f32 %v3860, %v3861
    %v3863 = vrot.slane %v3862, 1
    %v3864 = vadd.f32 %v3862, %v3863
    %v3865 = vmul.f32 %v3843, 0.0625
    %v3866 = vmul.f32 %v3864, 0.0625
    %v3867 = vmul.f32 %v3865, %v3865
    %v3868 = vsub.f32 %v3866, %v3867
    %v3869 = vmax.f32 %v3868, 0.0
    %v3870 = vsub.f32 %v3793, %v3865
    %v3871 = vsub.f32 %v3796, %v3865
    %v3872 = vsub.f32 %v3801, %v3865
    %v3873 = vsub.f32 %v3804, %v3865
    %v3874 = vsub.f32 %v3809, %v3865
    %v3875 = vsub.f32 %v3812, %v3865
    %v3876 = vsub.f32 %v3817, %v3865
    %v3877 = vsub.f32 %v3820, %v3865
    %v3878 = vadd.f32 %v3869, 1e-05
    %v3879 = vrsqrt.pop %v3878
    %v3880 = vmul.f32 %v3870, %v3879
    %v3881 = vmul.f32 %v3871, %v3879
    %v3882 = vmul.f32 %v3872, %v3879
    %v3883 = vmul.f32 %v3873, %v3879
    %v3884 = vmul.f32 %v3874, %v3879
    %v3885 = vmul.f32 %v3875, %v3879
    %v3886 = vmul.f32 %v3876, %v3879
    %v3887 = vmul.f32 %v3877, %v3879
    %v3888 = vld [vmem:[%s22] sm:$0x1]
    %v3890 = vlaneseq
    %v3891 = vshrl.u32 %v3890, 7
    %v3892 = vsub.s32 0, %v3891
    %v3893 = vrot.slane %v3888, %v3892
    %v3895 = vmul.f32 %v3880, %v3893
    %v3896 = vmul.f32 %v3881, %v3893
    %v3897 = vmul.f32 %v3882, %v3893
    %v3898 = vmul.f32 %v3883, %v3893
    %v3899 = vmul.f32 %v3884, %v3893
    %v3900 = vmul.f32 %v3885, %v3893
    %v3901 = vmul.f32 %v3886, %v3893
    %v3902 = vmul.f32 %v3887, %v3893
    %v3903 = vld [vmem:[%s23] sm:$0x1]
    %v3905 = vlaneseq
    %v3906 = vshrl.u32 %v3905, 7
    %v3907 = vsub.s32 0, %v3906
    %v3908 = vrot.slane %v3903, %v3907
    %v3910 = vadd.f32 %v3895, %v3908
    %v3911 = vadd.f32 %v3896, %v3908
    %v3912 = vadd.f32 %v3897, %v3908
    %v3913 = vadd.f32 %v3898, %v3908
    %v3914 = vadd.f32 %v3899, %v3908
    %v3915 = vadd.f32 %v3900, %v3908
    %v3916 = vadd.f32 %v3901, %v3908
    %v3917 = vadd.f32 %v3902, %v3908
    %v3918 = vmax.f32 %v3910, 0.0
    %v3919 = vmax.f32 %v3911, 0.0
    %v3920 = vmax.f32 %v3912, 0.0
    %v3921 = vmax.f32 %v3913, 0.0
    %v3922 = vmax.f32 %v3914, 0.0
    %v3923 = vmax.f32 %v3915, 0.0
    %v3924 = vmax.f32 %v3916, 0.0
    %v3925 = vmax.f32 %v3917, 0.0
    %v3926 = vpack.c.bf16 %v3919, %v3918
    %v3927 = vpack.c.bf16 %v3921, %v3920
    %v3928 = vpack.c.bf16 %v3923, %v3922
    %v3929 = vpack.c.bf16 %v3925, %v3924
    %v3930 = vld [vmem:[%s24] sm:$0xf]
    %v3931 = vld [vmem:[%s24 + $0x4] sm:$0xf]
    %v3932 = vld [vmem:[%s24 + $0x8] sm:$0xf]
    %v3933 = vld [vmem:[%s24 + $0xc] sm:$0xf]
    %v3934 = vld [vmem:[%s24 + $0x10] sm:$0xf]
    %v3935 = vld [vmem:[%s24 + $0x14] sm:$0xf]
    %v3936 = vld [vmem:[%s24 + $0x18] sm:$0xf]
    %v3937 = vld [vmem:[%s24 + $0x1c] sm:$0xf]
    %v3938 = vld [vmem:[%s24 + $0x20] sm:$0xf]
    %v3939 = vld [vmem:[%s24 + $0x24] sm:$0xf]
    %v3940 = vld [vmem:[%s24 + $0x28] sm:$0xf]
    %v3941 = vld [vmem:[%s24 + $0x2c] sm:$0xf]
    %v3942 = vld [vmem:[%s24 + $0x30] sm:$0xf]
    %v3943 = vld [vmem:[%s24 + $0x34] sm:$0xf]
    %v3944 = vld [vmem:[%s24 + $0x38] sm:$0xf]
    %v3945 = vld [vmem:[%s24 + $0x3c] sm:$0xf]
    %v3946 = vld [vmem:[%s25] sm:$0x1]
    %v3948 = vlaneseq
    %v3949 = vshrl.u32 %v3948, 7
    %v3950 = vsub.s32 0, %v3949
    %v3951 = vrot.slane %v3946, %v3950
    %v3969 = vunpack.c.l.b16 %v3930
    %v3970 = vunpack.c.l.b16 %v3931
    %v3971 = vunpack.c.l.b16 %v3932
    %v3972 = vunpack.c.l.b16 %v3933
    %v3973 = vunpack.c.l.b16 %v3934
    %v3974 = vunpack.c.l.b16 %v3935
    %v3975 = vunpack.c.l.b16 %v3936
    %v3976 = vunpack.c.l.b16 %v3937
    %v3977 = vunpack.c.l.b16 %v3938
    %v3978 = vunpack.c.l.b16 %v3939
    %v3979 = vunpack.c.l.b16 %v3940
    %v3980 = vunpack.c.l.b16 %v3941
    %v3981 = vunpack.c.l.b16 %v3942
    %v3982 = vunpack.c.l.b16 %v3943
    %v3983 = vunpack.c.l.b16 %v3944
    %v3984 = vunpack.c.l.b16 %v3945
    %v3985 = vpack.c.b16 %v3970, %v3969
    %v3986 = vpack.c.b16 %v3972, %v3971
    %v3987 = vpack.c.b16 %v3974, %v3973
    %v3988 = vpack.c.b16 %v3976, %v3975
    %v3989 = vpack.c.b16 %v3978, %v3977
    %v3990 = vpack.c.b16 %v3980, %v3979
    %v3991 = vpack.c.b16 %v3982, %v3981
    %v3992 = vpack.c.b16 %v3984, %v3983
    %4001 = vmatprep.subr.bf16.mxu0 0
    %4002 = vmatpush1.bf16.msra.mxu0 %v3992
    %4003 = vmatprep.subr.bf16.mxu0 0
    %4004 = vmatpush1.bf16.msra.mxu0 %v3991
    %4005 = vmatprep.subr.bf16.mxu0 0
    %4006 = vmatpush1.bf16.msra.mxu0 %v3990
    %4007 = vmatprep.subr.bf16.mxu0 0
    %4008 = vmatpush1.bf16.msra.mxu0 %v3989
    %4009 = vmatprep.subr.bf16.mxu0 0
    %4010 = vmatpush1.bf16.msra.mxu0 %v3988
    %4011 = vmatprep.subr.bf16.mxu0 0
    %4012 = vmatpush1.bf16.msra.mxu0 %v3987
    %4013 = vmatprep.subr.bf16.mxu0 0
    %4014 = vmatpush1.bf16.msra.mxu0 %v3986
    %4015 = vmatprep.subr.bf16.mxu0 0
    %4016 = vmatpush1.bf16.msra.mxu0 %v3985
    %4017 = vmatprep.subr.bf16.mxu0 0
    %4018 = vmatpush2.bf16.msra.mxu0 0
    %4019 = vmatprep.subr.bf16.mxu0 0
    %4020 = vmatpush2.bf16.msra.mxu0 0
    %4021 = vmatprep.subr.bf16.mxu0 0
    %4022 = vmatpush2.bf16.msra.mxu0 0
    %4023 = vmatprep.subr.bf16.mxu0 0
    %4024 = vmatpush2.bf16.msra.mxu0 0
    %4025 = vmatprep.subr.bf16.mxu0 0
    %4026 = vmatpush2.bf16.msra.mxu0 0
    %4027 = vmatprep.subr.bf16.mxu0 0
    %4028 = vmatpush2.bf16.msra.mxu0 0
    %4029 = vmatprep.subr.bf16.mxu0 0
    %4030 = vmatpush2.bf16.msra.mxu0 0
    %4031 = vmatprep.subr.bf16.mxu0 0
    %4032 = vmatpush2.bf16.msra.mxu0 0
    %4033 = vmatprep.mubr.bf16.mxu0 0
    %4034 = vmatmul.mubr.bf16.gmra.mxu0 %v3926
    %v4035 = vpop.f32.mrf.mxu0
    %v4036 = vadd.f32 %v3951, %v4035
    %v4037 = vpop.f32.mrf.mxu0
    %v4038 = vpop.f32.mrf.mxu0
    %v4039 = vadd.f32 %v3951, %v4038
    %v4040 = vpop.f32.mrf.mxu0
    %4041 = vmatprep.mubr.bf16.mxu0 0
    %4042 = vmatmul.mubr.bf16.gmra.mxu0 %v3927
    %v4043 = vpop.f32.mrf.mxu0
    %v4044 = vadd.f32 %v3951, %v4043
    %v4045 = vpop.f32.mrf.mxu0
    %v4046 = vpop.f32.mrf.mxu0
    %v4047 = vadd.f32 %v3951, %v4046
    %v4048 = vpop.f32.mrf.mxu0
    %4049 = vmatprep.mubr.bf16.mxu0 0
    %4050 = vmatmul.mubr.bf16.gmra.mxu0 %v3928
    %v4051 = vpop.f32.mrf.mxu0
    %v4052 = vadd.f32 %v3951, %v4051
    %v4053 = vpop.f32.mrf.mxu0
    %v4054 = vpop.f32.mrf.mxu0
    %v4055 = vadd.f32 %v3951, %v4054
    %v4056 = vpop.f32.mrf.mxu0
    %4057 = vmatprep.mubr.bf16.mxu0 0
    %4058 = vmatmul.mubr.bf16.gmra.mxu0 %v3929
    %v4059 = vpop.f32.mrf.mxu0
    %v4060 = vadd.f32 %v3951, %v4059
    %v4061 = vpop.f32.mrf.mxu0
    %v4062 = vpop.f32.mrf.mxu0
    %v4063 = vadd.f32 %v3951, %v4062
    %v4064 = vpop.f32.mrf.mxu0
    %4065 = vdwg.mxu0
    %4066 = vst [vmem:[#allocation11] sm:$0xff] %v4036
    %4067 = vst [vmem:[#allocation11 + $0x8] sm:$0xff] %v4039
    %4068 = vst [vmem:[#allocation11 + $0x10] sm:$0xff] %v4044
    %4069 = vst [vmem:[#allocation11 + $0x18] sm:$0xff] %v4047
    %4070 = vst [vmem:[#allocation11 + $0x20] sm:$0xff] %v4052
    %4071 = vst [vmem:[#allocation11 + $0x28] sm:$0xff] %v4055
    %4072 = vst [vmem:[#allocation11 + $0x30] sm:$0xff] %v4060
    %4073 = vst [vmem:[#allocation11 + $0x38] sm:$0xff] %v4063
    // Predicated region
    $region126: #{tpu_custom_call.1} parent=1 // pred_check
      _
    $region127: #{tpu_custom_call.1} parent=1 // pred_check_branch
      %4075 = sbr.rel (0) target = $region129
    $region128: #{tpu_custom_call.1} parent=1 // pred_region
      %s4077 = ssub.s32 1024, 1024
      %4078 = vsyncadd [#allocation4], %s4077
      %s4079 = sshll.u32 [#allocation11], 4
      %s4080 = int_to_ptr.vmem [resolvable:$true] %s4079
      %4085 = dma.vmem_to_hbm [thread:$0]  %s4080, 1024, %s26, [#allocation4], 128, 128, 8
    $region129: #{tpu_custom_call.1} parent=1 // pred_fallthru
      _
    // Predicated region
    $region130: #{tpu_custom_call.1} parent=1 // pred_check
      _
    $region131: #{tpu_custom_call.1} parent=1 // pred_check_branch
      %4087 = sbr.rel (0) target = $region133
    $region132: #{tpu_custom_call.1} parent=1 // pred_region
      %s4089 = ssub.s32 1024, 1024
      %4090 = vsyncadd [#allocation13], %s4089
      %s4091 = sshll.u32 [#allocation12], 4
      %s4092 = int_to_ptr.vmem [resolvable:$true] %s4091
      %4097 = dma.vmem_to_hbm [thread:$0]  %s4092, 1024, %s27, [#allocation13], 128, 128, 8
    $region133: #{tpu_custom_call.1} parent=1 // pred_fallthru
      _
    // Predicated region
    $region134: #{tpu_custom_call.1} parent=1 // pred_check
      _
    $region135: #{tpu_custom_call.1} parent=1 // pred_check_branch
      %4099 = sbr.rel (0) target = $region137
    $region136: #{tpu_custom_call.1} parent=1 // pred_region
      %s4101 = ssub.s32 128, 128
      %4102 = vsyncadd [#allocation13], %s4101
      %s4104 = sshll.u32 [#allocation14], 4
      %s4105 = int_to_ptr.vmem [resolvable:$true] %s4104
      %4107 = dma.vmem_to_hbm [thread:$0]  %s4105, 128, %s28, [#allocation13]
    $region137: #{tpu_custom_call.1} parent=1 // pred_fallthru
      _
    // Predicated region
    $region138: #{tpu_custom_call.1} parent=1 // pred_check
      _
    $region139: #{tpu_custom_call.1} parent=1 // pred_check_branch
      %4109 = sbr.rel (0) target = $region141
    $region140: #{tpu_custom_call.1} parent=1 // pred_region
      %4110 = dma.done [#allocation4], 1024
    $region141: #{tpu_custom_call.1} parent=1 // pred_fallthru
      _
    // Predicated region
    $region142: #{tpu_custom_call.1} parent=1 // pred_check
      _
    $region143: #{tpu_custom_call.1} parent=1 // pred_check_branch
      %4112 = sbr.rel (0) target = $region145
    $region144: #{tpu_custom_call.1} parent=1 // pred_region
      %4113 = dma.done [#allocation13], 1024
    $region145: #{tpu_custom_call.1} parent=1 // pred_fallthru
      _
    // Predicated region
    $region146: #{tpu_custom_call.1} parent=1 // pred_check
      _
    $region147: #{tpu_custom_call.1} parent=1 // pred_check_branch
      %4115 = sbr.rel (0) target = $region149
    $region148: #{tpu_custom_call.1} parent=1 // pred_region
      %4116 = dma.done [#allocation13], 128
    $region149: #{tpu_custom_call.1} parent=1 // pred_fallthru
      _
    %4117 = vsyncpa [#allocation3], 1
    %4118 = vsyncpa [#allocation6], 1
    %4119 = vsyncpa [#allocation9], 1
    %4120 = vsyncpa [#allocation4], 1
    %4121 = vsyncpa [#allocation13], 1

</llo_original>
